<compile_context>
chip_gen: v5e
topology: v5e:2x2
jax: 0.10.0
libtpu: 0.0.40
codegen_flags: <defaults>
</compile_context>

<pallas_src>
import jax
import jax.numpy as jnp
from jax import lax
from jax.experimental import pallas as pl
from jax.experimental.pallas import tpu as pltpu


def _round_up(x, m):
    return ((x + m - 1) // m) * m


def _fit(dim, want, quantum):
    """Largest multiple of `quantum` that divides `dim` and is <= want, else `dim`."""
    t = (min(want, dim) // quantum) * quantum
    while t >= quantum:
        if dim % t == 0:
            return t
        t -= quantum
    return dim


def _split_chunks(n_steps, want_chunks):
    if want_chunks > 1 and n_steps >= want_chunks and n_steps % want_chunks == 0:
        return want_chunks, n_steps // want_chunks
    return 1, n_steps


# -----------------------------------------------------------------------------
# Kernel 1: tiled MXU matmul (propagation + fc).  Accumulates directly into the
# resident f32 output block; optional fused bias add in the last-k epilogue.
# Mixed dtypes allowed (bf16 adjacency x f32 features) -> cast up in-kernel.
# -----------------------------------------------------------------------------
def _matmul_kernel(a_ref, b_ref, o_ref):
    @pl.when(pl.program_id(2) == 0)
    def _():
        o_ref[...] = jnp.zeros_like(o_ref)
    a = a_ref[...].astype(jnp.float32)
    b = b_ref[...].astype(jnp.float32)
    o_ref[...] += jnp.dot(a, b, preferred_element_type=jnp.float32)


def _matmul_bias_kernel(a_ref, b_ref, bias_ref, o_ref):
    @pl.when(pl.program_id(2) == 0)
    def _():
        o_ref[...] = jnp.zeros_like(o_ref)
    a = a_ref[...].astype(jnp.float32)
    b = b_ref[...].astype(jnp.float32)
    o_ref[...] += jnp.dot(a, b, preferred_element_type=jnp.float32)

    @pl.when(pl.program_id(2) == pl.num_programs(2) - 1)
    def _():
        o_ref[...] += bias_ref[...]


def matmul(a, b, bias=None, *, tm=512, tn=256, tk=1024):
    M, K = a.shape
    K2, Nc = b.shape
    assert K == K2
    tm = _fit(M, tm, 8)        # sublane dim of a / out
    tn = _fit(Nc, tn, 128)     # lane dim of b / out
    tk = _fit(K, tk, 128)      # lane dim of a, sublane dim of b
    grid = (M // tm, Nc // tn, K // tk)

    in_specs = [pl.BlockSpec((tm, tk), lambda i, j, k: (i, k)),
                pl.BlockSpec((tk, tn), lambda i, j, k: (k, j))]
    args = [a, b]
    if bias is not None:
        in_specs.append(pl.BlockSpec((1, tn), lambda i, j, k: (0, j)))
        args.append(jnp.asarray(bias, jnp.float32).reshape(1, Nc))
        kernel = _matmul_bias_kernel
    else:
        kernel = _matmul_kernel

    return pl.pallas_call(
        kernel,
        out_shape=jax.ShapeDtypeStruct((M, Nc), jnp.float32),
        grid_spec=pltpu.PrefetchScalarGridSpec(
            num_scalar_prefetch=0,
            grid=grid,
            in_specs=in_specs,
            out_specs=pl.BlockSpec((tm, tn), lambda i, j, k: (i, j))),
        compiler_params=pltpu.CompilerParams(
            dimension_semantics=("parallel", "parallel", "arbitrary")),
    )(*args)


# -----------------------------------------------------------------------------
# Kernel 2: fused group statistics.
#   One accumulator of shape (GP, D + 128) per chunk:
#     cols [0, D)   per-group feature sums
#     col  D        per-group counts
#     col  D + 1    per-group sum of ||x_row||^2
#   The one-hot mask is built in-kernel from the int32 group id and everything
#   falls out of one oh^T @ [x | ones | rowsq | 0...] MXU matmul per tile, so the
#   accumulator store is fully lane-dense.
# -----------------------------------------------------------------------------
def _group_stats_kernel(x_ref, g_ref, sums_ref):
    tile, D = x_ref.shape
    GP = sums_ref.shape[0]

    @pl.when(pl.program_id(1) == 0)
    def _():
        sums_ref[...] = jnp.zeros_like(sums_ref)

    x = x_ref[...]
    gid = lax.broadcasted_iota(jnp.int32, (tile, GP), 1)
    oh = (g_ref[...] == gid).astype(jnp.float32)                 # (tile, GP)
    rowsq = jnp.sum(x * x, axis=1, keepdims=True)                # (tile, 1)
    col = lax.broadcasted_iota(jnp.int32, (tile, 128), 1)
    extra = jnp.where(col == 0, 1.0, jnp.where(col == 1, rowsq, 0.0))
    x_aug = jnp.concatenate([x, extra], axis=1)                  # (tile, D+128)
    sums_ref[...] += lax.dot_general(oh, x_aug, (((0,), (0,)), ((), ())),
                                     preferred_element_type=jnp.float32)


def group_stats(x, g_eff, num_groups_padded, *, tile=512, chunks=2):
    N, D = x.shape
    tile = _fit(N, tile, 8)
    C, steps = _split_chunks(N // tile, chunks)
    GP = num_groups_padded
    out = pl.pallas_call(
        _group_stats_kernel,
        out_shape=jax.ShapeDtypeStruct((C, GP, D + 128), jnp.float32),
        grid=(C, steps),
        in_specs=[pl.BlockSpec((tile, D), lambda c, i: (c * steps + i, 0)),
                  pl.BlockSpec((tile, 1), lambda c, i: (c * steps + i, 0))],
        out_specs=pl.BlockSpec((None, GP, D + 128), lambda c, i: (c, 0, 0)),
        compiler_params=pltpu.CompilerParams(
            dimension_semantics=("parallel", "arbitrary")),
    )(x, g_eff)
    return out.sum(axis=0)                                       # (GP, D+128)


# -----------------------------------------------------------------------------
# Kernel 3: JJ_Norm per-node blend, fused with normalize()'s column stats.
#   clone_x[u] = a[u]*x[u] + (1-a[u]) * train_mean[g[u]]   (a=1 for test nodes)
#   stats accumulates [column sums ; column squared sums] of clone_x per chunk.
#   a and gid travel in one (N, 2) side input; the per-node mean is gathered
#   in-kernel via onehot @ mean_table (MXU).
# -----------------------------------------------------------------------------
def _jj_transform_kernel(x_ref, ag_ref, mean_ref, o_ref, stats_ref):
    tile, D = x_ref.shape
    GP = mean_ref.shape[0]

    @pl.when(pl.program_id(1) == 0)
    def _():
        stats_ref[...] = jnp.zeros_like(stats_ref)

    ag = ag_ref[...]                                             # (tile, 2)
    a = ag[:, 0:1]
    g = ag[:, 1:2].astype(jnp.int32)
    gid = lax.broadcasted_iota(jnp.int32, (tile, GP), 1)
    oh = (g == gid).astype(jnp.float32)                          # (tile, GP)
    mu = jnp.dot(oh, mean_ref[...], preferred_element_type=jnp.float32)
    y = a * x_ref[...] + (1.0 - a) * mu
    o_ref[...] = y
    s = jnp.sum(y, axis=0, keepdims=True)
    q = jnp.sum(y * y, axis=0, keepdims=True)
    stats_ref[...] += jnp.concatenate([s, q], axis=0)            # (2, D)


def jj_transform(x, ag, mean_flat, *, tile=512, chunks=2):
    N, D = x.shape
    GP = mean_flat.shape[0]
    tile = _fit(N, tile, 8)
    C, steps = _split_chunks(N // tile, chunks)
    clone, stats = pl.pallas_call(
        _jj_transform_kernel,
        out_shape=(jax.ShapeDtypeStruct((N, D), jnp.float32),
                   jax.ShapeDtypeStruct((C, 2, D), jnp.float32)),
        grid=(C, steps),
        in_specs=[pl.BlockSpec((tile, D), lambda c, i: (c * steps + i, 0)),
                  pl.BlockSpec((tile, 2), lambda c, i: (c * steps + i, 0)),
                  pl.BlockSpec((GP, D), lambda c, i: (0, 0))],
        out_specs=(pl.BlockSpec((tile, D), lambda c, i: (c * steps + i, 0)),
                   pl.BlockSpec((None, 2, D), lambda c, i: (c, 0, 0))),
        compiler_params=pltpu.CompilerParams(
            dimension_semantics=("parallel", "arbitrary")),
    )(x, ag, mean_flat)
    return clone, stats.sum(axis=0)                              # (N,D), (2,D)


# -----------------------------------------------------------------------------
# Full forward (tiny scalar glue in plain JAX; heavy passes in Pallas)
# -----------------------------------------------------------------------------
def sgconv_jj_forward(adj, feat, labels, times, weight, bias, *,
                      num_time, num_label, split, k=1):
    N, D = feat.shape
    T, L = num_time, num_label
    labels = labels.astype(jnp.int32)
    times = times.astype(jnp.int32)

    # --- SGC propagation: feat <- D^-1/2 A D^-1/2 feat, k times ----------------
    # a_hat is never materialized: fold the degree scaling into the features
    # (removes an N^2 f32 HBM temp); adjacency goes through the MXU as bf16
    # (0/1 entries exact) with f32 accumulation.
    deg = jnp.maximum(jnp.sum(adj, axis=1), 1.0)                  # in-degrees, clamp 1
    nrm = (deg ** -0.5)[:, None].astype(jnp.float32)              # (N, 1)
    adj_lp = adj.astype(jnp.bfloat16)
    x = feat.astype(jnp.float32)
    for _ in range(k):
        x = nrm * matmul(adj_lp, nrm * x)

    # --- JJ_Norm statistics (single fused Pallas pass) -------------------------
    G = T * L
    GP = _round_up(G + 1, 8)                                      # lane/sublane-friendly pad
    g_all = times * L + labels                                    # (N,)
    train = times < split
    g_eff = jnp.where(train, g_all, G).astype(jnp.int32)[:, None]  # test nodes -> group G
    sums_all = group_stats(x, g_eff, GP)                          # (GP, D+128)
    feat_sums = sums_all[:, :D]
    counts = sums_all[:, D]
    sqsums = sums_all[:, D + 1]

    S_tl = feat_sums[:G].reshape(T, L, D)
    c_tl = counts[:G].reshape(T, L)
    q_tl = sqsums[:G].reshape(T, L)
    S_test, c_test, q_test = feat_sums[G], counts[G], sqsums[G]

    train_mean = S_tl / jnp.maximum(1.0, c_tl)[..., None]         # (T, L, D)
    tt_cnt = jnp.sum(c_tl, axis=1)                                # (T,)
    tt_mean = jnp.sum(S_tl, axis=1) / jnp.maximum(1.0, tt_cnt)[:, None]

    test_mean = S_test / jnp.maximum(1.0, c_test)
    test_var = ((q_test - 2.0 * jnp.dot(test_mean, S_test)
                 + c_test * jnp.dot(test_mean, test_mean))
                / jnp.maximum(1.0, c_test - 1.0))

    diff = train_mean - tt_mean[:, None, :]
    msq_num = jnp.sum(c_tl * jnp.sum(diff * diff, axis=-1), axis=1)
    rsq_num = jnp.sum(q_tl - 2.0 * jnp.sum(train_mean * S_tl, axis=-1)
                      + c_tl * jnp.sum(train_mean * train_mean, axis=-1), axis=1)
    denom = jnp.maximum(1.0, tt_cnt - 1.0)
    msq = msq_num / denom
    rsq = rsq_num / denom
    alpha_sq = (test_var - msq) / jnp.maximum(1e-6, rsq)
    alpha = jnp.where(alpha_sq > 0.0, jnp.sqrt(jnp.maximum(alpha_sq, 0.0)), 0.0)

    # per-node blend coefficient; test nodes get a=1 -> exact pass-through.
    a_node = jnp.where(train, alpha[times], 1.0).astype(jnp.float32)
    ag = jnp.stack([a_node, g_all.astype(jnp.float32)], axis=1)   # (N, 2)
    mean_flat = jnp.zeros((GP, D), jnp.float32).at[:G].set(train_mean.reshape(G, D))

    clone, col_stats = jj_transform(x, ag, mean_flat)             # fused column stats

    # --- normalize() folded into the linear layer -------------------------------
    col_mean = col_stats[0] / N
    col_var = (col_stats[1] - N * col_mean * col_mean) / (N - 1.0)  # unbiased (torch.std)
    col_std = jnp.sqrt(col_var)
    col_std = jnp.where(col_std > 0.0, col_std, 1.0)              # guard degenerate constant columns
    w_eff = weight.T / col_std[:, None]                           # (D, F)
    b_eff = bias - jnp.dot(col_mean / col_std, weight.T)          # (F,)
    out = matmul(clone, w_eff, bias=b_eff)                        # bias fused in epilogue
    return out


# -----------------------------------------------------------------------------
# Pure-JAX reference (follows the PyTorch loops literally, vectorized)
# -----------------------------------------------------------------------------
def _ref_forward(adj, feat, labels, times, weight, bias, *,
                 num_time, num_label, split, k=1):
    hp = lax.Precision.HIGHEST
    T, L = num_time, num_label
    deg = jnp.maximum(jnp.sum(adj, axis=1), 1.0)
    nrm = deg ** -0.5
    a_hat = nrm[:, None] * adj * nrm[None, :]
    x = feat
    for _ in range(k):
        x = jnp.dot(a_hat, x, precision=hp)
    N, D = x.shape
    train = times < split
    trf = train.astype(jnp.float32)
    oh = ((times[:, None] * L + labels[:, None]) ==
          jnp.arange(T * L)[None, :]).astype(jnp.float32) * trf[:, None]
    S = jnp.dot(oh.T, x, precision=hp).reshape(T, L, D)
    c = jnp.sum(oh, axis=0).reshape(T, L)
    train_mean = S / jnp.maximum(1.0, c)[..., None]
    tt_cnt = c.sum(1)
    tt_mean = S.sum(1) / jnp.maximum(1.0, tt_cnt)[:, None]
    test = ~train
    c_test = jnp.sum(test.astype(jnp.float32))
    test_mean = jnp.sum(jnp.where(test[:, None], x, 0.0), 0) / jnp.maximum(1.0, c_test)
    test_var = (jnp.sum(jnp.where(test, jnp.sum((x - test_mean) ** 2, 1), 0.0))
                / jnp.maximum(1.0, c_test - 1.0))
    mean_u = train_mean.reshape(T * L, D)[times * L + labels]
    msq_u = jnp.sum((mean_u - tt_mean[times]) ** 2, axis=1)
    rsq_u = jnp.sum((x - mean_u) ** 2, axis=1)
    dd = jnp.maximum(1.0, tt_cnt - 1.0)
    msq = jnp.zeros(T).at[times].add(trf * msq_u) / dd
    rsq = jnp.zeros(T).at[times].add(trf * rsq_u) / dd
    alpha_sq = (test_var - msq) / jnp.maximum(1e-6, rsq)
    alpha = jnp.where(alpha_sq > 0.0, jnp.sqrt(jnp.maximum(alpha_sq, 0.0)), 0.0)
    a_u = jnp.where(train, alpha[times], 1.0)[:, None]
    clone = a_u * x + (1.0 - a_u) * mean_u
    h = (clone - clone.mean(0)) / jnp.std(clone, axis=0, ddof=1)
    return jnp.dot(h, weight.T, precision=hp) + bias


if __name__ == "__main__":
    key = jax.random.PRNGKey(0)
    N, D_in, D_out = 256, 128, 128
    num_label, num_time, split, k = 3, 4, 2, 1

    k1, k2 = jax.random.split(key, 2)
    labels = jnp.arange(N, dtype=jnp.int32) % num_label
    times = (jnp.arange(N, dtype=jnp.int32) // num_label) % num_time

    # small ring graph with self-loops (dense adjacency; adj[v, u]=1 iff edge u->v)
    adj = (jnp.eye(N, dtype=jnp.float32)
           + jnp.eye(N, k=1, dtype=jnp.float32)
           + jnp.eye(N, k=-1, dtype=jnp.float32))
    adj = adj.at[0, N - 1].set(1.0).at[N - 1, 0].set(1.0)

    feat = jax.random.normal(k1, (N, D_in), dtype=jnp.float32)
    bound = (6.0 / (D_in + D_out)) ** 0.5                         # xavier_uniform
    weight = jax.random.uniform(k2, (D_out, D_in), dtype=jnp.float32,
                                minval=-bound, maxval=bound)
    bias = jnp.zeros((D_out,), dtype=jnp.float32)

    fwd = jax.jit(sgconv_jj_forward,
                  static_argnames=("num_time", "num_label", "split", "k"))
    out = fwd(adj, feat, labels, times, weight, bias,
              num_time=num_time, num_label=num_label, split=split, k=k)
    out = jax.block_until_ready(out)

    ref = _ref_forward(adj, feat, labels, times, weight, bias,
                       num_time=num_time, num_label=num_label, split=split, k=k)

    assert out.shape == (N, D_out), out.shape
    assert bool(jnp.all(jnp.isfinite(out)))
    assert bool(jnp.allclose(out, ref, atol=2e-2, rtol=2e-2))
    print("KERNEL_OK")
</pallas_src>

<mosaic_0001>
module attributes {stable_mosaic.version = 11 : i64} {
  func.func @_matmul_kernel(%arg0: i32, %arg1: i32, %arg2: i32, %arg3: memref<256x256xbf16, #tpu.memory_space<vmem>>, %arg4: memref<256x128xf32, #tpu.memory_space<vmem>>, %arg5: memref<256x128xf32, #tpu.memory_space<vmem>>) attributes {dimension_semantics = [#tpu.dimension_semantics<parallel>, #tpu.dimension_semantics<parallel>, #tpu.dimension_semantics<arbitrary>], iteration_bounds = array<i64: 1, 1, 1>, scalar_prefetch = 0 : i64, scratch_operands = 0 : i64, tpu.core_type = #tpu.core_type<tc>, window_params = [{transform_indices = @transform_0, window_bounds = array<i64: 256, 256>}, {transform_indices = @transform_1, window_bounds = array<i64: 256, 128>}, {transform_indices = @transform_2, window_bounds = array<i64: 256, 128>}]} {
    %c0_i32 = arith.constant 0 : i32
    %0 = arith.cmpi eq, %arg2, %c0_i32 : i32
    %1 = arith.extui %0 : i1 to i32
    %c0_i32_0 = arith.constant 0 : i32
    %2 = arith.cmpi ne, %1, %c0_i32_0 : i32
    scf.if %2 {
      %cst_8 = arith.constant 0.000000e+00 : f32
      %10 = vector.broadcast %cst_8 : f32 to vector<256x128xf32>
      %c0_9 = arith.constant 0 : index
      %c0_10 = arith.constant 0 : index
      %11 = vector.load %arg5[%c0_9, %c0_10] : memref<256x128xf32, #tpu.memory_space<vmem>>, vector<256x128xf32>
      tpu.vector_store %arg5[%c0_9, %c0_10], %10 {strides = array<i32>} : memref<256x128xf32, #tpu.memory_space<vmem>>, vector<256x128xf32>,
    } else {
    }
    %c0 = arith.constant 0 : index
    %c0_1 = arith.constant 0 : index
    %3 = vector.load %arg3[%c0, %c0_1] : memref<256x256xbf16, #tpu.memory_space<vmem>>, vector<256x256xbf16>
    %4 = arith.extf %3 : vector<256x256xbf16> to vector<256x256xf32>
    %c0_2 = arith.constant 0 : index
    %c0_3 = arith.constant 0 : index
    %5 = vector.load %arg4[%c0_2, %c0_3] : memref<256x128xf32, #tpu.memory_space<vmem>>, vector<256x128xf32>
    %c0_4 = arith.constant 0 : index
    %c0_5 = arith.constant 0 : index
    %6 = vector.load %arg5[%c0_4, %c0_5] : memref<256x128xf32, #tpu.memory_space<vmem>>, vector<256x128xf32>
    %cst = arith.constant dense<0.000000e+00> : vector<256x128xf32>
    %7 = tpu.matmul %4, %5, %cst {dimension_numbers = #tpu.dot_dimension_numbers<[1], [0], [0], [1], [0, 0, 1, 1], [], []>} : vector<256x256xf32>, vector<256x128xf32>, vector<256x128xf32> -> vector<256x128xf32>
    %8 = arith.addf %6, %7 : vector<256x128xf32>
    %c0_6 = arith.constant 0 : index
    %c0_7 = arith.constant 0 : index
    %9 = vector.load %arg5[%c0_6, %c0_7] : memref<256x128xf32, #tpu.memory_space<vmem>>, vector<256x128xf32>
    tpu.vector_store %arg5[%c0_6, %c0_7], %8 {strides = array<i32>} : memref<256x128xf32, #tpu.memory_space<vmem>>, vector<256x128xf32>,
    return
  }
  func.func @transform_0(%arg0: i32, %arg1: i32, %arg2: i32) -> (i32, i32) {
    %c0_i32 = arith.constant 0 : i32
    return %arg0, %arg2 : i32, i32
  }
  func.func @transform_1(%arg0: i32, %arg1: i32, %arg2: i32) -> (i32, i32) {
    %c0_i32 = arith.constant 0 : i32
    return %arg2, %arg1 : i32, i32
  }
  func.func @transform_2(%arg0: i32, %arg1: i32, %arg2: i32) -> (i32, i32) {
    %c0_i32 = arith.constant 0 : i32
    return %arg0, %arg1 : i32, i32
  }
}

module attributes {stable_mosaic.version = 11 : i64} {
  func.func @_group_stats_kernel(%arg0: i32, %arg1: i32, %arg2: memref<256x128xf32, #tpu.memory_space<vmem>>, %arg3: memref<256x1xi32, #tpu.memory_space<vmem>>, %arg4: memref<1x16x256xf32, #tpu.memory_space<vmem>>) attributes {dimension_semantics = [#tpu.dimension_semantics<parallel>, #tpu.dimension_semantics<arbitrary>], iteration_bounds = array<i64: 1, 1>, scalar_prefetch = 0 : i64, scratch_operands = 0 : i64, tpu.core_type = #tpu.core_type<tc>, window_params = [{transform_indices = @transform_0, window_bounds = array<i64: 256, 128>}, {transform_indices = @transform_1, window_bounds = array<i64: 256, 1>}, {transform_indices = @transform_2, window_bounds = array<i64: 1, 16, 256>}]} {
    %c0_i32 = arith.constant 0 : i32
    %0 = arith.cmpi eq, %arg1, %c0_i32 : i32
    %1 = arith.extui %0 : i1 to i32
    %c0_i32_0 = arith.constant 0 : i32
    %2 = arith.cmpi ne, %1, %c0_i32_0 : i32
    scf.if %2 {
      %cst_14 = arith.constant 0.000000e+00 : f32
      %32 = vector.broadcast %cst_14 : f32 to vector<16x256xf32>
      %c0_15 = arith.constant 0 : index
      %c0_16 = arith.constant 0 : index
      %c0_17 = arith.constant 0 : index
      %33 = vector.load %arg4[%c0_15, %c0_16, %c0_17] : memref<1x16x256xf32, #tpu.memory_space<vmem>>, vector<1x16x256xf32>
      %34 = vector.shape_cast %33 : vector<1x16x256xf32> to vector<16x256xf32>
      %35 = vector.shape_cast %32 : vector<16x256xf32> to vector<1x16x256xf32>
      tpu.vector_store %arg4[%c0_15, %c0_16, %c0_17], %35 {strides = array<i32>} : memref<1x16x256xf32, #tpu.memory_space<vmem>>, vector<1x16x256xf32>,
    } else {
    }
    %c0 = arith.constant 0 : index
    %c0_1 = arith.constant 0 : index
    %3 = vector.load %arg2[%c0, %c0_1] : memref<256x128xf32, #tpu.memory_space<vmem>>, vector<256x128xf32>
    %4 = tpu.iota {dimensions = array<i32: 1>} : vector<256x16xi32>
    %c0_2 = arith.constant 0 : index
    %c0_3 = arith.constant 0 : index
    %5 = vector.load %arg3[%c0_2, %c0_3] : memref<256x1xi32, #tpu.memory_space<vmem>>, vector<256x1xi32>
    %6 = vector.broadcast %5 : vector<256x1xi32> to vector<256x16xi32>
    %7 = arith.cmpi eq, %6, %4 : vector<256x16xi32>
    %8 = arith.extui %7 : vector<256x16xi1> to vector<256x16xi32>
    %9 = arith.sitofp %8 : vector<256x16xi32> to vector<256x16xf32>
    %10 = arith.mulf %3, %3 : vector<256x128xf32>
    %cst = arith.constant dense<0.000000e+00> : vector<256xf32>
    %11 = vector.multi_reduction <add>, %10, %cst [1] : vector<256x128xf32> to vector<256xf32>
    %12 = vector.shape_cast %11 : vector<256xf32> to vector<256x1xf32>
    %13 = tpu.iota {dimensions = array<i32: 1>} : vector<256x128xi32>
    %c0_i32_4 = arith.constant 0 : i32
    %14 = vector.broadcast %c0_i32_4 : i32 to vector<256x128xi32>
    %15 = arith.cmpi eq, %13, %14 : vector<256x128xi32>
    %c1_i32 = arith.constant 1 : i32
    %16 = vector.broadcast %c1_i32 : i32 to vector<256x128xi32>
    %17 = arith.cmpi eq, %13, %16 : vector<256x128xi32>
    %cst_5 = arith.constant 0.000000e+00 : f32
    %18 = vector.shape_cast %12 : vector<256x1xf32> to vector<256x1xf32>
    %19 = vector.broadcast %18 : vector<256x1xf32> to vector<256x128xf32>
    %20 = vector.broadcast %cst_5 : f32 to vector<256x128xf32>
    %21 = arith.select %17, %19, %20 : vector<256x128xi1>, vector<256x128xf32>
    %cst_6 = arith.constant 1.000000e+00 : f32
    %22 = vector.broadcast %cst_6 : f32 to vector<256x128xf32>
    %23 = arith.select %15, %22, %21 : vector<256x128xi1>, vector<256x128xf32>
    %24 = tpu.concatenate %3, %23 in 1 : vector<256x128xf32>, vector<256x128xf32> -> vector<256x256xf32>
    %c0_7 = arith.constant 0 : index
    %c0_8 = arith.constant 0 : index
    %c0_9 = arith.constant 0 : index
    %25 = vector.load %arg4[%c0_7, %c0_8, %c0_9] : memref<1x16x256xf32, #tpu.memory_space<vmem>>, vector<1x16x256xf32>
    %26 = vector.shape_cast %25 : vector<1x16x256xf32> to vector<16x256xf32>
    %cst_10 = arith.constant dense<0.000000e+00> : vector<16x256xf32>
    %27 = tpu.matmul %9, %24, %cst_10 {dimension_numbers = #tpu.dot_dimension_numbers<[0], [0], [1], [1], [0, 1, 1, 1], [], []>} : vector<256x16xf32>, vector<256x256xf32>, vector<16x256xf32> -> vector<16x256xf32>
    %28 = arith.addf %26, %27 : vector<16x256xf32>
    %c0_11 = arith.constant 0 : index
    %c0_12 = arith.constant 0 : index
    %c0_13 = arith.constant 0 : index
    %29 = vector.load %arg4[%c0_11, %c0_12, %c0_13] : memref<1x16x256xf32, #tpu.memory_space<vmem>>, vector<1x16x256xf32>
    %30 = vector.shape_cast %29 : vector<1x16x256xf32> to vector<16x256xf32>
    %31 = vector.shape_cast %28 : vector<16x256xf32> to vector<1x16x256xf32>
    tpu.vector_store %arg4[%c0_11, %c0_12, %c0_13], %31 {strides = array<i32>} : memref<1x16x256xf32, #tpu.memory_space<vmem>>, vector<1x16x256xf32>,
    return
  }
  func.func @transform_0(%arg0: i32, %arg1: i32) -> (i32, i32) {
    %c1_i32 = arith.constant 1 : i32
    %0 = arith.muli %arg0, %c1_i32 : i32
    %1 = arith.addi %0, %arg1 : i32
    %c0_i32 = arith.constant 0 : i32
    %c0_i32_0 = arith.constant 0 : i32
    return %1, %c0_i32 : i32, i32
  }
  func.func @transform_1(%arg0: i32, %arg1: i32) -> (i32, i32) {
    %c1_i32 = arith.constant 1 : i32
    %0 = arith.muli %arg0, %c1_i32 : i32
    %1 = arith.addi %0, %arg1 : i32
    %c0_i32 = arith.constant 0 : i32
    %c0_i32_0 = arith.constant 0 : i32
    return %1, %c0_i32 : i32, i32
  }
  func.func @transform_2(%arg0: i32, %arg1: i32) -> (i32, i32, i32) {
    %c0_i32 = arith.constant 0 : i32
    %c0_i32_0 = arith.constant 0 : i32
    %c0_i32_1 = arith.constant 0 : i32
    return %arg0, %c0_i32, %c0_i32_0 : i32, i32, i32
  }
}

module attributes {stable_mosaic.version = 11 : i64} {
  func.func @_jj_transform_kernel(%arg0: i32, %arg1: i32, %arg2: memref<256x128xf32, #tpu.memory_space<vmem>>, %arg3: memref<256x2xf32, #tpu.memory_space<vmem>>, %arg4: memref<16x128xf32, #tpu.memory_space<vmem>>, %arg5: memref<256x128xf32, #tpu.memory_space<vmem>>, %arg6: memref<1x2x128xf32, #tpu.memory_space<vmem>>) attributes {dimension_semantics = [#tpu.dimension_semantics<parallel>, #tpu.dimension_semantics<arbitrary>], iteration_bounds = array<i64: 1, 1>, scalar_prefetch = 0 : i64, scratch_operands = 0 : i64, tpu.core_type = #tpu.core_type<tc>, window_params = [{transform_indices = @transform_0, window_bounds = array<i64: 256, 128>}, {transform_indices = @transform_1, window_bounds = array<i64: 256, 2>}, {pipeline_mode = #tpu.pipeline_mode<synchronous>, transform_indices = @transform_2, window_bounds = array<i64: 16, 128>}, {transform_indices = @transform_3, window_bounds = array<i64: 256, 128>}, {transform_indices = @transform_4, window_bounds = array<i64: 1, 2, 128>}]} {
    %c0_i32 = arith.constant 0 : i32
    %0 = arith.cmpi eq, %arg1, %c0_i32 : i32
    %1 = arith.extui %0 : i1 to i32
    %c0_i32_0 = arith.constant 0 : i32
    %2 = arith.cmpi ne, %1, %c0_i32_0 : i32
    scf.if %2 {
      %cst_17 = arith.constant 0.000000e+00 : f32
      %35 = vector.broadcast %cst_17 : f32 to vector<2x128xf32>
      %c0_18 = arith.constant 0 : index
      %c0_19 = arith.constant 0 : index
      %c0_20 = arith.constant 0 : index
      %36 = vector.load %arg6[%c0_18, %c0_19, %c0_20] : memref<1x2x128xf32, #tpu.memory_space<vmem>>, vector<1x2x128xf32>
      %37 = vector.shape_cast %36 : vector<1x2x128xf32> to vector<2x128xf32>
      %38 = vector.shape_cast %35 : vector<2x128xf32> to vector<1x2x128xf32>
      tpu.vector_store %arg6[%c0_18, %c0_19, %c0_20], %38 {strides = array<i32>} : memref<1x2x128xf32, #tpu.memory_space<vmem>>, vector<1x2x128xf32>,
    } else {
    }
    %c0 = arith.constant 0 : index
    %c0_1 = arith.constant 0 : index
    %3 = vector.load %arg3[%c0, %c0_1] : memref<256x2xf32, #tpu.memory_space<vmem>>, vector<256x2xf32>
    %4 = vector.extract_strided_slice %3 {offsets = [0, 0], sizes = [256, 1], strides = [1, 1]} : vector<256x2xf32> to vector<256x1xf32>
    %5 = vector.extract_strided_slice %3 {offsets = [0, 1], sizes = [256, 1], strides = [1, 1]} : vector<256x2xf32> to vector<256x1xf32>
    %6 = arith.fptosi %5 : vector<256x1xf32> to vector<256x1xi32>
    %7 = tpu.iota {dimensions = array<i32: 1>} : vector<256x16xi32>
    %8 = vector.broadcast %6 : vector<256x1xi32> to vector<256x16xi32>
    %9 = arith.cmpi eq, %8, %7 : vector<256x16xi32>
    %10 = arith.extui %9 : vector<256x16xi1> to vector<256x16xi32>
    %11 = arith.sitofp %10 : vector<256x16xi32> to vector<256x16xf32>
    %c0_2 = arith.constant 0 : index
    %c0_3 = arith.constant 0 : index
    %12 = vector.load %arg4[%c0_2, %c0_3] : memref<16x128xf32, #tpu.memory_space<vmem>>, vector<16x128xf32>
    %cst = arith.constant dense<0.000000e+00> : vector<256x128xf32>
    %13 = tpu.matmul %11, %12, %cst {dimension_numbers = #tpu.dot_dimension_numbers<[1], [0], [0], [1], [0, 0, 1, 1], [], []>} : vector<256x16xf32>, vector<16x128xf32>, vector<256x128xf32> -> vector<256x128xf32>
    %c0_4 = arith.constant 0 : index
    %c0_5 = arith.constant 0 : index
    %14 = vector.load %arg2[%c0_4, %c0_5] : memref<256x128xf32, #tpu.memory_space<vmem>>, vector<256x128xf32>
    %15 = vector.broadcast %4 : vector<256x1xf32> to vector<256x128xf32>
    %16 = arith.mulf %15, %14 : vector<256x128xf32>
    %cst_6 = arith.constant 1.000000e+00 : f32
    %17 = vector.broadcast %cst_6 : f32 to vector<256x1xf32>
    %18 = arith.subf %17, %4 : vector<256x1xf32>
    %19 = vector.broadcast %18 : vector<256x1xf32> to vector<256x128xf32>
    %20 = arith.mulf %19, %13 : vector<256x128xf32>
    %21 = arith.addf %16, %20 : vector<256x128xf32>
    %c0_7 = arith.constant 0 : index
    %c0_8 = arith.constant 0 : index
    %22 = vector.load %arg5[%c0_7, %c0_8] : memref<256x128xf32, #tpu.memory_space<vmem>>, vector<256x128xf32>
    tpu.vector_store %arg5[%c0_7, %c0_8], %21 {strides = array<i32>} : memref<256x128xf32, #tpu.memory_space<vmem>>, vector<256x128xf32>,
    %cst_9 = arith.constant dense<0.000000e+00> : vector<128xf32>
    %23 = vector.multi_reduction <add>, %21, %cst_9 [0] : vector<256x128xf32> to vector<128xf32>
    %24 = vector.shape_cast %23 : vector<128xf32> to vector<1x128xf32>
    %25 = arith.mulf %21, %21 : vector<256x128xf32>
    %cst_10 = arith.constant dense<0.000000e+00> : vector<128xf32>
    %26 = vector.multi_reduction <add>, %25, %cst_10 [0] : vector<256x128xf32> to vector<128xf32>
    %27 = vector.shape_cast %26 : vector<128xf32> to vector<1x128xf32>
    %c0_11 = arith.constant 0 : index
    %c0_12 = arith.constant 0 : index
    %c0_13 = arith.constant 0 : index
    %28 = vector.load %arg6[%c0_11, %c0_12, %c0_13] : memref<1x2x128xf32, #tpu.memory_space<vmem>>, vector<1x2x128xf32>
    %29 = vector.shape_cast %28 : vector<1x2x128xf32> to vector<2x128xf32>
    %30 = tpu.concatenate %24, %27 in 0 : vector<1x128xf32>, vector<1x128xf32> -> vector<2x128xf32>
    %31 = arith.addf %29, %30 : vector<2x128xf32>
    %c0_14 = arith.constant 0 : index
    %c0_15 = arith.constant 0 : index
    %c0_16 = arith.constant 0 : index
    %32 = vector.load %arg6[%c0_14, %c0_15, %c0_16] : memref<1x2x128xf32, #tpu.memory_space<vmem>>, vector<1x2x128xf32>
    %33 = vector.shape_cast %32 : vector<1x2x128xf32> to vector<2x128xf32>
    %34 = vector.shape_cast %31 : vector<2x128xf32> to vector<1x2x128xf32>
    tpu.vector_store %arg6[%c0_14, %c0_15, %c0_16], %34 {strides = array<i32>} : memref<1x2x128xf32, #tpu.memory_space<vmem>>, vector<1x2x128xf32>,
    return
  }
  func.func @transform_0(%arg0: i32, %arg1: i32) -> (i32, i32) {
    %c1_i32 = arith.constant 1 : i32
    %0 = arith.muli %arg0, %c1_i32 : i32
    %1 = arith.addi %0, %arg1 : i32
    %c0_i32 = arith.constant 0 : i32
    %c0_i32_0 = arith.constant 0 : i32
    return %1, %c0_i32 : i32, i32
  }
  func.func @transform_1(%arg0: i32, %arg1: i32) -> (i32, i32) {
    %c1_i32 = arith.constant 1 : i32
    %0 = arith.muli %arg0, %c1_i32 : i32
    %1 = arith.addi %0, %arg1 : i32
    %c0_i32 = arith.constant 0 : i32
    %c0_i32_0 = arith.constant 0 : i32
    return %1, %c0_i32 : i32, i32
  }
  func.func @transform_2(%arg0: i32, %arg1: i32) -> (i32, i32) {
    %c0_i32 = arith.constant 0 : i32
    %c0_i32_0 = arith.constant 0 : i32
    %c0_i32_1 = arith.constant 0 : i32
    return %c0_i32, %c0_i32_0 : i32, i32
  }
  func.func @transform_3(%arg0: i32, %arg1: i32) -> (i32, i32) {
    %c1_i32 = arith.constant 1 : i32
    %0 = arith.muli %arg0, %c1_i32 : i32
    %1 = arith.addi %0, %arg1 : i32
    %c0_i32 = arith.constant 0 : i32
    %c0_i32_0 = arith.constant 0 : i32
    return %1, %c0_i32 : i32, i32
  }
  func.func @transform_4(%arg0: i32, %arg1: i32) -> (i32, i32, i32) {
    %c0_i32 = arith.constant 0 : i32
    %c0_i32_0 = arith.constant 0 : i32
    %c0_i32_1 = arith.constant 0 : i32
    return %arg0, %c0_i32, %c0_i32_0 : i32, i32, i32
  }
}

module attributes {stable_mosaic.version = 11 : i64} {
  func.func @_matmul_bias_kernel(%arg0: i32, %arg1: i32, %arg2: i32, %arg3: memref<256x128xf32, #tpu.memory_space<vmem>>, %arg4: memref<128x128xf32, #tpu.memory_space<vmem>>, %arg5: memref<1x128xf32, #tpu.memory_space<vmem>>, %arg6: memref<256x128xf32, #tpu.memory_space<vmem>>) attributes {dimension_semantics = [#tpu.dimension_semantics<parallel>, #tpu.dimension_semantics<parallel>, #tpu.dimension_semantics<arbitrary>], iteration_bounds = array<i64: 1, 1, 1>, scalar_prefetch = 0 : i64, scratch_operands = 0 : i64, tpu.core_type = #tpu.core_type<tc>, window_params = [{transform_indices = @transform_0, window_bounds = array<i64: 256, 128>}, {transform_indices = @transform_1, window_bounds = array<i64: 128, 128>}, {transform_indices = @transform_2, window_bounds = array<i64: 1, 128>}, {transform_indices = @transform_3, window_bounds = array<i64: 256, 128>}]} {
    %c0_i32 = arith.constant 0 : i32
    %0 = arith.cmpi eq, %arg2, %c0_i32 : i32
    %1 = arith.extui %0 : i1 to i32
    %c0_i32_0 = arith.constant 0 : i32
    %2 = arith.cmpi ne, %1, %c0_i32_0 : i32
    scf.if %2 {
      %cst_10 = arith.constant 0.000000e+00 : f32
      %12 = vector.broadcast %cst_10 : f32 to vector<256x128xf32>
      %c0_11 = arith.constant 0 : index
      %c0_12 = arith.constant 0 : index
      %13 = vector.load %arg6[%c0_11, %c0_12] : memref<256x128xf32, #tpu.memory_space<vmem>>, vector<256x128xf32>
      tpu.vector_store %arg6[%c0_11, %c0_12], %12 {strides = array<i32>} : memref<256x128xf32, #tpu.memory_space<vmem>>, vector<256x128xf32>,
    } else {
    }
    %c0 = arith.constant 0 : index
    %c0_1 = arith.constant 0 : index
    %3 = vector.load %arg3[%c0, %c0_1] : memref<256x128xf32, #tpu.memory_space<vmem>>, vector<256x128xf32>
    %c0_2 = arith.constant 0 : index
    %c0_3 = arith.constant 0 : index
    %4 = vector.load %arg4[%c0_2, %c0_3] : memref<128x128xf32, #tpu.memory_space<vmem>>, vector<128x128xf32>
    %c0_4 = arith.constant 0 : index
    %c0_5 = arith.constant 0 : index
    %5 = vector.load %arg6[%c0_4, %c0_5] : memref<256x128xf32, #tpu.memory_space<vmem>>, vector<256x128xf32>
    %cst = arith.constant dense<0.000000e+00> : vector<256x128xf32>
    %6 = tpu.matmul %3, %4, %cst {dimension_numbers = #tpu.dot_dimension_numbers<[1], [0], [0], [1], [0, 0, 1, 1], [], []>} : vector<256x128xf32>, vector<128x128xf32>, vector<256x128xf32> -> vector<256x128xf32>
    %7 = arith.addf %5, %6 : vector<256x128xf32>
    %c0_6 = arith.constant 0 : index
    %c0_7 = arith.constant 0 : index
    %8 = vector.load %arg6[%c0_6, %c0_7] : memref<256x128xf32, #tpu.memory_space<vmem>>, vector<256x128xf32>
    tpu.vector_store %arg6[%c0_6, %c0_7], %7 {strides = array<i32>} : memref<256x128xf32, #tpu.memory_space<vmem>>, vector<256x128xf32>,
    %c0_i32_8 = arith.constant 0 : i32
    %9 = arith.cmpi eq, %arg2, %c0_i32_8 : i32
    %10 = arith.extui %9 : i1 to i32
    %c0_i32_9 = arith.constant 0 : i32
    %11 = arith.cmpi ne, %10, %c0_i32_9 : i32
    scf.if %11 {
      %c0_10 = arith.constant 0 : index
      %c0_11 = arith.constant 0 : index
      %12 = vector.load %arg6[%c0_10, %c0_11] : memref<256x128xf32, #tpu.memory_space<vmem>>, vector<256x128xf32>
      %c0_12 = arith.constant 0 : index
      %c0_13 = arith.constant 0 : index
      %13 = vector.load %arg5[%c0_12, %c0_13] : memref<1x128xf32, #tpu.memory_space<vmem>>, vector<1x128xf32>
      %14 = vector.broadcast %13 : vector<1x128xf32> to vector<256x128xf32>
      %15 = arith.addf %12, %14 : vector<256x128xf32>
      %c0_14 = arith.constant 0 : index
      %c0_15 = arith.constant 0 : index
      %16 = vector.load %arg6[%c0_14, %c0_15] : memref<256x128xf32, #tpu.memory_space<vmem>>, vector<256x128xf32>
      tpu.vector_store %arg6[%c0_14, %c0_15], %15 {strides = array<i32>} : memref<256x128xf32, #tpu.memory_space<vmem>>, vector<256x128xf32>,
    } else {
    }
    return
  }
  func.func @transform_0(%arg0: i32, %arg1: i32, %arg2: i32) -> (i32, i32) {
    %c0_i32 = arith.constant 0 : i32
    return %arg0, %arg2 : i32, i32
  }
  func.func @transform_1(%arg0: i32, %arg1: i32, %arg2: i32) -> (i32, i32) {
    %c0_i32 = arith.constant 0 : i32
    return %arg2, %arg1 : i32, i32
  }
  func.func @transform_2(%arg0: i32, %arg1: i32, %arg2: i32) -> (i32, i32) {
    %c0_i32 = arith.constant 0 : i32
    %c0_i32_0 = arith.constant 0 : i32
    return %c0_i32, %arg1 : i32, i32
  }
  func.func @transform_3(%arg0: i32, %arg1: i32, %arg2: i32) -> (i32, i32) {
    %c0_i32 = arith.constant 0 : i32
    return %arg0, %arg1 : i32, i32
  }
}

</mosaic_0001>

<llo_original>
// kernel: sgconv_jj_forward.4
$region0: #{sgconv_jj_forward.4}
  #allocation0 [shape = 'u32[]', space=smem, size = 0x4, offset = 0x4, fixed_abs, tag = 'smem constant byte address 0x4 - core index']
  #allocation1 [shape = 'u32[72,128]{1,0:T(1,128)}', space=vmem, size = 0x9000, scoped, tag = 'internal scratch']
  %s0 = inlined_call_operand.vmem [shape: bf16[256,256], index: 0, kind: input, shape index: {}]
  %s1 = inlined_call_operand.vmem [shape: f32[256,128], index: 1, kind: input, shape index: {}]
  %s2 = inlined_call_operand.vmem [shape: f32[256,128], index: 2, kind: output, shape index: {}]
  %s3 = sld [smem:[#allocation0]]
  $region22: #{sgconv_jj_forward.4} parent=0
    _
  %s5 = ssub.s32 1, %s3
  %s6 = scalar_select 0, %s5, %s3
  // Predicated region
  $region2: #{sgconv_jj_forward.4} parent=0 // pred_check
    _
  $region3: #{sgconv_jj_forward.4} parent=0 // pred_check_branch
    %8 = sbr.rel (0) target = $region5
  $region4: #{sgconv_jj_forward.4} parent=0 // pred_region
    _
  $region5: #{sgconv_jj_forward.4} parent=0 // pred_fallthru
    _
  // Predicated region
  $region6: #{sgconv_jj_forward.4} parent=0 // pred_check
    _
  $region7: #{sgconv_jj_forward.4} parent=0 // pred_check_branch
    %10 = sbr.rel (0) target = $region9
  $region8: #{sgconv_jj_forward.4} parent=0 // pred_region
    _
  $region9: #{sgconv_jj_forward.4} parent=0 // pred_fallthru
    _
  %p11 = scmp.eq.s32.totalorder 0, 0
  // Predicated region
  $region10: #{sgconv_jj_forward.4} parent=0 // pred_check
    %p12 = pneg %p11
  $region11: #{sgconv_jj_forward.4} parent=0 // pred_check_branch
    %14 = sbr.rel (%p12) target = $region13
  $region12: #{sgconv_jj_forward.4} parent=0 // pred_region
    %15 = vst [vmem:[%s2] sm:$0xff] 0.0
    %16 = vst [vmem:[%s2 + $0x8] sm:$0xff] 0.0
    %17 = vst [vmem:[%s2 + $0x10] sm:$0xff] 0.0
    %18 = vst [vmem:[%s2 + $0x18] sm:$0xff] 0.0
    %19 = vst [vmem:[%s2 + $0x20] sm:$0xff] 0.0
    %20 = vst [vmem:[%s2 + $0x28] sm:$0xff] 0.0
    %21 = vst [vmem:[%s2 + $0x30] sm:$0xff] 0.0
    %22 = vst [vmem:[%s2 + $0x38] sm:$0xff] 0.0
    %23 = vst [vmem:[%s2 + $0x40] sm:$0xff] 0.0
    %24 = vst [vmem:[%s2 + $0x48] sm:$0xff] 0.0
    %25 = vst [vmem:[%s2 + $0x50] sm:$0xff] 0.0
    %26 = vst [vmem:[%s2 + $0x58] sm:$0xff] 0.0
    %27 = vst [vmem:[%s2 + $0x60] sm:$0xff] 0.0
    %28 = vst [vmem:[%s2 + $0x68] sm:$0xff] 0.0
    %29 = vst [vmem:[%s2 + $0x70] sm:$0xff] 0.0
    %30 = vst [vmem:[%s2 + $0x78] sm:$0xff] 0.0
    %31 = vst [vmem:[%s2 + $0x80] sm:$0xff] 0.0
    %32 = vst [vmem:[%s2 + $0x88] sm:$0xff] 0.0
    %33 = vst [vmem:[%s2 + $0x90] sm:$0xff] 0.0
    %34 = vst [vmem:[%s2 + $0x98] sm:$0xff] 0.0
    %35 = vst [vmem:[%s2 + $0xa0] sm:$0xff] 0.0
    %36 = vst [vmem:[%s2 + $0xa8] sm:$0xff] 0.0
    %37 = vst [vmem:[%s2 + $0xb0] sm:$0xff] 0.0
    %38 = vst [vmem:[%s2 + $0xb8] sm:$0xff] 0.0
    %39 = vst [vmem:[%s2 + $0xc0] sm:$0xff] 0.0
    %40 = vst [vmem:[%s2 + $0xc8] sm:$0xff] 0.0
    %41 = vst [vmem:[%s2 + $0xd0] sm:$0xff] 0.0
    %42 = vst [vmem:[%s2 + $0xd8] sm:$0xff] 0.0
    %43 = vst [vmem:[%s2 + $0xe0] sm:$0xff] 0.0
    %44 = vst [vmem:[%s2 + $0xe8] sm:$0xff] 0.0
    %45 = vst [vmem:[%s2 + $0xf0] sm:$0xff] 0.0
    %46 = vst [vmem:[%s2 + $0xf8] sm:$0xff] 0.0
  $region13: #{sgconv_jj_forward.4} parent=0 // pred_fallthru
    _
  %v47 = vld [vmem:[%s0] sm:$0xff]
  %v48 = vld [vmem:[%s0 + $0x8] sm:$0xff]
  %v49 = vld [vmem:[%s0 + $0x10] sm:$0xff]
  %v50 = vld [vmem:[%s0 + $0x18] sm:$0xff]
  %v51 = vld [vmem:[%s0 + $0x20] sm:$0xff]
  %v52 = vld [vmem:[%s0 + $0x28] sm:$0xff]
  %v53 = vld [vmem:[%s0 + $0x30] sm:$0xff]
  %v54 = vld [vmem:[%s0 + $0x38] sm:$0xff]
  %v55 = vld [vmem:[%s0 + $0x40] sm:$0xff]
  %v56 = vld [vmem:[%s0 + $0x48] sm:$0xff]
  %v57 = vld [vmem:[%s0 + $0x50] sm:$0xff]
  %v58 = vld [vmem:[%s0 + $0x58] sm:$0xff]
  %v59 = vld [vmem:[%s0 + $0x60] sm:$0xff]
  %v60 = vld [vmem:[%s0 + $0x68] sm:$0xff]
  %v61 = vld [vmem:[%s0 + $0x70] sm:$0xff]
  %v62 = vld [vmem:[%s0 + $0x78] sm:$0xff]
  %v63 = vld [vmem:[%s0 + $0x80] sm:$0xff]
  %v64 = vld [vmem:[%s0 + $0x88] sm:$0xff]
  %v65 = vld [vmem:[%s0 + $0x90] sm:$0xff]
  %v66 = vld [vmem:[%s0 + $0x98] sm:$0xff]
  %v67 = vld [vmem:[%s0 + $0xa0] sm:$0xff]
  %v68 = vld [vmem:[%s0 + $0xa8] sm:$0xff]
  %v69 = vld [vmem:[%s0 + $0xb0] sm:$0xff]
  %v70 = vld [vmem:[%s0 + $0xb8] sm:$0xff]
  %v71 = vld [vmem:[%s0 + $0xc0] sm:$0xff]
  %v72 = vld [vmem:[%s0 + $0xc8] sm:$0xff]
  %v73 = vld [vmem:[%s0 + $0xd0] sm:$0xff]
  %v74 = vld [vmem:[%s0 + $0xd8] sm:$0xff]
  %v75 = vld [vmem:[%s0 + $0xe0] sm:$0xff]
  %v76 = vld [vmem:[%s0 + $0xe8] sm:$0xff]
  %v77 = vld [vmem:[%s0 + $0xf0] sm:$0xff]
  %v78 = vld [vmem:[%s0 + $0xf8] sm:$0xff]
  %v79 = vunpack.c.l.bf16 %v47
  %v80 = vunpack.c.h.bf16 %v47
  %v81 = vunpack.c.l.bf16 %v48
  %v82 = vunpack.c.h.bf16 %v48
  %v83 = vunpack.c.l.bf16 %v49
  %v84 = vunpack.c.h.bf16 %v49
  %v85 = vunpack.c.l.bf16 %v50
  %v86 = vunpack.c.h.bf16 %v50
  %v87 = vunpack.c.l.bf16 %v51
  %v88 = vunpack.c.h.bf16 %v51
  %v89 = vunpack.c.l.bf16 %v52
  %v90 = vunpack.c.h.bf16 %v52
  %v91 = vunpack.c.l.bf16 %v53
  %v92 = vunpack.c.h.bf16 %v53
  %v93 = vunpack.c.l.bf16 %v54
  %v94 = vunpack.c.h.bf16 %v54
  %v95 = vunpack.c.l.bf16 %v55
  %v96 = vunpack.c.h.bf16 %v55
  %v97 = vunpack.c.l.bf16 %v56
  %v98 = vunpack.c.h.bf16 %v56
  %v99 = vunpack.c.l.bf16 %v57
  %v100 = vunpack.c.h.bf16 %v57
  %v101 = vunpack.c.l.bf16 %v58
  %v102 = vunpack.c.h.bf16 %v58
  %v103 = vunpack.c.l.bf16 %v59
  %v104 = vunpack.c.h.bf16 %v59
  %v105 = vunpack.c.l.bf16 %v60
  %v106 = vunpack.c.h.bf16 %v60
  %v107 = vunpack.c.l.bf16 %v61
  %v108 = vunpack.c.h.bf16 %v61
  %v109 = vunpack.c.l.bf16 %v62
  %v110 = vunpack.c.h.bf16 %v62
  %v111 = vunpack.c.l.bf16 %v63
  %v112 = vunpack.c.h.bf16 %v63
  %v113 = vunpack.c.l.bf16 %v64
  %v114 = vunpack.c.h.bf16 %v64
  %v115 = vunpack.c.l.bf16 %v65
  %v116 = vunpack.c.h.bf16 %v65
  %v117 = vunpack.c.l.bf16 %v66
  %v118 = vunpack.c.h.bf16 %v66
  %v119 = vunpack.c.l.bf16 %v67
  %v120 = vunpack.c.h.bf16 %v67
  %v121 = vunpack.c.l.bf16 %v68
  %v122 = vunpack.c.h.bf16 %v68
  %v123 = vunpack.c.l.bf16 %v69
  %v124 = vunpack.c.h.bf16 %v69
  %v125 = vunpack.c.l.bf16 %v70
  %v126 = vunpack.c.h.bf16 %v70
  %v127 = vunpack.c.l.bf16 %v71
  %v128 = vunpack.c.h.bf16 %v71
  %v129 = vunpack.c.l.bf16 %v72
  %v130 = vunpack.c.h.bf16 %v72
  %v131 = vunpack.c.l.bf16 %v73
  %v132 = vunpack.c.h.bf16 %v73
  %v133 = vunpack.c.l.bf16 %v74
  %v134 = vunpack.c.h.bf16 %v74
  %v135 = vunpack.c.l.bf16 %v75
  %v136 = vunpack.c.h.bf16 %v75
  %v137 = vunpack.c.l.bf16 %v76
  %v138 = vunpack.c.h.bf16 %v76
  %v139 = vunpack.c.l.bf16 %v77
  %v140 = vunpack.c.h.bf16 %v77
  %v141 = vunpack.c.l.bf16 %v78
  %v142 = vunpack.c.h.bf16 %v78
  %v143 = vld [vmem:[%s1] sm:$0xff]
  %v144 = vld [vmem:[%s1 + $0x8] sm:$0xff]
  %v145 = vld [vmem:[%s1 + $0x10] sm:$0xff]
  %v146 = vld [vmem:[%s1 + $0x18] sm:$0xff]
  %v147 = vld [vmem:[%s1 + $0x20] sm:$0xff]
  %v148 = vld [vmem:[%s1 + $0x28] sm:$0xff]
  %v149 = vld [vmem:[%s1 + $0x30] sm:$0xff]
  %v150 = vld [vmem:[%s1 + $0x38] sm:$0xff]
  %v151 = vld [vmem:[%s1 + $0x40] sm:$0xff]
  %v152 = vld [vmem:[%s1 + $0x48] sm:$0xff]
  %v153 = vld [vmem:[%s1 + $0x50] sm:$0xff]
  %v154 = vld [vmem:[%s1 + $0x58] sm:$0xff]
  %v155 = vld [vmem:[%s1 + $0x60] sm:$0xff]
  %v156 = vld [vmem:[%s1 + $0x68] sm:$0xff]
  %v157 = vld [vmem:[%s1 + $0x70] sm:$0xff]
  %v158 = vld [vmem:[%s1 + $0x78] sm:$0xff]
  %v159 = vld [vmem:[%s1 + $0x80] sm:$0xff]
  %v160 = vld [vmem:[%s1 + $0x88] sm:$0xff]
  %v161 = vld [vmem:[%s1 + $0x90] sm:$0xff]
  %v162 = vld [vmem:[%s1 + $0x98] sm:$0xff]
  %v163 = vld [vmem:[%s1 + $0xa0] sm:$0xff]
  %v164 = vld [vmem:[%s1 + $0xa8] sm:$0xff]
  %v165 = vld [vmem:[%s1 + $0xb0] sm:$0xff]
  %v166 = vld [vmem:[%s1 + $0xb8] sm:$0xff]
  %v167 = vld [vmem:[%s1 + $0xc0] sm:$0xff]
  %v168 = vld [vmem:[%s1 + $0xc8] sm:$0xff]
  %v169 = vld [vmem:[%s1 + $0xd0] sm:$0xff]
  %v170 = vld [vmem:[%s1 + $0xd8] sm:$0xff]
  %v171 = vld [vmem:[%s1 + $0xe0] sm:$0xff]
  %v172 = vld [vmem:[%s1 + $0xe8] sm:$0xff]
  %v173 = vld [vmem:[%s1 + $0xf0] sm:$0xff]
  %v174 = vld [vmem:[%s1 + $0xf8] sm:$0xff]
  %v175 = vld [vmem:[%s2] sm:$0xff]
  %v176 = vld [vmem:[%s2 + $0x8] sm:$0xff]
  %v177 = vld [vmem:[%s2 + $0x10] sm:$0xff]
  %v178 = vld [vmem:[%s2 + $0x18] sm:$0xff]
  %v179 = vld [vmem:[%s2 + $0x20] sm:$0xff]
  %v180 = vld [vmem:[%s2 + $0x28] sm:$0xff]
  %v181 = vld [vmem:[%s2 + $0x30] sm:$0xff]
  %v182 = vld [vmem:[%s2 + $0x38] sm:$0xff]
  %v183 = vld [vmem:[%s2 + $0x40] sm:$0xff]
  %v184 = vld [vmem:[%s2 + $0x48] sm:$0xff]
  %v185 = vld [vmem:[%s2 + $0x50] sm:$0xff]
  %v186 = vld [vmem:[%s2 + $0x58] sm:$0xff]
  %v187 = vld [vmem:[%s2 + $0x60] sm:$0xff]
  %v188 = vld [vmem:[%s2 + $0x68] sm:$0xff]
  %v189 = vld [vmem:[%s2 + $0x70] sm:$0xff]
  %v190 = vld [vmem:[%s2 + $0x78] sm:$0xff]
  %v191 = vld [vmem:[%s2 + $0x80] sm:$0xff]
  %v192 = vld [vmem:[%s2 + $0x88] sm:$0xff]
  %v193 = vld [vmem:[%s2 + $0x90] sm:$0xff]
  %v194 = vld [vmem:[%s2 + $0x98] sm:$0xff]
  %v195 = vld [vmem:[%s2 + $0xa0] sm:$0xff]
  %v196 = vld [vmem:[%s2 + $0xa8] sm:$0xff]
  %v197 = vld [vmem:[%s2 + $0xb0] sm:$0xff]
  %v198 = vld [vmem:[%s2 + $0xb8] sm:$0xff]
  %v199 = vld [vmem:[%s2 + $0xc0] sm:$0xff]
  %v200 = vld [vmem:[%s2 + $0xc8] sm:$0xff]
  %v201 = vld [vmem:[%s2 + $0xd0] sm:$0xff]
  %v202 = vld [vmem:[%s2 + $0xd8] sm:$0xff]
  %v203 = vld [vmem:[%s2 + $0xe0] sm:$0xff]
  %v204 = vld [vmem:[%s2 + $0xe8] sm:$0xff]
  %v205 = vld [vmem:[%s2 + $0xf0] sm:$0xff]
  %v206 = vld [vmem:[%s2 + $0xf8] sm:$0xff]
  %207 = vmatpush.msra.mxu0 %v158
  %208 = vmatpush.msra.mxu0 %v157
  %209 = vmatpush.msra.mxu0 %v156
  %210 = vmatpush.msra.mxu0 %v155
  %211 = vmatpush.msra.mxu0 %v154
  %212 = vmatpush.msra.mxu0 %v153
  %213 = vmatpush.msra.mxu0 %v152
  %214 = vmatpush.msra.mxu0 %v151
  %215 = vmatpush.msra.mxu0 %v150
  %216 = vmatpush.msra.mxu0 %v149
  %217 = vmatpush.msra.mxu0 %v148
  %218 = vmatpush.msra.mxu0 %v147
  %219 = vmatpush.msra.mxu0 %v146
  %220 = vmatpush.msra.mxu0 %v145
  %221 = vmatpush.msra.mxu0 %v144
  %222 = vmatpush.msra.mxu0 %v143
  %223 = vmatmul.f32.gmra.mxu0 %v79
  %v224 = vpop.f32.mrf.mxu0
  %v225 = vadd.f32 0.0, %v224
  %226 = vmatmul.f32.gmra.mxu0 %v81
  %v227 = vpop.f32.mrf.mxu0
  %v228 = vadd.f32 0.0, %v227
  %229 = vmatmul.f32.gmra.mxu0 %v83
  %v230 = vpop.f32.mrf.mxu0
  %v231 = vadd.f32 0.0, %v230
  %232 = vmatmul.f32.gmra.mxu0 %v85
  %v233 = vpop.f32.mrf.mxu0
  %v234 = vadd.f32 0.0, %v233
  %235 = vmatmul.f32.gmra.mxu0 %v87
  %v236 = vpop.f32.mrf.mxu0
  %v237 = vadd.f32 0.0, %v236
  %238 = vmatmul.f32.gmra.mxu0 %v89
  %v239 = vpop.f32.mrf.mxu0
  %v240 = vadd.f32 0.0, %v239
  %241 = vmatmul.f32.gmra.mxu0 %v91
  %v242 = vpop.f32.mrf.mxu0
  %v243 = vadd.f32 0.0, %v242
  %244 = vmatmul.f32.gmra.mxu0 %v93
  %v245 = vpop.f32.mrf.mxu0
  %v246 = vadd.f32 0.0, %v245
  %247 = vmatmul.f32.gmra.mxu0 %v95
  %v248 = vpop.f32.mrf.mxu0
  %v249 = vadd.f32 0.0, %v248
  %250 = vmatmul.f32.gmra.mxu0 %v97
  %v251 = vpop.f32.mrf.mxu0
  %v252 = vadd.f32 0.0, %v251
  %253 = vmatmul.f32.gmra.mxu0 %v99
  %v254 = vpop.f32.mrf.mxu0
  %v255 = vadd.f32 0.0, %v254
  %256 = vmatmul.f32.gmra.mxu0 %v101
  %v257 = vpop.f32.mrf.mxu0
  %v258 = vadd.f32 0.0, %v257
  %259 = vmatmul.f32.gmra.mxu0 %v103
  %v260 = vpop.f32.mrf.mxu0
  %v261 = vadd.f32 0.0, %v260
  %262 = vmatmul.f32.gmra.mxu0 %v105
  %v263 = vpop.f32.mrf.mxu0
  %v264 = vadd.f32 0.0, %v263
  %265 = vmatmul.f32.gmra.mxu0 %v107
  %v266 = vpop.f32.mrf.mxu0
  %v267 = vadd.f32 0.0, %v266
  %268 = vmatmul.f32.gmra.mxu0 %v109
  %v269 = vpop.f32.mrf.mxu0
  %v270 = vadd.f32 0.0, %v269
  %271 = vmatmul.f32.gmra.mxu0 %v111
  %v272 = vpop.f32.mrf.mxu0
  %v273 = vadd.f32 0.0, %v272
  %274 = vmatmul.f32.gmra.mxu0 %v113
  %v275 = vpop.f32.mrf.mxu0
  %v276 = vadd.f32 0.0, %v275
  %277 = vmatmul.f32.gmra.mxu0 %v115
  %v278 = vpop.f32.mrf.mxu0
  %v279 = vadd.f32 0.0, %v278
  %280 = vmatmul.f32.gmra.mxu0 %v117
  %v281 = vpop.f32.mrf.mxu0
  %v282 = vadd.f32 0.0, %v281
  %283 = vmatmul.f32.gmra.mxu0 %v119
  %v284 = vpop.f32.mrf.mxu0
  %v285 = vadd.f32 0.0, %v284
  %286 = vmatmul.f32.gmra.mxu0 %v121
  %v287 = vpop.f32.mrf.mxu0
  %v288 = vadd.f32 0.0, %v287
  %289 = vmatmul.f32.gmra.mxu0 %v123
  %v290 = vpop.f32.mrf.mxu0
  %v291 = vadd.f32 0.0, %v290
  %292 = vmatmul.f32.gmra.mxu0 %v125
  %v293 = vpop.f32.mrf.mxu0
  %v294 = vadd.f32 0.0, %v293
  %295 = vmatmul.f32.gmra.mxu0 %v127
  %v296 = vpop.f32.mrf.mxu0
  %v297 = vadd.f32 0.0, %v296
  %298 = vmatmul.f32.gmra.mxu0 %v129
  %v299 = vpop.f32.mrf.mxu0
  %v300 = vadd.f32 0.0, %v299
  %301 = vmatmul.f32.gmra.mxu0 %v131
  %v302 = vpop.f32.mrf.mxu0
  %v303 = vadd.f32 0.0, %v302
  %304 = vmatmul.f32.gmra.mxu0 %v133
  %v305 = vpop.f32.mrf.mxu0
  %v306 = vadd.f32 0.0, %v305
  %307 = vmatmul.f32.gmra.mxu0 %v135
  %v308 = vpop.f32.mrf.mxu0
  %v309 = vadd.f32 0.0, %v308
  %310 = vmatmul.f32.gmra.mxu0 %v137
  %v311 = vpop.f32.mrf.mxu0
  %v312 = vadd.f32 0.0, %v311
  %313 = vmatmul.f32.gmra.mxu0 %v139
  %v314 = vpop.f32.mrf.mxu0
  %v315 = vadd.f32 0.0, %v314
  %316 = vmatmul.f32.gmra.mxu0 %v141
  %v317 = vpop.f32.mrf.mxu0
  %v318 = vadd.f32 0.0, %v317
  %319 = vdwg.mxu0
  %320 = vmatpush.msra.mxu0 %v174
  %321 = vmatpush.msra.mxu0 %v173
  %322 = vmatpush.msra.mxu0 %v172
  %323 = vmatpush.msra.mxu0 %v171
  %324 = vmatpush.msra.mxu0 %v170
  %325 = vmatpush.msra.mxu0 %v169
  %326 = vmatpush.msra.mxu0 %v168
  %327 = vmatpush.msra.mxu0 %v167
  %328 = vmatpush.msra.mxu0 %v166
  %329 = vmatpush.msra.mxu0 %v165
  %330 = vmatpush.msra.mxu0 %v164
  %331 = vmatpush.msra.mxu0 %v163
  %332 = vmatpush.msra.mxu0 %v162
  %333 = vmatpush.msra.mxu0 %v161
  %334 = vmatpush.msra.mxu0 %v160
  %335 = vmatpush.msra.mxu0 %v159
  %336 = vmatmul.f32.gmra.mxu0 %v80
  %v337 = vpop.f32.mrf.mxu0
  %v338 = vadd.f32 %v225, %v337
  %339 = vmatmul.f32.gmra.mxu0 %v82
  %v340 = vpop.f32.mrf.mxu0
  %v341 = vadd.f32 %v228, %v340
  %342 = vmatmul.f32.gmra.mxu0 %v84
  %v343 = vpop.f32.mrf.mxu0
  %v344 = vadd.f32 %v231, %v343
  %345 = vmatmul.f32.gmra.mxu0 %v86
  %v346 = vpop.f32.mrf.mxu0
  %v347 = vadd.f32 %v234, %v346
  %348 = vmatmul.f32.gmra.mxu0 %v88
  %v349 = vpop.f32.mrf.mxu0
  %v350 = vadd.f32 %v237, %v349
  %351 = vmatmul.f32.gmra.mxu0 %v90
  %v352 = vpop.f32.mrf.mxu0
  %v353 = vadd.f32 %v240, %v352
  %354 = vmatmul.f32.gmra.mxu0 %v92
  %v355 = vpop.f32.mrf.mxu0
  %v356 = vadd.f32 %v243, %v355
  %357 = vmatmul.f32.gmra.mxu0 %v94
  %v358 = vpop.f32.mrf.mxu0
  %v359 = vadd.f32 %v246, %v358
  %360 = vmatmul.f32.gmra.mxu0 %v96
  %v361 = vpop.f32.mrf.mxu0
  %v362 = vadd.f32 %v249, %v361
  %363 = vmatmul.f32.gmra.mxu0 %v98
  %v364 = vpop.f32.mrf.mxu0
  %v365 = vadd.f32 %v252, %v364
  %366 = vmatmul.f32.gmra.mxu0 %v100
  %v367 = vpop.f32.mrf.mxu0
  %v368 = vadd.f32 %v255, %v367
  %369 = vmatmul.f32.gmra.mxu0 %v102
  %v370 = vpop.f32.mrf.mxu0
  %v371 = vadd.f32 %v258, %v370
  %372 = vmatmul.f32.gmra.mxu0 %v104
  %v373 = vpop.f32.mrf.mxu0
  %v374 = vadd.f32 %v261, %v373
  %375 = vmatmul.f32.gmra.mxu0 %v106
  %v376 = vpop.f32.mrf.mxu0
  %v377 = vadd.f32 %v264, %v376
  %378 = vmatmul.f32.gmra.mxu0 %v108
  %v379 = vpop.f32.mrf.mxu0
  %v380 = vadd.f32 %v267, %v379
  %381 = vmatmul.f32.gmra.mxu0 %v110
  %v382 = vpop.f32.mrf.mxu0
  %v383 = vadd.f32 %v270, %v382
  %384 = vmatmul.f32.gmra.mxu0 %v112
  %v385 = vpop.f32.mrf.mxu0
  %v386 = vadd.f32 %v273, %v385
  %387 = vmatmul.f32.gmra.mxu0 %v114
  %v388 = vpop.f32.mrf.mxu0
  %v389 = vadd.f32 %v276, %v388
  %390 = vmatmul.f32.gmra.mxu0 %v116
  %v391 = vpop.f32.mrf.mxu0
  %v392 = vadd.f32 %v279, %v391
  %393 = vmatmul.f32.gmra.mxu0 %v118
  %v394 = vpop.f32.mrf.mxu0
  %v395 = vadd.f32 %v282, %v394
  %396 = vmatmul.f32.gmra.mxu0 %v120
  %v397 = vpop.f32.mrf.mxu0
  %v398 = vadd.f32 %v285, %v397
  %399 = vmatmul.f32.gmra.mxu0 %v122
  %v400 = vpop.f32.mrf.mxu0
  %v401 = vadd.f32 %v288, %v400
  %402 = vmatmul.f32.gmra.mxu0 %v124
  %v403 = vpop.f32.mrf.mxu0
  %v404 = vadd.f32 %v291, %v403
  %405 = vmatmul.f32.gmra.mxu0 %v126
  %v406 = vpop.f32.mrf.mxu0
  %v407 = vadd.f32 %v294, %v406
  %408 = vmatmul.f32.gmra.mxu0 %v128
  %v409 = vpop.f32.mrf.mxu0
  %v410 = vadd.f32 %v297, %v409
  %411 = vmatmul.f32.gmra.mxu0 %v130
  %v412 = vpop.f32.mrf.mxu0
  %v413 = vadd.f32 %v300, %v412
  %414 = vmatmul.f32.gmra.mxu0 %v132
  %v415 = vpop.f32.mrf.mxu0
  %v416 = vadd.f32 %v303, %v415
  %417 = vmatmul.f32.gmra.mxu0 %v134
  %v418 = vpop.f32.mrf.mxu0
  %v419 = vadd.f32 %v306, %v418
  %420 = vmatmul.f32.gmra.mxu0 %v136
  %v421 = vpop.f32.mrf.mxu0
  %v422 = vadd.f32 %v309, %v421
  %423 = vmatmul.f32.gmra.mxu0 %v138
  %v424 = vpop.f32.mrf.mxu0
  %v425 = vadd.f32 %v312, %v424
  %426 = vmatmul.f32.gmra.mxu0 %v140
  %v427 = vpop.f32.mrf.mxu0
  %v428 = vadd.f32 %v315, %v427
  %429 = vmatmul.f32.gmra.mxu0 %v142
  %v430 = vpop.f32.mrf.mxu0
  %v431 = vadd.f32 %v318, %v430
  %432 = vdwg.mxu0
  %v433 = vadd.f32 %v175, %v338
  %v434 = vadd.f32 %v176, %v341
  %v435 = vadd.f32 %v177, %v344
  %v436 = vadd.f32 %v178, %v347
  %v437 = vadd.f32 %v179, %v350
  %v438 = vadd.f32 %v180, %v353
  %v439 = vadd.f32 %v181, %v356
  %v440 = vadd.f32 %v182, %v359
  %v441 = vadd.f32 %v183, %v362
  %v442 = vadd.f32 %v184, %v365
  %v443 = vadd.f32 %v185, %v368
  %v444 = vadd.f32 %v186, %v371
  %v445 = vadd.f32 %v187, %v374
  %v446 = vadd.f32 %v188, %v377
  %v447 = vadd.f32 %v189, %v380
  %v448 = vadd.f32 %v190, %v383
  %v449 = vadd.f32 %v191, %v386
  %v450 = vadd.f32 %v192, %v389
  %v451 = vadd.f32 %v193, %v392
  %v452 = vadd.f32 %v194, %v395
  %v453 = vadd.f32 %v195, %v398
  %v454 = vadd.f32 %v196, %v401
  %v455 = vadd.f32 %v197, %v404
  %v456 = vadd.f32 %v198, %v407
  %v457 = vadd.f32 %v199, %v410
  %v458 = vadd.f32 %v200, %v413
  %v459 = vadd.f32 %v201, %v416
  %v460 = vadd.f32 %v202, %v419
  %v461 = vadd.f32 %v203, %v422
  %v462 = vadd.f32 %v204, %v425
  %v463 = vadd.f32 %v205, %v428
  %v464 = vadd.f32 %v206, %v431
  %465 = vst [vmem:[%s2] sm:$0xff] %v433
  %466 = vst [vmem:[%s2 + $0x8] sm:$0xff] %v434
  %467 = vst [vmem:[%s2 + $0x10] sm:$0xff] %v435
  %468 = vst [vmem:[%s2 + $0x18] sm:$0xff] %v436
  %469 = vst [vmem:[%s2 + $0x20] sm:$0xff] %v437
  %470 = vst [vmem:[%s2 + $0x28] sm:$0xff] %v438
  %471 = vst [vmem:[%s2 + $0x30] sm:$0xff] %v439
  %472 = vst [vmem:[%s2 + $0x38] sm:$0xff] %v440
  %473 = vst [vmem:[%s2 + $0x40] sm:$0xff] %v441
  %474 = vst [vmem:[%s2 + $0x48] sm:$0xff] %v442
  %475 = vst [vmem:[%s2 + $0x50] sm:$0xff] %v443
  %476 = vst [vmem:[%s2 + $0x58] sm:$0xff] %v444
  %477 = vst [vmem:[%s2 + $0x60] sm:$0xff] %v445
  %478 = vst [vmem:[%s2 + $0x68] sm:$0xff] %v446
  %479 = vst [vmem:[%s2 + $0x70] sm:$0xff] %v447
  %480 = vst [vmem:[%s2 + $0x78] sm:$0xff] %v448
  %481 = vst [vmem:[%s2 + $0x80] sm:$0xff] %v449
  %482 = vst [vmem:[%s2 + $0x88] sm:$0xff] %v450
  %483 = vst [vmem:[%s2 + $0x90] sm:$0xff] %v451
  %484 = vst [vmem:[%s2 + $0x98] sm:$0xff] %v452
  %485 = vst [vmem:[%s2 + $0xa0] sm:$0xff] %v453
  %486 = vst [vmem:[%s2 + $0xa8] sm:$0xff] %v454
  %487 = vst [vmem:[%s2 + $0xb0] sm:$0xff] %v455
  %488 = vst [vmem:[%s2 + $0xb8] sm:$0xff] %v456
  %489 = vst [vmem:[%s2 + $0xc0] sm:$0xff] %v457
  %490 = vst [vmem:[%s2 + $0xc8] sm:$0xff] %v458
  %491 = vst [vmem:[%s2 + $0xd0] sm:$0xff] %v459
  %492 = vst [vmem:[%s2 + $0xd8] sm:$0xff] %v460
  %493 = vst [vmem:[%s2 + $0xe0] sm:$0xff] %v461
  %494 = vst [vmem:[%s2 + $0xe8] sm:$0xff] %v462
  %495 = vst [vmem:[%s2 + $0xf0] sm:$0xff] %v463
  %496 = vst [vmem:[%s2 + $0xf8] sm:$0xff] %v464
  // Predicated region
  $region14: #{sgconv_jj_forward.4} parent=0 // pred_check
    _
  $region15: #{sgconv_jj_forward.4} parent=0 // pred_check_branch
    %498 = sbr.rel (0) target = $region17
  $region16: #{sgconv_jj_forward.4} parent=0 // pred_region
    _
  $region17: #{sgconv_jj_forward.4} parent=0 // pred_fallthru
    _
  // Predicated region
  $region18: #{sgconv_jj_forward.4} parent=0 // pred_check
    _
  $region19: #{sgconv_jj_forward.4} parent=0 // pred_check_branch
    %500 = sbr.rel (0) target = $region21
  $region20: #{sgconv_jj_forward.4} parent=0 // pred_region
    _
  $region21: #{sgconv_jj_forward.4} parent=0 // pred_fallthru
    _

// kernel: sgconv_jj_forward.5
$region0: #{sgconv_jj_forward.5}
  #allocation0 [shape = 'u32[]', space=smem, size = 0x4, offset = 0x4, fixed_abs, tag = 'smem constant byte address 0x4 - core index']
  #allocation1 [shape = 'u32[72,128]{1,0:T(1,128)}', space=vmem, size = 0x9000, scoped, tag = 'internal scratch']
  %s0 = inlined_call_operand.vmem [shape: f32[256,128], index: 0, kind: input, shape index: {}]
  %s1 = inlined_call_operand.vmem [shape: s32[256,1], index: 1, kind: input, shape index: {}]
  %s2 = inlined_call_operand.vmem [shape: f32[1,16,256], index: 2, kind: output, shape index: {}]
  %s3 = sld [smem:[#allocation0]]
  $region22: #{sgconv_jj_forward.5} parent=0
    _
  %s5 = ssub.s32 1, %s3
  %s6 = scalar_select 0, %s5, %s3
  // Predicated region
  $region2: #{sgconv_jj_forward.5} parent=0 // pred_check
    _
  $region3: #{sgconv_jj_forward.5} parent=0 // pred_check_branch
    %8 = sbr.rel (0) target = $region5
  $region4: #{sgconv_jj_forward.5} parent=0 // pred_region
    %s9 = sadd.s32 0, 0
    %s10 = smul.u32 32, %s9
    %p11 = scmp.lt.s32.totalorder %s10, 31
    %s12 = scalar_select %p11, %s10, 31
    %s13 = smul.addr %s12, 8
    %s14 = scalar_lea.vmem %s0, %s13
    %s15 = sadd.s32 0, 0
    %s16 = smul.u32 32, %s15
  $region5: #{sgconv_jj_forward.5} parent=0 // pred_fallthru
    _
  // Predicated region
  $region6: #{sgconv_jj_forward.5} parent=0 // pred_check
    _
  $region7: #{sgconv_jj_forward.5} parent=0 // pred_check_branch
    %18 = sbr.rel (0) target = $region9
  $region8: #{sgconv_jj_forward.5} parent=0 // pred_region
    %s19 = sadd.s32 0, 0
    %s20 = smul.u32 32, %s19
    %p21 = scmp.lt.s32.totalorder %s20, 31
    %s22 = scalar_select %p21, %s20, 31
    %s23 = smul.addr %s22, 8
    %s24 = scalar_lea.vmem %s1, %s23
    %s25 = sadd.s32 0, 0
    %s26 = smul.u32 32, %s25
  $region9: #{sgconv_jj_forward.5} parent=0 // pred_fallthru
    _
  %s27 = sadd.s32 0, 0
  %s28 = smul.u32 32, %s27
  %p29 = scmp.lt.s32.totalorder %s28, 31
  %s30 = scalar_select %p29, %s28, 31
  %s31 = smul.addr %s30, 8
  %s32 = scalar_lea.vmem %s0, %s31
  %s33 = sadd.s32 0, 0
  %s34 = smul.u32 32, %s33
  %p35 = scmp.lt.s32.totalorder %s34, 31
  %s36 = scalar_select %p35, %s34, 31
  %s37 = smul.addr %s36, 8
  %s38 = scalar_lea.vmem %s1, %s37
  %s39 = sadd.s32 0, 0
  %s40 = smul.u32 32, %s39
  %p41 = scmp.lt.s32.totalorder %s40, 31
  %s42 = scalar_select %p41, %s40, 31
  %s43 = smul.addr %s42, 8
  %s44 = scalar_lea.vmem %s0, %s43
  %s45 = sadd.s32 0, 0
  %s46 = smul.u32 32, %s45
  %s47 = sadd.s32 0, 0
  %s48 = smul.u32 32, %s47
  %p49 = scmp.lt.s32.totalorder %s48, 31
  %s50 = scalar_select %p49, %s48, 31
  %s51 = smul.addr %s50, 8
  %s52 = scalar_lea.vmem %s1, %s51
  %s53 = sadd.s32 0, 0
  %s54 = smul.u32 32, %s53
  %p55 = scmp.eq.s32.totalorder 0, 0
  // Predicated region
  $region10: #{sgconv_jj_forward.5} parent=0 // pred_check
    %p56 = pneg %p55
  $region11: #{sgconv_jj_forward.5} parent=0 // pred_check_branch
    %58 = sbr.rel (%p56) target = $region13
  $region12: #{sgconv_jj_forward.5} parent=0 // pred_region
    %59 = vst [vmem:[%s2] sm:$0xff] 0.0
    %60 = vst [vmem:[%s2 + $0x8] sm:$0xff] 0.0
    %61 = vst [vmem:[%s2 + $0x10] sm:$0xff] 0.0
    %62 = vst [vmem:[%s2 + $0x18] sm:$0xff] 0.0
  $region13: #{sgconv_jj_forward.5} parent=0 // pred_fallthru
    _
  %v63 = vld [vmem:[%s44] sm:$0xff]
  %v64 = vld [vmem:[%s44 + $0x8] sm:$0xff]
  %v65 = vld [vmem:[%s44 + $0x10] sm:$0xff]
  %v66 = vld [vmem:[%s44 + $0x18] sm:$0xff]
  %v67 = vld [vmem:[%s44 + $0x20] sm:$0xff]
  %v68 = vld [vmem:[%s44 + $0x28] sm:$0xff]
  %v69 = vld [vmem:[%s44 + $0x30] sm:$0xff]
  %v70 = vld [vmem:[%s44 + $0x38] sm:$0xff]
  %v71 = vld [vmem:[%s44 + $0x40] sm:$0xff]
  %v72 = vld [vmem:[%s44 + $0x48] sm:$0xff]
  %v73 = vld [vmem:[%s44 + $0x50] sm:$0xff]
  %v74 = vld [vmem:[%s44 + $0x58] sm:$0xff]
  %v75 = vld [vmem:[%s44 + $0x60] sm:$0xff]
  %v76 = vld [vmem:[%s44 + $0x68] sm:$0xff]
  %v77 = vld [vmem:[%s44 + $0x70] sm:$0xff]
  %v78 = vld [vmem:[%s44 + $0x78] sm:$0xff]
  %v79 = vld [vmem:[%s44 + $0x80] sm:$0xff]
  %v80 = vld [vmem:[%s44 + $0x88] sm:$0xff]
  %v81 = vld [vmem:[%s44 + $0x90] sm:$0xff]
  %v82 = vld [vmem:[%s44 + $0x98] sm:$0xff]
  %v83 = vld [vmem:[%s44 + $0xa0] sm:$0xff]
  %v84 = vld [vmem:[%s44 + $0xa8] sm:$0xff]
  %v85 = vld [vmem:[%s44 + $0xb0] sm:$0xff]
  %v86 = vld [vmem:[%s44 + $0xb8] sm:$0xff]
  %v87 = vld [vmem:[%s44 + $0xc0] sm:$0xff]
  %v88 = vld [vmem:[%s44 + $0xc8] sm:$0xff]
  %v89 = vld [vmem:[%s44 + $0xd0] sm:$0xff]
  %v90 = vld [vmem:[%s44 + $0xd8] sm:$0xff]
  %v91 = vld [vmem:[%s44 + $0xe0] sm:$0xff]
  %v92 = vld [vmem:[%s44 + $0xe8] sm:$0xff]
  %v93 = vld [vmem:[%s44 + $0xf0] sm:$0xff]
  %v94 = vld [vmem:[%s44 + $0xf8] sm:$0xff]
  %v95 = vlaneseq
  %v96 = vand.u32 %v95, 127
  %v97 = vld [vmem:[%s52] sm:$0xff]
  %v98 = vld [vmem:[%s52 + $0x8] sm:$0xff]
  %v99 = vld [vmem:[%s52 + $0x10] sm:$0xff]
  %v100 = vld [vmem:[%s52 + $0x18] sm:$0xff]
  %v101 = vld [vmem:[%s52 + $0x20] sm:$0xff]
  %v102 = vld [vmem:[%s52 + $0x28] sm:$0xff]
  %v103 = vld [vmem:[%s52 + $0x30] sm:$0xff]
  %v104 = vld [vmem:[%s52 + $0x38] sm:$0xff]
  %v105 = vld [vmem:[%s52 + $0x40] sm:$0xff]
  %v106 = vld [vmem:[%s52 + $0x48] sm:$0xff]
  %v107 = vld [vmem:[%s52 + $0x50] sm:$0xff]
  %v108 = vld [vmem:[%s52 + $0x58] sm:$0xff]
  %v109 = vld [vmem:[%s52 + $0x60] sm:$0xff]
  %v110 = vld [vmem:[%s52 + $0x68] sm:$0xff]
  %v111 = vld [vmem:[%s52 + $0x70] sm:$0xff]
  %v112 = vld [vmem:[%s52 + $0x78] sm:$0xff]
  %v113 = vld [vmem:[%s52 + $0x80] sm:$0xff]
  %v114 = vld [vmem:[%s52 + $0x88] sm:$0xff]
  %v115 = vld [vmem:[%s52 + $0x90] sm:$0xff]
  %v116 = vld [vmem:[%s52 + $0x98] sm:$0xff]
  %v117 = vld [vmem:[%s52 + $0xa0] sm:$0xff]
  %v118 = vld [vmem:[%s52 + $0xa8] sm:$0xff]
  %v119 = vld [vmem:[%s52 + $0xb0] sm:$0xff]
  %v120 = vld [vmem:[%s52 + $0xb8] sm:$0xff]
  %v121 = vld [vmem:[%s52 + $0xc0] sm:$0xff]
  %v122 = vld [vmem:[%s52 + $0xc8] sm:$0xff]
  %v123 = vld [vmem:[%s52 + $0xd0] sm:$0xff]
  %v124 = vld [vmem:[%s52 + $0xd8] sm:$0xff]
  %v125 = vld [vmem:[%s52 + $0xe0] sm:$0xff]
  %v126 = vld [vmem:[%s52 + $0xe8] sm:$0xff]
  %v127 = vld [vmem:[%s52 + $0xf0] sm:$0xff]
  %v128 = vld [vmem:[%s52 + $0xf8] sm:$0xff]
  %129 = vset.pattern.permute.xlu0 0
  %130 = vperm.xlu0 %129, %v97
  %v131 = vpop.permute.xlu0 %130
  %132 = vset.pattern.permute.xlu0 0
  %133 = vperm.xlu0 %132, %v98
  %v134 = vpop.permute.xlu0 %133
  %135 = vset.pattern.permute.xlu0 0
  %136 = vperm.xlu0 %135, %v99
  %v137 = vpop.permute.xlu0 %136
  %138 = vset.pattern.permute.xlu0 0
  %139 = vperm.xlu0 %138, %v100
  %v140 = vpop.permute.xlu0 %139
  %141 = vset.pattern.permute.xlu0 0
  %142 = vperm.xlu0 %141, %v101
  %v143 = vpop.permute.xlu0 %142
  %144 = vset.pattern.permute.xlu0 0
  %145 = vperm.xlu0 %144, %v102
  %v146 = vpop.permute.xlu0 %145
  %147 = vset.pattern.permute.xlu0 0
  %148 = vperm.xlu0 %147, %v103
  %v149 = vpop.permute.xlu0 %148
  %150 = vset.pattern.permute.xlu0 0
  %151 = vperm.xlu0 %150, %v104
  %v152 = vpop.permute.xlu0 %151
  %153 = vset.pattern.permute.xlu0 0
  %154 = vperm.xlu0 %153, %v105
  %v155 = vpop.permute.xlu0 %154
  %156 = vset.pattern.permute.xlu0 0
  %157 = vperm.xlu0 %156, %v106
  %v158 = vpop.permute.xlu0 %157
  %159 = vset.pattern.permute.xlu0 0
  %160 = vperm.xlu0 %159, %v107
  %v161 = vpop.permute.xlu0 %160
  %162 = vset.pattern.permute.xlu0 0
  %163 = vperm.xlu0 %162, %v108
  %v164 = vpop.permute.xlu0 %163
  %165 = vset.pattern.permute.xlu0 0
  %166 = vperm.xlu0 %165, %v109
  %v167 = vpop.permute.xlu0 %166
  %168 = vset.pattern.permute.xlu0 0
  %169 = vperm.xlu0 %168, %v110
  %v170 = vpop.permute.xlu0 %169
  %171 = vset.pattern.permute.xlu0 0
  %172 = vperm.xlu0 %171, %v111
  %v173 = vpop.permute.xlu0 %172
  %174 = vset.pattern.permute.xlu0 0
  %175 = vperm.xlu0 %174, %v112
  %v176 = vpop.permute.xlu0 %175
  %177 = vset.pattern.permute.xlu0 0
  %178 = vperm.xlu0 %177, %v113
  %v179 = vpop.permute.xlu0 %178
  %180 = vset.pattern.permute.xlu0 0
  %181 = vperm.xlu0 %180, %v114
  %v182 = vpop.permute.xlu0 %181
  %183 = vset.pattern.permute.xlu0 0
  %184 = vperm.xlu0 %183, %v115
  %v185 = vpop.permute.xlu0 %184
  %186 = vset.pattern.permute.xlu0 0
  %187 = vperm.xlu0 %186, %v116
  %v188 = vpop.permute.xlu0 %187
  %189 = vset.pattern.permute.xlu0 0
  %190 = vperm.xlu0 %189, %v117
  %v191 = vpop.permute.xlu0 %190
  %192 = vset.pattern.permute.xlu0 0
  %193 = vperm.xlu0 %192, %v118
  %v194 = vpop.permute.xlu0 %193
  %195 = vset.pattern.permute.xlu0 0
  %196 = vperm.xlu0 %195, %v119
  %v197 = vpop.permute.xlu0 %196
  %198 = vset.pattern.permute.xlu0 0
  %199 = vperm.xlu0 %198, %v120
  %v200 = vpop.permute.xlu0 %199
  %201 = vset.pattern.permute.xlu0 0
  %202 = vperm.xlu0 %201, %v121
  %v203 = vpop.permute.xlu0 %202
  %204 = vset.pattern.permute.xlu0 0
  %205 = vperm.xlu0 %204, %v122
  %v206 = vpop.permute.xlu0 %205
  %207 = vset.pattern.permute.xlu0 0
  %208 = vperm.xlu0 %207, %v123
  %v209 = vpop.permute.xlu0 %208
  %210 = vset.pattern.permute.xlu0 0
  %211 = vperm.xlu0 %210, %v124
  %v212 = vpop.permute.xlu0 %211
  %213 = vset.pattern.permute.xlu0 0
  %214 = vperm.xlu0 %213, %v125
  %v215 = vpop.permute.xlu0 %214
  %216 = vset.pattern.permute.xlu0 0
  %217 = vperm.xlu0 %216, %v126
  %v218 = vpop.permute.xlu0 %217
  %219 = vset.pattern.permute.xlu0 0
  %220 = vperm.xlu0 %219, %v127
  %v221 = vpop.permute.xlu0 %220
  %222 = vset.pattern.permute.xlu0 0
  %223 = vperm.xlu0 %222, %v128
  %v224 = vpop.permute.xlu0 %223
  %vm225 = vcmp.eq.s32.totalorder %v131, %v96
  %vm226 = vcmp.eq.s32.totalorder %v134, %v96
  %vm227 = vcmp.eq.s32.totalorder %v137, %v96
  %vm228 = vcmp.eq.s32.totalorder %v140, %v96
  %vm229 = vcmp.eq.s32.totalorder %v143, %v96
  %vm230 = vcmp.eq.s32.totalorder %v146, %v96
  %vm231 = vcmp.eq.s32.totalorder %v149, %v96
  %vm232 = vcmp.eq.s32.totalorder %v152, %v96
  %vm233 = vcmp.eq.s32.totalorder %v155, %v96
  %vm234 = vcmp.eq.s32.totalorder %v158, %v96
  %vm235 = vcmp.eq.s32.totalorder %v161, %v96
  %vm236 = vcmp.eq.s32.totalorder %v164, %v96
  %vm237 = vcmp.eq.s32.totalorder %v167, %v96
  %vm238 = vcmp.eq.s32.totalorder %v170, %v96
  %vm239 = vcmp.eq.s32.totalorder %v173, %v96
  %vm240 = vcmp.eq.s32.totalorder %v176, %v96
  %vm241 = vcmp.eq.s32.totalorder %v179, %v96
  %vm242 = vcmp.eq.s32.totalorder %v182, %v96
  %vm243 = vcmp.eq.s32.totalorder %v185, %v96
  %vm244 = vcmp.eq.s32.totalorder %v188, %v96
  %vm245 = vcmp.eq.s32.totalorder %v191, %v96
  %vm246 = vcmp.eq.s32.totalorder %v194, %v96
  %vm247 = vcmp.eq.s32.totalorder %v197, %v96
  %vm248 = vcmp.eq.s32.totalorder %v200, %v96
  %vm249 = vcmp.eq.s32.totalorder %v203, %v96
  %vm250 = vcmp.eq.s32.totalorder %v206, %v96
  %vm251 = vcmp.eq.s32.totalorder %v209, %v96
  %vm252 = vcmp.eq.s32.totalorder %v212, %v96
  %vm253 = vcmp.eq.s32.totalorder %v215, %v96
  %vm254 = vcmp.eq.s32.totalorder %v218, %v96
  %vm255 = vcmp.eq.s32.totalorder %v221, %v96
  %vm256 = vcmp.eq.s32.totalorder %v224, %v96
  %v257 = vsel %vm225, 1, 0
  %v258 = vsel %vm226, 1, 0
  %v259 = vsel %vm227, 1, 0
  %v260 = vsel %vm228, 1, 0
  %v261 = vsel %vm229, 1, 0
  %v262 = vsel %vm230, 1, 0
  %v263 = vsel %vm231, 1, 0
  %v264 = vsel %vm232, 1, 0
  %v265 = vsel %vm233, 1, 0
  %v266 = vsel %vm234, 1, 0
  %v267 = vsel %vm235, 1, 0
  %v268 = vsel %vm236, 1, 0
  %v269 = vsel %vm237, 1, 0
  %v270 = vsel %vm238, 1, 0
  %v271 = vsel %vm239, 1, 0
  %v272 = vsel %vm240, 1, 0
  %v273 = vsel %vm241, 1, 0
  %v274 = vsel %vm242, 1, 0
  %v275 = vsel %vm243, 1, 0
  %v276 = vsel %vm244, 1, 0
  %v277 = vsel %vm245, 1, 0
  %v278 = vsel %vm246, 1, 0
  %v279 = vsel %vm247, 1, 0
  %v280 = vsel %vm248, 1, 0
  %v281 = vsel %vm249, 1, 0
  %v282 = vsel %vm250, 1, 0
  %v283 = vsel %vm251, 1, 0
  %v284 = vsel %vm252, 1, 0
  %v285 = vsel %vm253, 1, 0
  %v286 = vsel %vm254, 1, 0
  %v287 = vsel %vm255, 1, 0
  %v288 = vsel %vm256, 1, 0
  %v289 = vcvt.s32.f32 %v257
  %v290 = vcvt.s32.f32 %v258
  %v291 = vcvt.s32.f32 %v259
  %v292 = vcvt.s32.f32 %v260
  %v293 = vcvt.s32.f32 %v261
  %v294 = vcvt.s32.f32 %v262
  %v295 = vcvt.s32.f32 %v263
  %v296 = vcvt.s32.f32 %v264
  %v297 = vcvt.s32.f32 %v265
  %v298 = vcvt.s32.f32 %v266
  %v299 = vcvt.s32.f32 %v267
  %v300 = vcvt.s32.f32 %v268
  %v301 = vcvt.s32.f32 %v269
  %v302 = vcvt.s32.f32 %v270
  %v303 = vcvt.s32.f32 %v271
  %v304 = vcvt.s32.f32 %v272
  %v305 = vcvt.s32.f32 %v273
  %v306 = vcvt.s32.f32 %v274
  %v307 = vcvt.s32.f32 %v275
  %v308 = vcvt.s32.f32 %v276
  %v309 = vcvt.s32.f32 %v277
  %v310 = vcvt.s32.f32 %v278
  %v311 = vcvt.s32.f32 %v279
  %v312 = vcvt.s32.f32 %v280
  %v313 = vcvt.s32.f32 %v281
  %v314 = vcvt.s32.f32 %v282
  %v315 = vcvt.s32.f32 %v283
  %v316 = vcvt.s32.f32 %v284
  %v317 = vcvt.s32.f32 %v285
  %v318 = vcvt.s32.f32 %v286
  %v319 = vcvt.s32.f32 %v287
  %v320 = vcvt.s32.f32 %v288
  %v321 = vmul.f32 %v63, %v63
  %v322 = vmul.f32 %v64, %v64
  %v323 = vmul.f32 %v65, %v65
  %v324 = vmul.f32 %v66, %v66
  %v325 = vmul.f32 %v67, %v67
  %v326 = vmul.f32 %v68, %v68
  %v327 = vmul.f32 %v69, %v69
  %v328 = vmul.f32 %v70, %v70
  %v329 = vmul.f32 %v71, %v71
  %v330 = vmul.f32 %v72, %v72
  %v331 = vmul.f32 %v73, %v73
  %v332 = vmul.f32 %v74, %v74
  %v333 = vmul.f32 %v75, %v75
  %v334 = vmul.f32 %v76, %v76
  %v335 = vmul.f32 %v77, %v77
  %v336 = vmul.f32 %v78, %v78
  %v337 = vmul.f32 %v79, %v79
  %v338 = vmul.f32 %v80, %v80
  %v339 = vmul.f32 %v81, %v81
  %v340 = vmul.f32 %v82, %v82
  %v341 = vmul.f32 %v83, %v83
  %v342 = vmul.f32 %v84, %v84
  %v343 = vmul.f32 %v85, %v85
  %v344 = vmul.f32 %v86, %v86
  %v345 = vmul.f32 %v87, %v87
  %v346 = vmul.f32 %v88, %v88
  %v347 = vmul.f32 %v89, %v89
  %v348 = vmul.f32 %v90, %v90
  %v349 = vmul.f32 %v91, %v91
  %v350 = vmul.f32 %v92, %v92
  %v351 = vmul.f32 %v93, %v93
  %v352 = vmul.f32 %v94, %v94
  %353 = vadd.xlane.f32.xlu0 %v321
  %v354 = vpop.xlane.xlu0 %353
  %355 = vadd.xlane.f32.xlu0 %v322
  %v356 = vpop.xlane.xlu0 %355
  %357 = vadd.xlane.f32.xlu0 %v323
  %v358 = vpop.xlane.xlu0 %357
  %359 = vadd.xlane.f32.xlu0 %v324
  %v360 = vpop.xlane.xlu0 %359
  %361 = vadd.xlane.f32.xlu0 %v325
  %v362 = vpop.xlane.xlu0 %361
  %363 = vadd.xlane.f32.xlu0 %v326
  %v364 = vpop.xlane.xlu0 %363
  %365 = vadd.xlane.f32.xlu0 %v327
  %v366 = vpop.xlane.xlu0 %365
  %367 = vadd.xlane.f32.xlu0 %v328
  %v368 = vpop.xlane.xlu0 %367
  %369 = vadd.xlane.f32.xlu0 %v329
  %v370 = vpop.xlane.xlu0 %369
  %371 = vadd.xlane.f32.xlu0 %v330
  %v372 = vpop.xlane.xlu0 %371
  %373 = vadd.xlane.f32.xlu0 %v331
  %v374 = vpop.xlane.xlu0 %373
  %375 = vadd.xlane.f32.xlu0 %v332
  %v376 = vpop.xlane.xlu0 %375
  %377 = vadd.xlane.f32.xlu0 %v333
  %v378 = vpop.xlane.xlu0 %377
  %379 = vadd.xlane.f32.xlu0 %v334
  %v380 = vpop.xlane.xlu0 %379
  %381 = vadd.xlane.f32.xlu0 %v335
  %v382 = vpop.xlane.xlu0 %381
  %383 = vadd.xlane.f32.xlu0 %v336
  %v384 = vpop.xlane.xlu0 %383
  %385 = vadd.xlane.f32.xlu0 %v337
  %v386 = vpop.xlane.xlu0 %385
  %387 = vadd.xlane.f32.xlu0 %v338
  %v388 = vpop.xlane.xlu0 %387
  %389 = vadd.xlane.f32.xlu0 %v339
  %v390 = vpop.xlane.xlu0 %389
  %391 = vadd.xlane.f32.xlu0 %v340
  %v392 = vpop.xlane.xlu0 %391
  %393 = vadd.xlane.f32.xlu0 %v341
  %v394 = vpop.xlane.xlu0 %393
  %395 = vadd.xlane.f32.xlu0 %v342
  %v396 = vpop.xlane.xlu0 %395
  %397 = vadd.xlane.f32.xlu0 %v343
  %v398 = vpop.xlane.xlu0 %397
  %399 = vadd.xlane.f32.xlu0 %v344
  %v400 = vpop.xlane.xlu0 %399
  %401 = vadd.xlane.f32.xlu0 %v345
  %v402 = vpop.xlane.xlu0 %401
  %403 = vadd.xlane.f32.xlu0 %v346
  %v404 = vpop.xlane.xlu0 %403
  %405 = vadd.xlane.f32.xlu0 %v347
  %v406 = vpop.xlane.xlu0 %405
  %407 = vadd.xlane.f32.xlu0 %v348
  %v408 = vpop.xlane.xlu0 %407
  %409 = vadd.xlane.f32.xlu0 %v349
  %v410 = vpop.xlane.xlu0 %409
  %411 = vadd.xlane.f32.xlu0 %v350
  %v412 = vpop.xlane.xlu0 %411
  %413 = vadd.xlane.f32.xlu0 %v351
  %v414 = vpop.xlane.xlu0 %413
  %415 = vadd.xlane.f32.xlu0 %v352
  %v416 = vpop.xlane.xlu0 %415
  %vm417 = vcmp.eq.s32.totalorder %v96, 0
  %vm418 = vcmp.eq.s32.totalorder %v96, 1
  %v419 = vsel %vm418, %v354, 0.0
  %v420 = vsel %vm418, %v356, 0.0
  %v421 = vsel %vm418, %v358, 0.0
  %v422 = vsel %vm418, %v360, 0.0
  %v423 = vsel %vm418, %v362, 0.0
  %v424 = vsel %vm418, %v364, 0.0
  %v425 = vsel %vm418, %v366, 0.0
  %v426 = vsel %vm418, %v368, 0.0
  %v427 = vsel %vm418, %v370, 0.0
  %v428 = vsel %vm418, %v372, 0.0
  %v429 = vsel %vm418, %v374, 0.0
  %v430 = vsel %vm418, %v376, 0.0
  %v431 = vsel %vm418, %v378, 0.0
  %v432 = vsel %vm418, %v380, 0.0
  %v433 = vsel %vm418, %v382, 0.0
  %v434 = vsel %vm418, %v384, 0.0
  %v435 = vsel %vm418, %v386, 0.0
  %v436 = vsel %vm418, %v388, 0.0
  %v437 = vsel %vm418, %v390, 0.0
  %v438 = vsel %vm418, %v392, 0.0
  %v439 = vsel %vm418, %v394, 0.0
  %v440 = vsel %vm418, %v396, 0.0
  %v441 = vsel %vm418, %v398, 0.0
  %v442 = vsel %vm418, %v400, 0.0
  %v443 = vsel %vm418, %v402, 0.0
  %v444 = vsel %vm418, %v404, 0.0
  %v445 = vsel %vm418, %v406, 0.0
  %v446 = vsel %vm418, %v408, 0.0
  %v447 = vsel %vm418, %v410, 0.0
  %v448 = vsel %vm418, %v412, 0.0
  %v449 = vsel %vm418, %v414, 0.0
  %v450 = vsel %vm418, %v416, 0.0
  %v451 = vsel %vm417, 1.0, %v419
  %v452 = vsel %vm417, 1.0, %v420
  %v453 = vsel %vm417, 1.0, %v421
  %v454 = vsel %vm417, 1.0, %v422
  %v455 = vsel %vm417, 1.0, %v423
  %v456 = vsel %vm417, 1.0, %v424
  %v457 = vsel %vm417, 1.0, %v425
  %v458 = vsel %vm417, 1.0, %v426
  %v459 = vsel %vm417, 1.0, %v427
  %v460 = vsel %vm417, 1.0, %v428
  %v461 = vsel %vm417, 1.0, %v429
  %v462 = vsel %vm417, 1.0, %v430
  %v463 = vsel %vm417, 1.0, %v431
  %v464 = vsel %vm417, 1.0, %v432
  %v465 = vsel %vm417, 1.0, %v433
  %v466 = vsel %vm417, 1.0, %v434
  %v467 = vsel %vm417, 1.0, %v435
  %v468 = vsel %vm417, 1.0, %v436
  %v469 = vsel %vm417, 1.0, %v437
  %v470 = vsel %vm417, 1.0, %v438
  %v471 = vsel %vm417, 1.0, %v439
  %v472 = vsel %vm417, 1.0, %v440
  %v473 = vsel %vm417, 1.0, %v441
  %v474 = vsel %vm417, 1.0, %v442
  %v475 = vsel %vm417, 1.0, %v443
  %v476 = vsel %vm417, 1.0, %v444
  %v477 = vsel %vm417, 1.0, %v445
  %v478 = vsel %vm417, 1.0, %v446
  %v479 = vsel %vm417, 1.0, %v447
  %v480 = vsel %vm417, 1.0, %v448
  %v481 = vsel %vm417, 1.0, %v449
  %v482 = vsel %vm417, 1.0, %v450
  %v483 = vld [vmem:[%s2] sm:$0xff]
  %v484 = vld [vmem:[%s2 + $0x8] sm:$0xff]
  %v485 = vld [vmem:[%s2 + $0x10] sm:$0xff]
  %v486 = vld [vmem:[%s2 + $0x18] sm:$0xff]
  %487 = vxpose.xlu0.b32.start [1/16] %v289, 128
  %488 = vxpose.xlu0.b32.cont [2/16] %v290, 128
  %489 = vxpose.xlu0.b32.cont [3/16] %v291, 128
  %490 = vxpose.xlu0.b32.cont [4/16] %v292, 128
  %491 = vxpose.xlu0.b32.cont [5/16] %v293, 128
  %492 = vxpose.xlu0.b32.cont [6/16] %v294, 128
  %493 = vxpose.xlu0.b32.cont [7/16] %v295, 128
  %494 = vxpose.xlu0.b32.cont [8/16] %v296, 128
  %495 = vxpose.xlu0.b32.cont [9/16] %v297, 128
  %496 = vxpose.xlu0.b32.cont [10/16] %v298, 128
  %497 = vxpose.xlu0.b32.cont [11/16] %v299, 128
  %498 = vxpose.xlu0.b32.cont [12/16] %v300, 128
  %499 = vxpose.xlu0.b32.cont [13/16] %v301, 128
  %500 = vxpose.xlu0.b32.cont [14/16] %v302, 128
  %501 = vxpose.xlu0.b32.cont [15/16] %v303, 128
  %502 = vxpose.xlu0.b32.end [16/16] %v304, 128
  %v503 = vpop.trf.xlu0
  %v504 = vpop.trf.xlu0
  %v505 = vpop.trf.xlu0
  %v506 = vpop.trf.xlu0
  %v507 = vpop.trf.xlu0
  %v508 = vpop.trf.xlu0
  %v509 = vpop.trf.xlu0
  %v510 = vpop.trf.xlu0
  %v511 = vpop.trf.xlu0
  %v512 = vpop.trf.xlu0
  %v513 = vpop.trf.xlu0
  %v514 = vpop.trf.xlu0
  %v515 = vpop.trf.xlu0
  %v516 = vpop.trf.xlu0
  %v517 = vpop.trf.xlu0
  %v518 = vpop.trf.xlu0
  %519 = vxpose.xlu0.b32.start [1/16] %v305, 128
  %520 = vxpose.xlu0.b32.cont [2/16] %v306, 128
  %521 = vxpose.xlu0.b32.cont [3/16] %v307, 128
  %522 = vxpose.xlu0.b32.cont [4/16] %v308, 128
  %523 = vxpose.xlu0.b32.cont [5/16] %v309, 128
  %524 = vxpose.xlu0.b32.cont [6/16] %v310, 128
  %525 = vxpose.xlu0.b32.cont [7/16] %v311, 128
  %526 = vxpose.xlu0.b32.cont [8/16] %v312, 128
  %527 = vxpose.xlu0.b32.cont [9/16] %v313, 128
  %528 = vxpose.xlu0.b32.cont [10/16] %v314, 128
  %529 = vxpose.xlu0.b32.cont [11/16] %v315, 128
  %530 = vxpose.xlu0.b32.cont [12/16] %v316, 128
  %531 = vxpose.xlu0.b32.cont [13/16] %v317, 128
  %532 = vxpose.xlu0.b32.cont [14/16] %v318, 128
  %533 = vxpose.xlu0.b32.cont [15/16] %v319, 128
  %534 = vxpose.xlu0.b32.end [16/16] %v320, 128
  %v535 = vpop.trf.xlu0
  %v536 = vpop.trf.xlu0
  %v537 = vpop.trf.xlu0
  %v538 = vpop.trf.xlu0
  %v539 = vpop.trf.xlu0
  %v540 = vpop.trf.xlu0
  %v541 = vpop.trf.xlu0
  %v542 = vpop.trf.xlu0
  %v543 = vpop.trf.xlu0
  %v544 = vpop.trf.xlu0
  %v545 = vpop.trf.xlu0
  %v546 = vpop.trf.xlu0
  %v547 = vpop.trf.xlu0
  %v548 = vpop.trf.xlu0
  %v549 = vpop.trf.xlu0
  %v550 = vpop.trf.xlu0
  %551 = vmatpush.msra.mxu0 %v78
  %552 = vmatpush.msra.mxu0 %v77
  %553 = vmatpush.msra.mxu0 %v76
  %554 = vmatpush.msra.mxu0 %v75
  %555 = vmatpush.msra.mxu0 %v74
  %556 = vmatpush.msra.mxu0 %v73
  %557 = vmatpush.msra.mxu0 %v72
  %558 = vmatpush.msra.mxu0 %v71
  %559 = vmatpush.msra.mxu0 %v70
  %560 = vmatpush.msra.mxu0 %v69
  %561 = vmatpush.msra.mxu0 %v68
  %562 = vmatpush.msra.mxu0 %v67
  %563 = vmatpush.msra.mxu0 %v66
  %564 = vmatpush.msra.mxu0 %v65
  %565 = vmatpush.msra.mxu0 %v64
  %566 = vmatpush.msra.mxu0 %v63
  %567 = vmatmul.f32.gmra.mxu0 %v503
  %v568 = vpop.f32.mrf.mxu0
  %v569 = vadd.f32 0.0, %v568
  %570 = vmatmul.f32.gmra.mxu0 %v504
  %v571 = vpop.f32.mrf.mxu0
  %v572 = vadd.f32 0.0, %v571
  %573 = vdwg.mxu0
  %574 = vmatpush.msra.mxu0 %v94
  %575 = vmatpush.msra.mxu0 %v93
  %576 = vmatpush.msra.mxu0 %v92
  %577 = vmatpush.msra.mxu0 %v91
  %578 = vmatpush.msra.mxu0 %v90
  %579 = vmatpush.msra.mxu0 %v89
  %580 = vmatpush.msra.mxu0 %v88
  %581 = vmatpush.msra.mxu0 %v87
  %582 = vmatpush.msra.mxu0 %v86
  %583 = vmatpush.msra.mxu0 %v85
  %584 = vmatpush.msra.mxu0 %v84
  %585 = vmatpush.msra.mxu0 %v83
  %586 = vmatpush.msra.mxu0 %v82
  %587 = vmatpush.msra.mxu0 %v81
  %588 = vmatpush.msra.mxu0 %v80
  %589 = vmatpush.msra.mxu0 %v79
  %590 = vmatmul.f32.gmra.mxu0 %v535
  %v591 = vpop.f32.mrf.mxu0
  %v592 = vadd.f32 %v569, %v591
  %593 = vmatmul.f32.gmra.mxu0 %v536
  %v594 = vpop.f32.mrf.mxu0
  %v595 = vadd.f32 %v572, %v594
  %596 = vdwg.mxu0
  %597 = vmatpush.msra.mxu0 %v466
  %598 = vmatpush.msra.mxu0 %v465
  %599 = vmatpush.msra.mxu0 %v464
  %600 = vmatpush.msra.mxu0 %v463
  %601 = vmatpush.msra.mxu0 %v462
  %602 = vmatpush.msra.mxu0 %v461
  %603 = vmatpush.msra.mxu0 %v460
  %604 = vmatpush.msra.mxu0 %v459
  %605 = vmatpush.msra.mxu0 %v458
  %606 = vmatpush.msra.mxu0 %v457
  %607 = vmatpush.msra.mxu0 %v456
  %608 = vmatpush.msra.mxu0 %v455
  %609 = vmatpush.msra.mxu0 %v454
  %610 = vmatpush.msra.mxu0 %v453
  %611 = vmatpush.msra.mxu0 %v452
  %612 = vmatpush.msra.mxu0 %v451
  %613 = vmatmul.f32.gmra.mxu0 %v503
  %v614 = vpop.f32.mrf.mxu0
  %v615 = vadd.f32 0.0, %v614
  %616 = vmatmul.f32.gmra.mxu0 %v504
  %v617 = vpop.f32.mrf.mxu0
  %v618 = vadd.f32 0.0, %v617
  %619 = vdwg.mxu0
  %620 = vmatpush.msra.mxu0 %v482
  %621 = vmatpush.msra.mxu0 %v481
  %622 = vmatpush.msra.mxu0 %v480
  %623 = vmatpush.msra.mxu0 %v479
  %624 = vmatpush.msra.mxu0 %v478
  %625 = vmatpush.msra.mxu0 %v477
  %626 = vmatpush.msra.mxu0 %v476
  %627 = vmatpush.msra.mxu0 %v475
  %628 = vmatpush.msra.mxu0 %v474
  %629 = vmatpush.msra.mxu0 %v473
  %630 = vmatpush.msra.mxu0 %v472
  %631 = vmatpush.msra.mxu0 %v471
  %632 = vmatpush.msra.mxu0 %v470
  %633 = vmatpush.msra.mxu0 %v469
  %634 = vmatpush.msra.mxu0 %v468
  %635 = vmatpush.msra.mxu0 %v467
  %636 = vmatmul.f32.gmra.mxu0 %v535
  %v637 = vpop.f32.mrf.mxu0
  %v638 = vadd.f32 %v615, %v637
  %639 = vmatmul.f32.gmra.mxu0 %v536
  %v640 = vpop.f32.mrf.mxu0
  %v641 = vadd.f32 %v618, %v640
  %642 = vdwg.mxu0
  %v643 = vadd.f32 %v483, %v592
  %v644 = vadd.f32 %v484, %v638
  %v645 = vadd.f32 %v485, %v595
  %v646 = vadd.f32 %v486, %v641
  %647 = vst [vmem:[%s2] sm:$0xff] %v643
  %648 = vst [vmem:[%s2 + $0x8] sm:$0xff] %v644
  %649 = vst [vmem:[%s2 + $0x10] sm:$0xff] %v645
  %650 = vst [vmem:[%s2 + $0x18] sm:$0xff] %v646
  // Predicated region
  $region14: #{sgconv_jj_forward.5} parent=0 // pred_check
    _
  $region15: #{sgconv_jj_forward.5} parent=0 // pred_check_branch
    %652 = sbr.rel (0) target = $region17
  $region16: #{sgconv_jj_forward.5} parent=0 // pred_region
    _
  $region17: #{sgconv_jj_forward.5} parent=0 // pred_fallthru
    _
  // Predicated region
  $region18: #{sgconv_jj_forward.5} parent=0 // pred_check
    _
  $region19: #{sgconv_jj_forward.5} parent=0 // pred_check_branch
    %654 = sbr.rel (0) target = $region21
  $region20: #{sgconv_jj_forward.5} parent=0 // pred_region
    _
  $region21: #{sgconv_jj_forward.5} parent=0 // pred_fallthru
    _

// kernel: sgconv_jj_forward.6
$region0: #{sgconv_jj_forward.6}
  #allocation0 [shape = 'u32[]', space=smem, size = 0x4, offset = 0x4, fixed_abs, tag = 'smem constant byte address 0x4 - core index']
  #allocation1 [shape = 'u32[72,128]{1,0:T(1,128)}', space=vmem, size = 0x9000, scoped, tag = 'internal scratch']
  %s0 = inlined_call_operand.vmem [shape: f32[256,128], index: 0, kind: input, shape index: {}]
  %s1 = inlined_call_operand.vmem [shape: f32[256,2], index: 1, kind: input, shape index: {}]
  %s2 = inlined_call_operand.vmem [shape: f32[16,128], index: 2, kind: input, shape index: {}]
  %s3 = inlined_call_operand.vmem [shape: f32[256,128], index: 3, kind: output, shape index: {0}]
  %s4 = inlined_call_operand.vmem [shape: f32[1,2,128], index: 4, kind: output, shape index: {1}]
  %5 = xla_tuple %s3, %s4
  %s6 = sld [smem:[#allocation0]]
  $region34: #{sgconv_jj_forward.6} parent=0
    _
  %s8 = ssub.s32 1, %s6
  %s9 = scalar_select 0, %s8, %s6
  // Predicated region
  $region2: #{sgconv_jj_forward.6} parent=0 // pred_check
    _
  $region3: #{sgconv_jj_forward.6} parent=0 // pred_check_branch
    %11 = sbr.rel (0) target = $region5
  $region4: #{sgconv_jj_forward.6} parent=0 // pred_region
    %s12 = sadd.s32 0, 0
    %s13 = smul.u32 32, %s12
    %p14 = scmp.lt.s32.totalorder %s13, 31
    %s15 = scalar_select %p14, %s13, 31
    %s16 = smul.addr %s15, 8
    %s17 = scalar_lea.vmem %s0, %s16
    %s18 = sadd.s32 0, 0
    %s19 = smul.u32 32, %s18
  $region5: #{sgconv_jj_forward.6} parent=0 // pred_fallthru
    _
  // Predicated region
  $region6: #{sgconv_jj_forward.6} parent=0 // pred_check
    _
  $region7: #{sgconv_jj_forward.6} parent=0 // pred_check_branch
    %21 = sbr.rel (0) target = $region9
  $region8: #{sgconv_jj_forward.6} parent=0 // pred_region
    %s22 = sadd.s32 0, 0
    %s23 = smul.u32 32, %s22
    %p24 = scmp.lt.s32.totalorder %s23, 31
    %s25 = scalar_select %p24, %s23, 31
    %s26 = smul.addr %s25, 8
    %s27 = scalar_lea.vmem %s1, %s26
    %s28 = sadd.s32 0, 0
    %s29 = smul.u32 32, %s28
  $region9: #{sgconv_jj_forward.6} parent=0 // pred_fallthru
    _
  // Predicated region
  $region10: #{sgconv_jj_forward.6} parent=0 // pred_check
    _
  $region11: #{sgconv_jj_forward.6} parent=0 // pred_check_branch
    %31 = sbr.rel (0) target = $region13
  $region12: #{sgconv_jj_forward.6} parent=0 // pred_region
    _
  $region13: #{sgconv_jj_forward.6} parent=0 // pred_fallthru
    _
  %s32 = sadd.s32 0, 0
  %s33 = smul.u32 32, %s32
  %p34 = scmp.lt.s32.totalorder %s33, 31
  %s35 = scalar_select %p34, %s33, 31
  %s36 = smul.addr %s35, 8
  %s37 = scalar_lea.vmem %s0, %s36
  %s38 = sadd.s32 0, 0
  %s39 = smul.u32 32, %s38
  %p40 = scmp.lt.s32.totalorder %s39, 31
  %s41 = scalar_select %p40, %s39, 31
  %s42 = smul.addr %s41, 8
  %s43 = scalar_lea.vmem %s1, %s42
  %s44 = sadd.s32 0, 0
  %s45 = smul.u32 32, %s44
  %p46 = scmp.lt.s32.totalorder %s45, 31
  %s47 = scalar_select %p46, %s45, 31
  %s48 = smul.addr %s47, 8
  %s49 = scalar_lea.vmem %s3, %s48
  %s50 = sadd.s32 0, 0
  %s51 = smul.u32 32, %s50
  %p52 = scmp.lt.s32.totalorder %s51, 31
  %s53 = scalar_select %p52, %s51, 31
  %s54 = smul.addr %s53, 8
  %s55 = scalar_lea.vmem %s0, %s54
  %s56 = sadd.s32 0, 0
  %s57 = smul.u32 32, %s56
  %s58 = sadd.s32 0, 0
  %s59 = smul.u32 32, %s58
  %p60 = scmp.lt.s32.totalorder %s59, 31
  %s61 = scalar_select %p60, %s59, 31
  %s62 = smul.addr %s61, 8
  %s63 = scalar_lea.vmem %s1, %s62
  %s64 = sadd.s32 0, 0
  %s65 = smul.u32 32, %s64
  %s66 = sadd.s32 0, 0
  %s67 = smul.u32 32, %s66
  %p68 = scmp.lt.s32.totalorder %s67, 31
  %s69 = scalar_select %p68, %s67, 31
  %s70 = smul.addr %s69, 8
  %s71 = scalar_lea.vmem %s3, %s70
  %s72 = sadd.s32 0, 0
  %s73 = smul.u32 32, %s72
  %p74 = scmp.eq.s32.totalorder 0, 0
  // Predicated region
  $region14: #{sgconv_jj_forward.6} parent=0 // pred_check
    %p75 = pneg %p74
  $region15: #{sgconv_jj_forward.6} parent=0 // pred_check_branch
    %77 = sbr.rel (%p75) target = $region17
  $region16: #{sgconv_jj_forward.6} parent=0 // pred_region
    %78 = vst [vmem:[%s4] sm:$0x3] 0.0
  $region17: #{sgconv_jj_forward.6} parent=0 // pred_fallthru
    _
  %v79 = vld [vmem:[%s63] sm:$0xff]
  %v80 = vld [vmem:[%s63 + $0x8] sm:$0xff]
  %v81 = vld [vmem:[%s63 + $0x10] sm:$0xff]
  %v82 = vld [vmem:[%s63 + $0x18] sm:$0xff]
  %v83 = vld [vmem:[%s63 + $0x20] sm:$0xff]
  %v84 = vld [vmem:[%s63 + $0x28] sm:$0xff]
  %v85 = vld [vmem:[%s63 + $0x30] sm:$0xff]
  %v86 = vld [vmem:[%s63 + $0x38] sm:$0xff]
  %v87 = vld [vmem:[%s63 + $0x40] sm:$0xff]
  %v88 = vld [vmem:[%s63 + $0x48] sm:$0xff]
  %v89 = vld [vmem:[%s63 + $0x50] sm:$0xff]
  %v90 = vld [vmem:[%s63 + $0x58] sm:$0xff]
  %v91 = vld [vmem:[%s63 + $0x60] sm:$0xff]
  %v92 = vld [vmem:[%s63 + $0x68] sm:$0xff]
  %v93 = vld [vmem:[%s63 + $0x70] sm:$0xff]
  %v94 = vld [vmem:[%s63 + $0x78] sm:$0xff]
  %v95 = vld [vmem:[%s63 + $0x80] sm:$0xff]
  %v96 = vld [vmem:[%s63 + $0x88] sm:$0xff]
  %v97 = vld [vmem:[%s63 + $0x90] sm:$0xff]
  %v98 = vld [vmem:[%s63 + $0x98] sm:$0xff]
  %v99 = vld [vmem:[%s63 + $0xa0] sm:$0xff]
  %v100 = vld [vmem:[%s63 + $0xa8] sm:$0xff]
  %v101 = vld [vmem:[%s63 + $0xb0] sm:$0xff]
  %v102 = vld [vmem:[%s63 + $0xb8] sm:$0xff]
  %v103 = vld [vmem:[%s63 + $0xc0] sm:$0xff]
  %v104 = vld [vmem:[%s63 + $0xc8] sm:$0xff]
  %v105 = vld [vmem:[%s63 + $0xd0] sm:$0xff]
  %v106 = vld [vmem:[%s63 + $0xd8] sm:$0xff]
  %v107 = vld [vmem:[%s63 + $0xe0] sm:$0xff]
  %v108 = vld [vmem:[%s63 + $0xe8] sm:$0xff]
  %v109 = vld [vmem:[%s63 + $0xf0] sm:$0xff]
  %v110 = vld [vmem:[%s63 + $0xf8] sm:$0xff]
  %v111 = vcvt.f32.s32.to.zero.pseudo %v79
  %v112 = vcvt.f32.s32.to.zero.pseudo %v80
  %v113 = vcvt.f32.s32.to.zero.pseudo %v81
  %v114 = vcvt.f32.s32.to.zero.pseudo %v82
  %v115 = vcvt.f32.s32.to.zero.pseudo %v83
  %v116 = vcvt.f32.s32.to.zero.pseudo %v84
  %v117 = vcvt.f32.s32.to.zero.pseudo %v85
  %v118 = vcvt.f32.s32.to.zero.pseudo %v86
  %v119 = vcvt.f32.s32.to.zero.pseudo %v87
  %v120 = vcvt.f32.s32.to.zero.pseudo %v88
  %v121 = vcvt.f32.s32.to.zero.pseudo %v89
  %v122 = vcvt.f32.s32.to.zero.pseudo %v90
  %v123 = vcvt.f32.s32.to.zero.pseudo %v91
  %v124 = vcvt.f32.s32.to.zero.pseudo %v92
  %v125 = vcvt.f32.s32.to.zero.pseudo %v93
  %v126 = vcvt.f32.s32.to.zero.pseudo %v94
  %v127 = vcvt.f32.s32.to.zero.pseudo %v95
  %v128 = vcvt.f32.s32.to.zero.pseudo %v96
  %v129 = vcvt.f32.s32.to.zero.pseudo %v97
  %v130 = vcvt.f32.s32.to.zero.pseudo %v98
  %v131 = vcvt.f32.s32.to.zero.pseudo %v99
  %v132 = vcvt.f32.s32.to.zero.pseudo %v100
  %v133 = vcvt.f32.s32.to.zero.pseudo %v101
  %v134 = vcvt.f32.s32.to.zero.pseudo %v102
  %v135 = vcvt.f32.s32.to.zero.pseudo %v103
  %v136 = vcvt.f32.s32.to.zero.pseudo %v104
  %v137 = vcvt.f32.s32.to.zero.pseudo %v105
  %v138 = vcvt.f32.s32.to.zero.pseudo %v106
  %v139 = vcvt.f32.s32.to.zero.pseudo %v107
  %v140 = vcvt.f32.s32.to.zero.pseudo %v108
  %v141 = vcvt.f32.s32.to.zero.pseudo %v109
  %v142 = vcvt.f32.s32.to.zero.pseudo %v110
  %v143 = vlaneseq
  %v144 = vand.u32 %v143, 127
  %145 = vset.pattern.permute.xlu0 1
  %146 = vperm.xlu0 %145, %v111
  %v147 = vpop.permute.xlu0 %146
  %148 = vset.pattern.permute.xlu0 1
  %149 = vperm.xlu0 %148, %v112
  %v150 = vpop.permute.xlu0 %149
  %151 = vset.pattern.permute.xlu0 1
  %152 = vperm.xlu0 %151, %v113
  %v153 = vpop.permute.xlu0 %152
  %154 = vset.pattern.permute.xlu0 1
  %155 = vperm.xlu0 %154, %v114
  %v156 = vpop.permute.xlu0 %155
  %157 = vset.pattern.permute.xlu0 1
  %158 = vperm.xlu0 %157, %v115
  %v159 = vpop.permute.xlu0 %158
  %160 = vset.pattern.permute.xlu0 1
  %161 = vperm.xlu0 %160, %v116
  %v162 = vpop.permute.xlu0 %161
  %163 = vset.pattern.permute.xlu0 1
  %164 = vperm.xlu0 %163, %v117
  %v165 = vpop.permute.xlu0 %164
  %166 = vset.pattern.permute.xlu0 1
  %167 = vperm.xlu0 %166, %v118
  %v168 = vpop.permute.xlu0 %167
  %169 = vset.pattern.permute.xlu0 1
  %170 = vperm.xlu0 %169, %v119
  %v171 = vpop.permute.xlu0 %170
  %172 = vset.pattern.permute.xlu0 1
  %173 = vperm.xlu0 %172, %v120
  %v174 = vpop.permute.xlu0 %173
  %175 = vset.pattern.permute.xlu0 1
  %176 = vperm.xlu0 %175, %v121
  %v177 = vpop.permute.xlu0 %176
  %178 = vset.pattern.permute.xlu0 1
  %179 = vperm.xlu0 %178, %v122
  %v180 = vpop.permute.xlu0 %179
  %181 = vset.pattern.permute.xlu0 1
  %182 = vperm.xlu0 %181, %v123
  %v183 = vpop.permute.xlu0 %182
  %184 = vset.pattern.permute.xlu0 1
  %185 = vperm.xlu0 %184, %v124
  %v186 = vpop.permute.xlu0 %185
  %187 = vset.pattern.permute.xlu0 1
  %188 = vperm.xlu0 %187, %v125
  %v189 = vpop.permute.xlu0 %188
  %190 = vset.pattern.permute.xlu0 1
  %191 = vperm.xlu0 %190, %v126
  %v192 = vpop.permute.xlu0 %191
  %193 = vset.pattern.permute.xlu0 1
  %194 = vperm.xlu0 %193, %v127
  %v195 = vpop.permute.xlu0 %194
  %196 = vset.pattern.permute.xlu0 1
  %197 = vperm.xlu0 %196, %v128
  %v198 = vpop.permute.xlu0 %197
  %199 = vset.pattern.permute.xlu0 1
  %200 = vperm.xlu0 %199, %v129
  %v201 = vpop.permute.xlu0 %200
  %202 = vset.pattern.permute.xlu0 1
  %203 = vperm.xlu0 %202, %v130
  %v204 = vpop.permute.xlu0 %203
  %205 = vset.pattern.permute.xlu0 1
  %206 = vperm.xlu0 %205, %v131
  %v207 = vpop.permute.xlu0 %206
  %208 = vset.pattern.permute.xlu0 1
  %209 = vperm.xlu0 %208, %v132
  %v210 = vpop.permute.xlu0 %209
  %211 = vset.pattern.permute.xlu0 1
  %212 = vperm.xlu0 %211, %v133
  %v213 = vpop.permute.xlu0 %212
  %214 = vset.pattern.permute.xlu0 1
  %215 = vperm.xlu0 %214, %v134
  %v216 = vpop.permute.xlu0 %215
  %217 = vset.pattern.permute.xlu0 1
  %218 = vperm.xlu0 %217, %v135
  %v219 = vpop.permute.xlu0 %218
  %220 = vset.pattern.permute.xlu0 1
  %221 = vperm.xlu0 %220, %v136
  %v222 = vpop.permute.xlu0 %221
  %223 = vset.pattern.permute.xlu0 1
  %224 = vperm.xlu0 %223, %v137
  %v225 = vpop.permute.xlu0 %224
  %226 = vset.pattern.permute.xlu0 1
  %227 = vperm.xlu0 %226, %v138
  %v228 = vpop.permute.xlu0 %227
  %229 = vset.pattern.permute.xlu0 1
  %230 = vperm.xlu0 %229, %v139
  %v231 = vpop.permute.xlu0 %230
  %232 = vset.pattern.permute.xlu0 1
  %233 = vperm.xlu0 %232, %v140
  %v234 = vpop.permute.xlu0 %233
  %235 = vset.pattern.permute.xlu0 1
  %236 = vperm.xlu0 %235, %v141
  %v237 = vpop.permute.xlu0 %236
  %238 = vset.pattern.permute.xlu0 1
  %239 = vperm.xlu0 %238, %v142
  %v240 = vpop.permute.xlu0 %239
  %vm241 = vcmp.eq.s32.totalorder %v147, %v144
  %vm242 = vcmp.eq.s32.totalorder %v150, %v144
  %vm243 = vcmp.eq.s32.totalorder %v153, %v144
  %vm244 = vcmp.eq.s32.totalorder %v156, %v144
  %vm245 = vcmp.eq.s32.totalorder %v159, %v144
  %vm246 = vcmp.eq.s32.totalorder %v162, %v144
  %vm247 = vcmp.eq.s32.totalorder %v165, %v144
  %vm248 = vcmp.eq.s32.totalorder %v168, %v144
  %vm249 = vcmp.eq.s32.totalorder %v171, %v144
  %vm250 = vcmp.eq.s32.totalorder %v174, %v144
  %vm251 = vcmp.eq.s32.totalorder %v177, %v144
  %vm252 = vcmp.eq.s32.totalorder %v180, %v144
  %vm253 = vcmp.eq.s32.totalorder %v183, %v144
  %vm254 = vcmp.eq.s32.totalorder %v186, %v144
  %vm255 = vcmp.eq.s32.totalorder %v189, %v144
  %vm256 = vcmp.eq.s32.totalorder %v192, %v144
  %vm257 = vcmp.eq.s32.totalorder %v195, %v144
  %vm258 = vcmp.eq.s32.totalorder %v198, %v144
  %vm259 = vcmp.eq.s32.totalorder %v201, %v144
  %vm260 = vcmp.eq.s32.totalorder %v204, %v144
  %vm261 = vcmp.eq.s32.totalorder %v207, %v144
  %vm262 = vcmp.eq.s32.totalorder %v210, %v144
  %vm263 = vcmp.eq.s32.totalorder %v213, %v144
  %vm264 = vcmp.eq.s32.totalorder %v216, %v144
  %vm265 = vcmp.eq.s32.totalorder %v219, %v144
  %vm266 = vcmp.eq.s32.totalorder %v222, %v144
  %vm267 = vcmp.eq.s32.totalorder %v225, %v144
  %vm268 = vcmp.eq.s32.totalorder %v228, %v144
  %vm269 = vcmp.eq.s32.totalorder %v231, %v144
  %vm270 = vcmp.eq.s32.totalorder %v234, %v144
  %vm271 = vcmp.eq.s32.totalorder %v237, %v144
  %vm272 = vcmp.eq.s32.totalorder %v240, %v144
  %v273 = vsel %vm241, 1, 0
  %v274 = vsel %vm242, 1, 0
  %v275 = vsel %vm243, 1, 0
  %v276 = vsel %vm244, 1, 0
  %v277 = vsel %vm245, 1, 0
  %v278 = vsel %vm246, 1, 0
  %v279 = vsel %vm247, 1, 0
  %v280 = vsel %vm248, 1, 0
  %v281 = vsel %vm249, 1, 0
  %v282 = vsel %vm250, 1, 0
  %v283 = vsel %vm251, 1, 0
  %v284 = vsel %vm252, 1, 0
  %v285 = vsel %vm253, 1, 0
  %v286 = vsel %vm254, 1, 0
  %v287 = vsel %vm255, 1, 0
  %v288 = vsel %vm256, 1, 0
  %v289 = vsel %vm257, 1, 0
  %v290 = vsel %vm258, 1, 0
  %v291 = vsel %vm259, 1, 0
  %v292 = vsel %vm260, 1, 0
  %v293 = vsel %vm261, 1, 0
  %v294 = vsel %vm262, 1, 0
  %v295 = vsel %vm263, 1, 0
  %v296 = vsel %vm264, 1, 0
  %v297 = vsel %vm265, 1, 0
  %v298 = vsel %vm266, 1, 0
  %v299 = vsel %vm267, 1, 0
  %v300 = vsel %vm268, 1, 0
  %v301 = vsel %vm269, 1, 0
  %v302 = vsel %vm270, 1, 0
  %v303 = vsel %vm271, 1, 0
  %v304 = vsel %vm272, 1, 0
  %v305 = vcvt.s32.f32 %v273
  %v306 = vcvt.s32.f32 %v274
  %v307 = vcvt.s32.f32 %v275
  %v308 = vcvt.s32.f32 %v276
  %v309 = vcvt.s32.f32 %v277
  %v310 = vcvt.s32.f32 %v278
  %v311 = vcvt.s32.f32 %v279
  %v312 = vcvt.s32.f32 %v280
  %v313 = vcvt.s32.f32 %v281
  %v314 = vcvt.s32.f32 %v282
  %v315 = vcvt.s32.f32 %v283
  %v316 = vcvt.s32.f32 %v284
  %v317 = vcvt.s32.f32 %v285
  %v318 = vcvt.s32.f32 %v286
  %v319 = vcvt.s32.f32 %v287
  %v320 = vcvt.s32.f32 %v288
  %v321 = vcvt.s32.f32 %v289
  %v322 = vcvt.s32.f32 %v290
  %v323 = vcvt.s32.f32 %v291
  %v324 = vcvt.s32.f32 %v292
  %v325 = vcvt.s32.f32 %v293
  %v326 = vcvt.s32.f32 %v294
  %v327 = vcvt.s32.f32 %v295
  %v328 = vcvt.s32.f32 %v296
  %v329 = vcvt.s32.f32 %v297
  %v330 = vcvt.s32.f32 %v298
  %v331 = vcvt.s32.f32 %v299
  %v332 = vcvt.s32.f32 %v300
  %v333 = vcvt.s32.f32 %v301
  %v334 = vcvt.s32.f32 %v302
  %v335 = vcvt.s32.f32 %v303
  %v336 = vcvt.s32.f32 %v304
  %v337 = vld [vmem:[%s2] sm:$0xff]
  %v338 = vld [vmem:[%s2 + $0x8] sm:$0xff]
  %vm339 = vcmask 130048
  %v341 = vsel %vm339, %v305, 0
  %v344 = vsel %vm339, %v306, 0
  %v347 = vsel %vm339, %v307, 0
  %v350 = vsel %vm339, %v308, 0
  %v353 = vsel %vm339, %v309, 0
  %v356 = vsel %vm339, %v310, 0
  %v359 = vsel %vm339, %v311, 0
  %v362 = vsel %vm339, %v312, 0
  %v365 = vsel %vm339, %v313, 0
  %v368 = vsel %vm339, %v314, 0
  %v371 = vsel %vm339, %v315, 0
  %v374 = vsel %vm339, %v316, 0
  %v377 = vsel %vm339, %v317, 0
  %v380 = vsel %vm339, %v318, 0
  %v383 = vsel %vm339, %v319, 0
  %v386 = vsel %vm339, %v320, 0
  %v389 = vsel %vm339, %v321, 0
  %v392 = vsel %vm339, %v322, 0
  %v395 = vsel %vm339, %v323, 0
  %v398 = vsel %vm339, %v324, 0
  %v401 = vsel %vm339, %v325, 0
  %v404 = vsel %vm339, %v326, 0
  %v407 = vsel %vm339, %v327, 0
  %v410 = vsel %vm339, %v328, 0
  %v413 = vsel %vm339, %v329, 0
  %v416 = vsel %vm339, %v330, 0
  %v419 = vsel %vm339, %v331, 0
  %v422 = vsel %vm339, %v332, 0
  %v425 = vsel %vm339, %v333, 0
  %v428 = vsel %vm339, %v334, 0
  %v431 = vsel %vm339, %v335, 0
  %v434 = vsel %vm339, %v336, 0
  %436 = vmatpush.msra.mxu0 0.0
  %437 = vmatpush.msra.mxu0 0.0
  %438 = vmatpush.msra.mxu0 0.0
  %439 = vmatpush.msra.mxu0 0.0
  %440 = vmatpush.msra.mxu0 0.0
  %441 = vmatpush.msra.mxu0 0.0
  %442 = vmatpush.msra.mxu0 0.0
  %443 = vmatpush.msra.mxu0 0.0
  %444 = vmatpush.msra.mxu0 0.0
  %445 = vmatpush.msra.mxu0 0.0
  %446 = vmatpush.msra.mxu0 0.0
  %447 = vmatpush.msra.mxu0 0.0
  %448 = vmatpush.msra.mxu0 0.0
  %449 = vmatpush.msra.mxu0 0.0
  %450 = vmatpush.msra.mxu0 %v338
  %451 = vmatpush.msra.mxu0 %v337
  %452 = vmatmul.f32.gmra.mxu0 %v341
  %v453 = vpop.f32.mrf.mxu0
  %v454 = vadd.f32 0.0, %v453
  %455 = vmatmul.f32.gmra.mxu0 %v344
  %v456 = vpop.f32.mrf.mxu0
  %v457 = vadd.f32 0.0, %v456
  %458 = vmatmul.f32.gmra.mxu0 %v347
  %v459 = vpop.f32.mrf.mxu0
  %v460 = vadd.f32 0.0, %v459
  %461 = vmatmul.f32.gmra.mxu0 %v350
  %v462 = vpop.f32.mrf.mxu0
  %v463 = vadd.f32 0.0, %v462
  %464 = vmatmul.f32.gmra.mxu0 %v353
  %v465 = vpop.f32.mrf.mxu0
  %v466 = vadd.f32 0.0, %v465
  %467 = vmatmul.f32.gmra.mxu0 %v356
  %v468 = vpop.f32.mrf.mxu0
  %v469 = vadd.f32 0.0, %v468
  %470 = vmatmul.f32.gmra.mxu0 %v359
  %v471 = vpop.f32.mrf.mxu0
  %v472 = vadd.f32 0.0, %v471
  %473 = vmatmul.f32.gmra.mxu0 %v362
  %v474 = vpop.f32.mrf.mxu0
  %v475 = vadd.f32 0.0, %v474
  %476 = vmatmul.f32.gmra.mxu0 %v365
  %v477 = vpop.f32.mrf.mxu0
  %v478 = vadd.f32 0.0, %v477
  %479 = vmatmul.f32.gmra.mxu0 %v368
  %v480 = vpop.f32.mrf.mxu0
  %v481 = vadd.f32 0.0, %v480
  %482 = vmatmul.f32.gmra.mxu0 %v371
  %v483 = vpop.f32.mrf.mxu0
  %v484 = vadd.f32 0.0, %v483
  %485 = vmatmul.f32.gmra.mxu0 %v374
  %v486 = vpop.f32.mrf.mxu0
  %v487 = vadd.f32 0.0, %v486
  %488 = vmatmul.f32.gmra.mxu0 %v377
  %v489 = vpop.f32.mrf.mxu0
  %v490 = vadd.f32 0.0, %v489
  %491 = vmatmul.f32.gmra.mxu0 %v380
  %v492 = vpop.f32.mrf.mxu0
  %v493 = vadd.f32 0.0, %v492
  %494 = vmatmul.f32.gmra.mxu0 %v383
  %v495 = vpop.f32.mrf.mxu0
  %v496 = vadd.f32 0.0, %v495
  %497 = vmatmul.f32.gmra.mxu0 %v386
  %v498 = vpop.f32.mrf.mxu0
  %v499 = vadd.f32 0.0, %v498
  %500 = vmatmul.f32.gmra.mxu0 %v389
  %v501 = vpop.f32.mrf.mxu0
  %v502 = vadd.f32 0.0, %v501
  %503 = vmatmul.f32.gmra.mxu0 %v392
  %v504 = vpop.f32.mrf.mxu0
  %v505 = vadd.f32 0.0, %v504
  %506 = vmatmul.f32.gmra.mxu0 %v395
  %v507 = vpop.f32.mrf.mxu0
  %v508 = vadd.f32 0.0, %v507
  %509 = vmatmul.f32.gmra.mxu0 %v398
  %v510 = vpop.f32.mrf.mxu0
  %v511 = vadd.f32 0.0, %v510
  %512 = vmatmul.f32.gmra.mxu0 %v401
  %v513 = vpop.f32.mrf.mxu0
  %v514 = vadd.f32 0.0, %v513
  %515 = vmatmul.f32.gmra.mxu0 %v404
  %v516 = vpop.f32.mrf.mxu0
  %v517 = vadd.f32 0.0, %v516
  %518 = vmatmul.f32.gmra.mxu0 %v407
  %v519 = vpop.f32.mrf.mxu0
  %v520 = vadd.f32 0.0, %v519
  %521 = vmatmul.f32.gmra.mxu0 %v410
  %v522 = vpop.f32.mrf.mxu0
  %v523 = vadd.f32 0.0, %v522
  %524 = vmatmul.f32.gmra.mxu0 %v413
  %v525 = vpop.f32.mrf.mxu0
  %v526 = vadd.f32 0.0, %v525
  %527 = vmatmul.f32.gmra.mxu0 %v416
  %v528 = vpop.f32.mrf.mxu0
  %v529 = vadd.f32 0.0, %v528
  %530 = vmatmul.f32.gmra.mxu0 %v419
  %v531 = vpop.f32.mrf.mxu0
  %v532 = vadd.f32 0.0, %v531
  %533 = vmatmul.f32.gmra.mxu0 %v422
  %v534 = vpop.f32.mrf.mxu0
  %v535 = vadd.f32 0.0, %v534
  %536 = vmatmul.f32.gmra.mxu0 %v425
  %v537 = vpop.f32.mrf.mxu0
  %v538 = vadd.f32 0.0, %v537
  %539 = vmatmul.f32.gmra.mxu0 %v428
  %v540 = vpop.f32.mrf.mxu0
  %v541 = vadd.f32 0.0, %v540
  %542 = vmatmul.f32.gmra.mxu0 %v431
  %v543 = vpop.f32.mrf.mxu0
  %v544 = vadd.f32 0.0, %v543
  %545 = vmatmul.f32.gmra.mxu0 %v434
  %v546 = vpop.f32.mrf.mxu0
  %v547 = vadd.f32 0.0, %v546
  %548 = vdwg.mxu0
  %v549 = vld [vmem:[%s55] sm:$0xff]
  %v550 = vld [vmem:[%s55 + $0x8] sm:$0xff]
  %v551 = vld [vmem:[%s55 + $0x10] sm:$0xff]
  %v552 = vld [vmem:[%s55 + $0x18] sm:$0xff]
  %v553 = vld [vmem:[%s55 + $0x20] sm:$0xff]
  %v554 = vld [vmem:[%s55 + $0x28] sm:$0xff]
  %v555 = vld [vmem:[%s55 + $0x30] sm:$0xff]
  %v556 = vld [vmem:[%s55 + $0x38] sm:$0xff]
  %v557 = vld [vmem:[%s55 + $0x40] sm:$0xff]
  %v558 = vld [vmem:[%s55 + $0x48] sm:$0xff]
  %v559 = vld [vmem:[%s55 + $0x50] sm:$0xff]
  %v560 = vld [vmem:[%s55 + $0x58] sm:$0xff]
  %v561 = vld [vmem:[%s55 + $0x60] sm:$0xff]
  %v562 = vld [vmem:[%s55 + $0x68] sm:$0xff]
  %v563 = vld [vmem:[%s55 + $0x70] sm:$0xff]
  %v564 = vld [vmem:[%s55 + $0x78] sm:$0xff]
  %v565 = vld [vmem:[%s55 + $0x80] sm:$0xff]
  %v566 = vld [vmem:[%s55 + $0x88] sm:$0xff]
  %v567 = vld [vmem:[%s55 + $0x90] sm:$0xff]
  %v568 = vld [vmem:[%s55 + $0x98] sm:$0xff]
  %v569 = vld [vmem:[%s55 + $0xa0] sm:$0xff]
  %v570 = vld [vmem:[%s55 + $0xa8] sm:$0xff]
  %v571 = vld [vmem:[%s55 + $0xb0] sm:$0xff]
  %v572 = vld [vmem:[%s55 + $0xb8] sm:$0xff]
  %v573 = vld [vmem:[%s55 + $0xc0] sm:$0xff]
  %v574 = vld [vmem:[%s55 + $0xc8] sm:$0xff]
  %v575 = vld [vmem:[%s55 + $0xd0] sm:$0xff]
  %v576 = vld [vmem:[%s55 + $0xd8] sm:$0xff]
  %v577 = vld [vmem:[%s55 + $0xe0] sm:$0xff]
  %v578 = vld [vmem:[%s55 + $0xe8] sm:$0xff]
  %v579 = vld [vmem:[%s55 + $0xf0] sm:$0xff]
  %v580 = vld [vmem:[%s55 + $0xf8] sm:$0xff]
  %582 = vset.pattern.permute.xlu0 0
  %583 = vperm.xlu0 %582, %v79
  %v584 = vpop.permute.xlu0 %583
  %587 = vset.pattern.permute.xlu0 0
  %588 = vperm.xlu0 %587, %v80
  %v589 = vpop.permute.xlu0 %588
  %592 = vset.pattern.permute.xlu0 0
  %593 = vperm.xlu0 %592, %v81
  %v594 = vpop.permute.xlu0 %593
  %597 = vset.pattern.permute.xlu0 0
  %598 = vperm.xlu0 %597, %v82
  %v599 = vpop.permute.xlu0 %598
  %602 = vset.pattern.permute.xlu0 0
  %603 = vperm.xlu0 %602, %v83
  %v604 = vpop.permute.xlu0 %603
  %607 = vset.pattern.permute.xlu0 0
  %608 = vperm.xlu0 %607, %v84
  %v609 = vpop.permute.xlu0 %608
  %612 = vset.pattern.permute.xlu0 0
  %613 = vperm.xlu0 %612, %v85
  %v614 = vpop.permute.xlu0 %613
  %617 = vset.pattern.permute.xlu0 0
  %618 = vperm.xlu0 %617, %v86
  %v619 = vpop.permute.xlu0 %618
  %622 = vset.pattern.permute.xlu0 0
  %623 = vperm.xlu0 %622, %v87
  %v624 = vpop.permute.xlu0 %623
  %627 = vset.pattern.permute.xlu0 0
  %628 = vperm.xlu0 %627, %v88
  %v629 = vpop.permute.xlu0 %628
  %632 = vset.pattern.permute.xlu0 0
  %633 = vperm.xlu0 %632, %v89
  %v634 = vpop.permute.xlu0 %633
  %637 = vset.pattern.permute.xlu0 0
  %638 = vperm.xlu0 %637, %v90
  %v639 = vpop.permute.xlu0 %638
  %642 = vset.pattern.permute.xlu0 0
  %643 = vperm.xlu0 %642, %v91
  %v644 = vpop.permute.xlu0 %643
  %647 = vset.pattern.permute.xlu0 0
  %648 = vperm.xlu0 %647, %v92
  %v649 = vpop.permute.xlu0 %648
  %652 = vset.pattern.permute.xlu0 0
  %653 = vperm.xlu0 %652, %v93
  %v654 = vpop.permute.xlu0 %653
  %657 = vset.pattern.permute.xlu0 0
  %658 = vperm.xlu0 %657, %v94
  %v659 = vpop.permute.xlu0 %658
  %662 = vset.pattern.permute.xlu0 0
  %663 = vperm.xlu0 %662, %v95
  %v664 = vpop.permute.xlu0 %663
  %667 = vset.pattern.permute.xlu0 0
  %668 = vperm.xlu0 %667, %v96
  %v669 = vpop.permute.xlu0 %668
  %672 = vset.pattern.permute.xlu0 0
  %673 = vperm.xlu0 %672, %v97
  %v674 = vpop.permute.xlu0 %673
  %677 = vset.pattern.permute.xlu0 0
  %678 = vperm.xlu0 %677, %v98
  %v679 = vpop.permute.xlu0 %678
  %682 = vset.pattern.permute.xlu0 0
  %683 = vperm.xlu0 %682, %v99
  %v684 = vpop.permute.xlu0 %683
  %687 = vset.pattern.permute.xlu0 0
  %688 = vperm.xlu0 %687, %v100
  %v689 = vpop.permute.xlu0 %688
  %692 = vset.pattern.permute.xlu0 0
  %693 = vperm.xlu0 %692, %v101
  %v694 = vpop.permute.xlu0 %693
  %697 = vset.pattern.permute.xlu0 0
  %698 = vperm.xlu0 %697, %v102
  %v699 = vpop.permute.xlu0 %698
  %702 = vset.pattern.permute.xlu0 0
  %703 = vperm.xlu0 %702, %v103
  %v704 = vpop.permute.xlu0 %703
  %707 = vset.pattern.permute.xlu0 0
  %708 = vperm.xlu0 %707, %v104
  %v709 = vpop.permute.xlu0 %708
  %712 = vset.pattern.permute.xlu0 0
  %713 = vperm.xlu0 %712, %v105
  %v714 = vpop.permute.xlu0 %713
  %717 = vset.pattern.permute.xlu0 0
  %718 = vperm.xlu0 %717, %v106
  %v719 = vpop.permute.xlu0 %718
  %722 = vset.pattern.permute.xlu0 0
  %723 = vperm.xlu0 %722, %v107
  %v724 = vpop.permute.xlu0 %723
  %727 = vset.pattern.permute.xlu0 0
  %728 = vperm.xlu0 %727, %v108
  %v729 = vpop.permute.xlu0 %728
  %732 = vset.pattern.permute.xlu0 0
  %733 = vperm.xlu0 %732, %v109
  %v734 = vpop.permute.xlu0 %733
  %737 = vset.pattern.permute.xlu0 0
  %738 = vperm.xlu0 %737, %v110
  %v739 = vpop.permute.xlu0 %738
  %v741 = vmul.f32 %v584, %v549
  %v742 = vmul.f32 %v589, %v550
  %v743 = vmul.f32 %v594, %v551
  %v744 = vmul.f32 %v599, %v552
  %v745 = vmul.f32 %v604, %v553
  %v746 = vmul.f32 %v609, %v554
  %v747 = vmul.f32 %v614, %v555
  %v748 = vmul.f32 %v619, %v556
  %v749 = vmul.f32 %v624, %v557
  %v750 = vmul.f32 %v629, %v558
  %v751 = vmul.f32 %v634, %v559
  %v752 = vmul.f32 %v639, %v560
  %v753 = vmul.f32 %v644, %v561
  %v754 = vmul.f32 %v649, %v562
  %v755 = vmul.f32 %v654, %v563
  %v756 = vmul.f32 %v659, %v564
  %v757 = vmul.f32 %v664, %v565
  %v758 = vmul.f32 %v669, %v566
  %v759 = vmul.f32 %v674, %v567
  %v760 = vmul.f32 %v679, %v568
  %v761 = vmul.f32 %v684, %v569
  %v762 = vmul.f32 %v689, %v570
  %v763 = vmul.f32 %v694, %v571
  %v764 = vmul.f32 %v699, %v572
  %v765 = vmul.f32 %v704, %v573
  %v766 = vmul.f32 %v709, %v574
  %v767 = vmul.f32 %v714, %v575
  %v768 = vmul.f32 %v719, %v576
  %v769 = vmul.f32 %v724, %v577
  %v770 = vmul.f32 %v729, %v578
  %v771 = vmul.f32 %v734, %v579
  %v772 = vmul.f32 %v739, %v580
  %v773 = vsub.f32 1.0, %v79
  %v774 = vsub.f32 1.0, %v80
  %v775 = vsub.f32 1.0, %v81
  %v776 = vsub.f32 1.0, %v82
  %v777 = vsub.f32 1.0, %v83
  %v778 = vsub.f32 1.0, %v84
  %v779 = vsub.f32 1.0, %v85
  %v780 = vsub.f32 1.0, %v86
  %v781 = vsub.f32 1.0, %v87
  %v782 = vsub.f32 1.0, %v88
  %v783 = vsub.f32 1.0, %v89
  %v784 = vsub.f32 1.0, %v90
  %v785 = vsub.f32 1.0, %v91
  %v786 = vsub.f32 1.0, %v92
  %v787 = vsub.f32 1.0, %v93
  %v788 = vsub.f32 1.0, %v94
  %v789 = vsub.f32 1.0, %v95
  %v790 = vsub.f32 1.0, %v96
  %v791 = vsub.f32 1.0, %v97
  %v792 = vsub.f32 1.0, %v98
  %v793 = vsub.f32 1.0, %v99
  %v794 = vsub.f32 1.0, %v100
  %v795 = vsub.f32 1.0, %v101
  %v796 = vsub.f32 1.0, %v102
  %v797 = vsub.f32 1.0, %v103
  %v798 = vsub.f32 1.0, %v104
  %v799 = vsub.f32 1.0, %v105
  %v800 = vsub.f32 1.0, %v106
  %v801 = vsub.f32 1.0, %v107
  %v802 = vsub.f32 1.0, %v108
  %v803 = vsub.f32 1.0, %v109
  %v804 = vsub.f32 1.0, %v110
  %806 = vset.pattern.permute.xlu0 0
  %807 = vperm.xlu0 %806, %v773
  %v808 = vpop.permute.xlu0 %807
  %811 = vset.pattern.permute.xlu0 0
  %812 = vperm.xlu0 %811, %v774
  %v813 = vpop.permute.xlu0 %812
  %816 = vset.pattern.permute.xlu0 0
  %817 = vperm.xlu0 %816, %v775
  %v818 = vpop.permute.xlu0 %817
  %821 = vset.pattern.permute.xlu0 0
  %822 = vperm.xlu0 %821, %v776
  %v823 = vpop.permute.xlu0 %822
  %826 = vset.pattern.permute.xlu0 0
  %827 = vperm.xlu0 %826, %v777
  %v828 = vpop.permute.xlu0 %827
  %831 = vset.pattern.permute.xlu0 0
  %832 = vperm.xlu0 %831, %v778
  %v833 = vpop.permute.xlu0 %832
  %836 = vset.pattern.permute.xlu0 0
  %837 = vperm.xlu0 %836, %v779
  %v838 = vpop.permute.xlu0 %837
  %841 = vset.pattern.permute.xlu0 0
  %842 = vperm.xlu0 %841, %v780
  %v843 = vpop.permute.xlu0 %842
  %846 = vset.pattern.permute.xlu0 0
  %847 = vperm.xlu0 %846, %v781
  %v848 = vpop.permute.xlu0 %847
  %851 = vset.pattern.permute.xlu0 0
  %852 = vperm.xlu0 %851, %v782
  %v853 = vpop.permute.xlu0 %852
  %856 = vset.pattern.permute.xlu0 0
  %857 = vperm.xlu0 %856, %v783
  %v858 = vpop.permute.xlu0 %857
  %861 = vset.pattern.permute.xlu0 0
  %862 = vperm.xlu0 %861, %v784
  %v863 = vpop.permute.xlu0 %862
  %866 = vset.pattern.permute.xlu0 0
  %867 = vperm.xlu0 %866, %v785
  %v868 = vpop.permute.xlu0 %867
  %871 = vset.pattern.permute.xlu0 0
  %872 = vperm.xlu0 %871, %v786
  %v873 = vpop.permute.xlu0 %872
  %876 = vset.pattern.permute.xlu0 0
  %877 = vperm.xlu0 %876, %v787
  %v878 = vpop.permute.xlu0 %877
  %881 = vset.pattern.permute.xlu0 0
  %882 = vperm.xlu0 %881, %v788
  %v883 = vpop.permute.xlu0 %882
  %886 = vset.pattern.permute.xlu0 0
  %887 = vperm.xlu0 %886, %v789
  %v888 = vpop.permute.xlu0 %887
  %891 = vset.pattern.permute.xlu0 0
  %892 = vperm.xlu0 %891, %v790
  %v893 = vpop.permute.xlu0 %892
  %896 = vset.pattern.permute.xlu0 0
  %897 = vperm.xlu0 %896, %v791
  %v898 = vpop.permute.xlu0 %897
  %901 = vset.pattern.permute.xlu0 0
  %902 = vperm.xlu0 %901, %v792
  %v903 = vpop.permute.xlu0 %902
  %906 = vset.pattern.permute.xlu0 0
  %907 = vperm.xlu0 %906, %v793
  %v908 = vpop.permute.xlu0 %907
  %911 = vset.pattern.permute.xlu0 0
  %912 = vperm.xlu0 %911, %v794
  %v913 = vpop.permute.xlu0 %912
  %916 = vset.pattern.permute.xlu0 0
  %917 = vperm.xlu0 %916, %v795
  %v918 = vpop.permute.xlu0 %917
  %921 = vset.pattern.permute.xlu0 0
  %922 = vperm.xlu0 %921, %v796
  %v923 = vpop.permute.xlu0 %922
  %926 = vset.pattern.permute.xlu0 0
  %927 = vperm.xlu0 %926, %v797
  %v928 = vpop.permute.xlu0 %927
  %931 = vset.pattern.permute.xlu0 0
  %932 = vperm.xlu0 %931, %v798
  %v933 = vpop.permute.xlu0 %932
  %936 = vset.pattern.permute.xlu0 0
  %937 = vperm.xlu0 %936, %v799
  %v938 = vpop.permute.xlu0 %937
  %941 = vset.pattern.permute.xlu0 0
  %942 = vperm.xlu0 %941, %v800
  %v943 = vpop.permute.xlu0 %942
  %946 = vset.pattern.permute.xlu0 0
  %947 = vperm.xlu0 %946, %v801
  %v948 = vpop.permute.xlu0 %947
  %951 = vset.pattern.permute.xlu0 0
  %952 = vperm.xlu0 %951, %v802
  %v953 = vpop.permute.xlu0 %952
  %956 = vset.pattern.permute.xlu0 0
  %957 = vperm.xlu0 %956, %v803
  %v958 = vpop.permute.xlu0 %957
  %961 = vset.pattern.permute.xlu0 0
  %962 = vperm.xlu0 %961, %v804
  %v963 = vpop.permute.xlu0 %962
  %v965 = vmul.f32 %v808, %v454
  %v966 = vmul.f32 %v813, %v457
  %v967 = vmul.f32 %v818, %v460
  %v968 = vmul.f32 %v823, %v463
  %v969 = vmul.f32 %v828, %v466
  %v970 = vmul.f32 %v833, %v469
  %v971 = vmul.f32 %v838, %v472
  %v972 = vmul.f32 %v843, %v475
  %v973 = vmul.f32 %v848, %v478
  %v974 = vmul.f32 %v853, %v481
  %v975 = vmul.f32 %v858, %v484
  %v976 = vmul.f32 %v863, %v487
  %v977 = vmul.f32 %v868, %v490
  %v978 = vmul.f32 %v873, %v493
  %v979 = vmul.f32 %v878, %v496
  %v980 = vmul.f32 %v883, %v499
  %v981 = vmul.f32 %v888, %v502
  %v982 = vmul.f32 %v893, %v505
  %v983 = vmul.f32 %v898, %v508
  %v984 = vmul.f32 %v903, %v511
  %v985 = vmul.f32 %v908, %v514
  %v986 = vmul.f32 %v913, %v517
  %v987 = vmul.f32 %v918, %v520
  %v988 = vmul.f32 %v923, %v523
  %v989 = vmul.f32 %v928, %v526
  %v990 = vmul.f32 %v933, %v529
  %v991 = vmul.f32 %v938, %v532
  %v992 = vmul.f32 %v943, %v535
  %v993 = vmul.f32 %v948, %v538
  %v994 = vmul.f32 %v953, %v541
  %v995 = vmul.f32 %v958, %v544
  %v996 = vmul.f32 %v963, %v547
  %v997 = vadd.f32 %v741, %v965
  %v998 = vadd.f32 %v742, %v966
  %v999 = vadd.f32 %v743, %v967
  %v1000 = vadd.f32 %v744, %v968
  %v1001 = vadd.f32 %v745, %v969
  %v1002 = vadd.f32 %v746, %v970
  %v1003 = vadd.f32 %v747, %v971
  %v1004 = vadd.f32 %v748, %v972
  %v1005 = vadd.f32 %v749, %v973
  %v1006 = vadd.f32 %v750, %v974
  %v1007 = vadd.f32 %v751, %v975
  %v1008 = vadd.f32 %v752, %v976
  %v1009 = vadd.f32 %v753, %v977
  %v1010 = vadd.f32 %v754, %v978
  %v1011 = vadd.f32 %v755, %v979
  %v1012 = vadd.f32 %v756, %v980
  %v1013 = vadd.f32 %v757, %v981
  %v1014 = vadd.f32 %v758, %v982
  %v1015 = vadd.f32 %v759, %v983
  %v1016 = vadd.f32 %v760, %v984
  %v1017 = vadd.f32 %v761, %v985
  %v1018 = vadd.f32 %v762, %v986
  %v1019 = vadd.f32 %v763, %v987
  %v1020 = vadd.f32 %v764, %v988
  %v1021 = vadd.f32 %v765, %v989
  %v1022 = vadd.f32 %v766, %v990
  %v1023 = vadd.f32 %v767, %v991
  %v1024 = vadd.f32 %v768, %v992
  %v1025 = vadd.f32 %v769, %v993
  %v1026 = vadd.f32 %v770, %v994
  %v1027 = vadd.f32 %v771, %v995
  %v1028 = vadd.f32 %v772, %v996
  %1029 = vst [vmem:[%s71] sm:$0xff] %v997
  %1030 = vst [vmem:[%s71 + $0x8] sm:$0xff] %v998
  %1031 = vst [vmem:[%s71 + $0x10] sm:$0xff] %v999
  %1032 = vst [vmem:[%s71 + $0x18] sm:$0xff] %v1000
  %1033 = vst [vmem:[%s71 + $0x20] sm:$0xff] %v1001
  %1034 = vst [vmem:[%s71 + $0x28] sm:$0xff] %v1002
  %1035 = vst [vmem:[%s71 + $0x30] sm:$0xff] %v1003
  %1036 = vst [vmem:[%s71 + $0x38] sm:$0xff] %v1004
  %1037 = vst [vmem:[%s71 + $0x40] sm:$0xff] %v1005
  %1038 = vst [vmem:[%s71 + $0x48] sm:$0xff] %v1006
  %1039 = vst [vmem:[%s71 + $0x50] sm:$0xff] %v1007
  %1040 = vst [vmem:[%s71 + $0x58] sm:$0xff] %v1008
  %1041 = vst [vmem:[%s71 + $0x60] sm:$0xff] %v1009
  %1042 = vst [vmem:[%s71 + $0x68] sm:$0xff] %v1010
  %1043 = vst [vmem:[%s71 + $0x70] sm:$0xff] %v1011
  %1044 = vst [vmem:[%s71 + $0x78] sm:$0xff] %v1012
  %1045 = vst [vmem:[%s71 + $0x80] sm:$0xff] %v1013
  %1046 = vst [vmem:[%s71 + $0x88] sm:$0xff] %v1014
  %1047 = vst [vmem:[%s71 + $0x90] sm:$0xff] %v1015
  %1048 = vst [vmem:[%s71 + $0x98] sm:$0xff] %v1016
  %1049 = vst [vmem:[%s71 + $0xa0] sm:$0xff] %v1017
  %1050 = vst [vmem:[%s71 + $0xa8] sm:$0xff] %v1018
  %1051 = vst [vmem:[%s71 + $0xb0] sm:$0xff] %v1019
  %1052 = vst [vmem:[%s71 + $0xb8] sm:$0xff] %v1020
  %1053 = vst [vmem:[%s71 + $0xc0] sm:$0xff] %v1021
  %1054 = vst [vmem:[%s71 + $0xc8] sm:$0xff] %v1022
  %1055 = vst [vmem:[%s71 + $0xd0] sm:$0xff] %v1023
  %1056 = vst [vmem:[%s71 + $0xd8] sm:$0xff] %v1024
  %1057 = vst [vmem:[%s71 + $0xe0] sm:$0xff] %v1025
  %1058 = vst [vmem:[%s71 + $0xe8] sm:$0xff] %v1026
  %1059 = vst [vmem:[%s71 + $0xf0] sm:$0xff] %v1027
  %1060 = vst [vmem:[%s71 + $0xf8] sm:$0xff] %v1028
  %v1061 = vadd.f32 %v997, %v998
  %v1062 = vadd.f32 %v1061, %v999
  %v1063 = vadd.f32 %v1062, %v1000
  %v1064 = vadd.f32 %v1063, %v1001
  %v1065 = vadd.f32 %v1064, %v1002
  %v1066 = vadd.f32 %v1065, %v1003
  %v1067 = vadd.f32 %v1066, %v1004
  %v1068 = vadd.f32 %v1067, %v1005
  %v1069 = vadd.f32 %v1068, %v1006
  %v1070 = vadd.f32 %v1069, %v1007
  %v1071 = vadd.f32 %v1070, %v1008
  %v1072 = vadd.f32 %v1071, %v1009
  %v1073 = vadd.f32 %v1072, %v1010
  %v1074 = vadd.f32 %v1073, %v1011
  %v1075 = vadd.f32 %v1074, %v1012
  %v1076 = vadd.f32 %v1075, %v1013
  %v1077 = vadd.f32 %v1076, %v1014
  %v1078 = vadd.f32 %v1077, %v1015
  %v1079 = vadd.f32 %v1078, %v1016
  %v1080 = vadd.f32 %v1079, %v1017
  %v1081 = vadd.f32 %v1080, %v1018
  %v1082 = vadd.f32 %v1081, %v1019
  %v1083 = vadd.f32 %v1082, %v1020
  %v1084 = vadd.f32 %v1083, %v1021
  %v1085 = vadd.f32 %v1084, %v1022
  %v1086 = vadd.f32 %v1085, %v1023
  %v1087 = vadd.f32 %v1086, %v1024
  %v1088 = vadd.f32 %v1087, %v1025
  %v1089 = vadd.f32 %v1088, %v1026
  %v1090 = vadd.f32 %v1089, %v1027
  %v1091 = vadd.f32 %v1090, %v1028
  %v1092 = vrot.slane %v1091, 4
  %v1093 = vadd.f32 %v1091, %v1092
  %v1094 = vrot.slane %v1093, 2
  %v1095 = vadd.f32 %v1093, %v1094
  %v1096 = vrot.slane %v1095, 1
  %v1097 = vadd.f32 %v1095, %v1096
  %v1098 = vmul.f32 %v997, %v997
  %v1099 = vmul.f32 %v998, %v998
  %v1100 = vmul.f32 %v999, %v999
  %v1101 = vmul.f32 %v1000, %v1000
  %v1102 = vmul.f32 %v1001, %v1001
  %v1103 = vmul.f32 %v1002, %v1002
  %v1104 = vmul.f32 %v1003, %v1003
  %v1105 = vmul.f32 %v1004, %v1004
  %v1106 = vmul.f32 %v1005, %v1005
  %v1107 = vmul.f32 %v1006, %v1006
  %v1108 = vmul.f32 %v1007, %v1007
  %v1109 = vmul.f32 %v1008, %v1008
  %v1110 = vmul.f32 %v1009, %v1009
  %v1111 = vmul.f32 %v1010, %v1010
  %v1112 = vmul.f32 %v1011, %v1011
  %v1113 = vmul.f32 %v1012, %v1012
  %v1114 = vmul.f32 %v1013, %v1013
  %v1115 = vmul.f32 %v1014, %v1014
  %v1116 = vmul.f32 %v1015, %v1015
  %v1117 = vmul.f32 %v1016, %v1016
  %v1118 = vmul.f32 %v1017, %v1017
  %v1119 = vmul.f32 %v1018, %v1018
  %v1120 = vmul.f32 %v1019, %v1019
  %v1121 = vmul.f32 %v1020, %v1020
  %v1122 = vmul.f32 %v1021, %v1021
  %v1123 = vmul.f32 %v1022, %v1022
  %v1124 = vmul.f32 %v1023, %v1023
  %v1125 = vmul.f32 %v1024, %v1024
  %v1126 = vmul.f32 %v1025, %v1025
  %v1127 = vmul.f32 %v1026, %v1026
  %v1128 = vmul.f32 %v1027, %v1027
  %v1129 = vmul.f32 %v1028, %v1028
  %v1130 = vadd.f32 %v1098, %v1099
  %v1131 = vadd.f32 %v1130, %v1100
  %v1132 = vadd.f32 %v1131, %v1101
  %v1133 = vadd.f32 %v1132, %v1102
  %v1134 = vadd.f32 %v1133, %v1103
  %v1135 = vadd.f32 %v1134, %v1104
  %v1136 = vadd.f32 %v1135, %v1105
  %v1137 = vadd.f32 %v1136, %v1106
  %v1138 = vadd.f32 %v1137, %v1107
  %v1139 = vadd.f32 %v1138, %v1108
  %v1140 = vadd.f32 %v1139, %v1109
  %v1141 = vadd.f32 %v1140, %v1110
  %v1142 = vadd.f32 %v1141, %v1111
  %v1143 = vadd.f32 %v1142, %v1112
  %v1144 = vadd.f32 %v1143, %v1113
  %v1145 = vadd.f32 %v1144, %v1114
  %v1146 = vadd.f32 %v1145, %v1115
  %v1147 = vadd.f32 %v1146, %v1116
  %v1148 = vadd.f32 %v1147, %v1117
  %v1149 = vadd.f32 %v1148, %v1118
  %v1150 = vadd.f32 %v1149, %v1119
  %v1151 = vadd.f32 %v1150, %v1120
  %v1152 = vadd.f32 %v1151, %v1121
  %v1153 = vadd.f32 %v1152, %v1122
  %v1154 = vadd.f32 %v1153, %v1123
  %v1155 = vadd.f32 %v1154, %v1124
  %v1156 = vadd.f32 %v1155, %v1125
  %v1157 = vadd.f32 %v1156, %v1126
  %v1158 = vadd.f32 %v1157, %v1127
  %v1159 = vadd.f32 %v1158, %v1128
  %v1160 = vadd.f32 %v1159, %v1129
  %v1161 = vrot.slane %v1160, 4
  %v1162 = vadd.f32 %v1160, %v1161
  %v1163 = vrot.slane %v1162, 2
  %v1164 = vadd.f32 %v1162, %v1163
  %v1165 = vrot.slane %v1164, 1
  %v1166 = vadd.f32 %v1164, %v1165
  %v1167 = vld [vmem:[%s4] sm:$0x3]
  %vm1168 = vcmask 1040384
  %v1169 = vsel %vm1168, %v1097, %v1166
  %v1170 = vadd.f32 %v1167, %v1169
  %1171 = vst [vmem:[%s4] sm:$0x3] %v1170
  %s1172 = sadd.s32 0, 0
  %s1173 = smul.u32 32, %s1172
  %p1174 = scmp.lt.s32.totalorder %s1173, 31
  %s1175 = scalar_select %p1174, %s1173, 31
  %s1176 = smul.addr %s1175, 8
  %s1177 = scalar_lea.vmem %s3, %s1176
  // Predicated region
  $region18: #{sgconv_jj_forward.6} parent=0 // pred_check
    _
  $region19: #{sgconv_jj_forward.6} parent=0 // pred_check_branch
    %1179 = sbr.rel (0) target = $region21
  $region20: #{sgconv_jj_forward.6} parent=0 // pred_region
    %s1180 = sadd.s32 0, 0
    %s1181 = smul.u32 32, %s1180
  $region21: #{sgconv_jj_forward.6} parent=0 // pred_fallthru
    _
  // Predicated region
  $region22: #{sgconv_jj_forward.6} parent=0 // pred_check
    _
  $region23: #{sgconv_jj_forward.6} parent=0 // pred_check_branch
    %1183 = sbr.rel (0) target = $region25
  $region24: #{sgconv_jj_forward.6} parent=0 // pred_region
    _
  $region25: #{sgconv_jj_forward.6} parent=0 // pred_fallthru
    _
  // Predicated region
  $region26: #{sgconv_jj_forward.6} parent=0 // pred_check
    _
  $region27: #{sgconv_jj_forward.6} parent=0 // pred_check_branch
    %1185 = sbr.rel (0) target = $region29
  $region28: #{sgconv_jj_forward.6} parent=0 // pred_region
    %s1186 = sadd.s32 0, 0
    %s1187 = smul.u32 32, %s1186
    %p1188 = scmp.lt.s32.totalorder %s1187, 31
    %s1189 = scalar_select %p1188, %s1187, 31
    %s1190 = smul.addr %s1189, 8
    %s1191 = scalar_lea.vmem %s3, %s1190
  $region29: #{sgconv_jj_forward.6} parent=0 // pred_fallthru
    _
  // Predicated region
  $region30: #{sgconv_jj_forward.6} parent=0 // pred_check
    _
  $region31: #{sgconv_jj_forward.6} parent=0 // pred_check_branch
    %1193 = sbr.rel (0) target = $region33
  $region32: #{sgconv_jj_forward.6} parent=0 // pred_region
    _
  $region33: #{sgconv_jj_forward.6} parent=0 // pred_fallthru
    _

// kernel: sgconv_jj_forward.7
$region0: #{sgconv_jj_forward.7}
  #allocation0 [shape = 'u32[]', space=smem, size = 0x4, offset = 0x4, fixed_abs, tag = 'smem constant byte address 0x4 - core index']
  #allocation1 [shape = 'u32[72,128]{1,0:T(1,128)}', space=vmem, size = 0x9000, scoped, tag = 'internal scratch']
  %s0 = inlined_call_operand.vmem [shape: f32[256,128], index: 0, kind: input, shape index: {}]
  %s1 = inlined_call_operand.vmem [shape: f32[128,128], index: 1, kind: input, shape index: {}]
  %s2 = inlined_call_operand.vmem [shape: f32[1,128], index: 2, kind: input, shape index: {}]
  %s3 = inlined_call_operand.hbm [shape: f32[256,128], index: 3, kind: output, shape index: {}]
  %s4 = sld [smem:[#allocation0]]
  $region30: #{sgconv_jj_forward.7} parent=0
    _
  %s6 = ssub.s32 1, %s4
  %s7 = scalar_select 0, %s6, %s4
  $region1: #{sgconv_jj_forward.7} parent=0
    #allocation2 [shape = 'u8[131072]{0}', space=vmem, size = 0x20000, scoped, tag = 'output window, operand 0, single buffered']
    #allocation3 [shape = 's32[1]{0}', space=sflag, size = 0x4, scoped, tag = 'scoped memory for sgconv_jj_forward.7']
    %8 = vsyncpa [#allocation3], 0
    // Predicated region
    $region2: #{sgconv_jj_forward.7} parent=1 // pred_check
      _
    $region3: #{sgconv_jj_forward.7} parent=1 // pred_check_branch
      %10 = sbr.rel (0) target = $region5
    $region4: #{sgconv_jj_forward.7} parent=1 // pred_region
      _
    $region5: #{sgconv_jj_forward.7} parent=1 // pred_fallthru
      _
    // Predicated region
    $region6: #{sgconv_jj_forward.7} parent=1 // pred_check
      _
    $region7: #{sgconv_jj_forward.7} parent=1 // pred_check_branch
      %12 = sbr.rel (0) target = $region9
    $region8: #{sgconv_jj_forward.7} parent=1 // pred_region
      _
    $region9: #{sgconv_jj_forward.7} parent=1 // pred_fallthru
      _
    // Predicated region
    $region10: #{sgconv_jj_forward.7} parent=1 // pred_check
      _
    $region11: #{sgconv_jj_forward.7} parent=1 // pred_check_branch
      %14 = sbr.rel (0) target = $region13
    $region12: #{sgconv_jj_forward.7} parent=1 // pred_region
      _
    $region13: #{sgconv_jj_forward.7} parent=1 // pred_fallthru
      _
    %p15 = scmp.eq.s32.totalorder 0, 0
    // Predicated region
    $region14: #{sgconv_jj_forward.7} parent=1 // pred_check
      %p16 = pneg %p15
    $region15: #{sgconv_jj_forward.7} parent=1 // pred_check_branch
      %18 = sbr.rel (%p16) target = $region17
    $region16: #{sgconv_jj_forward.7} parent=1 // pred_region
      %19 = vst [vmem:[#allocation2] sm:$0xff] 0.0
      %20 = vst [vmem:[#allocation2 + $0x8] sm:$0xff] 0.0
      %21 = vst [vmem:[#allocation2 + $0x10] sm:$0xff] 0.0
      %22 = vst [vmem:[#allocation2 + $0x18] sm:$0xff] 0.0
      %23 = vst [vmem:[#allocation2 + $0x20] sm:$0xff] 0.0
      %24 = vst [vmem:[#allocation2 + $0x28] sm:$0xff] 0.0
      %25 = vst [vmem:[#allocation2 + $0x30] sm:$0xff] 0.0
      %26 = vst [vmem:[#allocation2 + $0x38] sm:$0xff] 0.0
      %27 = vst [vmem:[#allocation2 + $0x40] sm:$0xff] 0.0
      %28 = vst [vmem:[#allocation2 + $0x48] sm:$0xff] 0.0
      %29 = vst [vmem:[#allocation2 + $0x50] sm:$0xff] 0.0
      %30 = vst [vmem:[#allocation2 + $0x58] sm:$0xff] 0.0
      %31 = vst [vmem:[#allocation2 + $0x60] sm:$0xff] 0.0
      %32 = vst [vmem:[#allocation2 + $0x68] sm:$0xff] 0.0
      %33 = vst [vmem:[#allocation2 + $0x70] sm:$0xff] 0.0
      %34 = vst [vmem:[#allocation2 + $0x78] sm:$0xff] 0.0
      %35 = vst [vmem:[#allocation2 + $0x80] sm:$0xff] 0.0
      %36 = vst [vmem:[#allocation2 + $0x88] sm:$0xff] 0.0
      %37 = vst [vmem:[#allocation2 + $0x90] sm:$0xff] 0.0
      %38 = vst [vmem:[#allocation2 + $0x98] sm:$0xff] 0.0
      %39 = vst [vmem:[#allocation2 + $0xa0] sm:$0xff] 0.0
      %40 = vst [vmem:[#allocation2 + $0xa8] sm:$0xff] 0.0
      %41 = vst [vmem:[#allocation2 + $0xb0] sm:$0xff] 0.0
      %42 = vst [vmem:[#allocation2 + $0xb8] sm:$0xff] 0.0
      %43 = vst [vmem:[#allocation2 + $0xc0] sm:$0xff] 0.0
      %44 = vst [vmem:[#allocation2 + $0xc8] sm:$0xff] 0.0
      %45 = vst [vmem:[#allocation2 + $0xd0] sm:$0xff] 0.0
      %46 = vst [vmem:[#allocation2 + $0xd8] sm:$0xff] 0.0
      %47 = vst [vmem:[#allocation2 + $0xe0] sm:$0xff] 0.0
      %48 = vst [vmem:[#allocation2 + $0xe8] sm:$0xff] 0.0
      %49 = vst [vmem:[#allocation2 + $0xf0] sm:$0xff] 0.0
      %50 = vst [vmem:[#allocation2 + $0xf8] sm:$0xff] 0.0
    $region17: #{sgconv_jj_forward.7} parent=1 // pred_fallthru
      _
    %v51 = vld [vmem:[%s0] sm:$0xff]
    %v52 = vld [vmem:[%s0 + $0x8] sm:$0xff]
    %v53 = vld [vmem:[%s0 + $0x10] sm:$0xff]
    %v54 = vld [vmem:[%s0 + $0x18] sm:$0xff]
    %v55 = vld [vmem:[%s0 + $0x20] sm:$0xff]
    %v56 = vld [vmem:[%s0 + $0x28] sm:$0xff]
    %v57 = vld [vmem:[%s0 + $0x30] sm:$0xff]
    %v58 = vld [vmem:[%s0 + $0x38] sm:$0xff]
    %v59 = vld [vmem:[%s0 + $0x40] sm:$0xff]
    %v60 = vld [vmem:[%s0 + $0x48] sm:$0xff]
    %v61 = vld [vmem:[%s0 + $0x50] sm:$0xff]
    %v62 = vld [vmem:[%s0 + $0x58] sm:$0xff]
    %v63 = vld [vmem:[%s0 + $0x60] sm:$0xff]
    %v64 = vld [vmem:[%s0 + $0x68] sm:$0xff]
    %v65 = vld [vmem:[%s0 + $0x70] sm:$0xff]
    %v66 = vld [vmem:[%s0 + $0x78] sm:$0xff]
    %v67 = vld [vmem:[%s0 + $0x80] sm:$0xff]
    %v68 = vld [vmem:[%s0 + $0x88] sm:$0xff]
    %v69 = vld [vmem:[%s0 + $0x90] sm:$0xff]
    %v70 = vld [vmem:[%s0 + $0x98] sm:$0xff]
    %v71 = vld [vmem:[%s0 + $0xa0] sm:$0xff]
    %v72 = vld [vmem:[%s0 + $0xa8] sm:$0xff]
    %v73 = vld [vmem:[%s0 + $0xb0] sm:$0xff]
    %v74 = vld [vmem:[%s0 + $0xb8] sm:$0xff]
    %v75 = vld [vmem:[%s0 + $0xc0] sm:$0xff]
    %v76 = vld [vmem:[%s0 + $0xc8] sm:$0xff]
    %v77 = vld [vmem:[%s0 + $0xd0] sm:$0xff]
    %v78 = vld [vmem:[%s0 + $0xd8] sm:$0xff]
    %v79 = vld [vmem:[%s0 + $0xe0] sm:$0xff]
    %v80 = vld [vmem:[%s0 + $0xe8] sm:$0xff]
    %v81 = vld [vmem:[%s0 + $0xf0] sm:$0xff]
    %v82 = vld [vmem:[%s0 + $0xf8] sm:$0xff]
    %v83 = vld [vmem:[%s1] sm:$0xff]
    %v84 = vld [vmem:[%s1 + $0x8] sm:$0xff]
    %v85 = vld [vmem:[%s1 + $0x10] sm:$0xff]
    %v86 = vld [vmem:[%s1 + $0x18] sm:$0xff]
    %v87 = vld [vmem:[%s1 + $0x20] sm:$0xff]
    %v88 = vld [vmem:[%s1 + $0x28] sm:$0xff]
    %v89 = vld [vmem:[%s1 + $0x30] sm:$0xff]
    %v90 = vld [vmem:[%s1 + $0x38] sm:$0xff]
    %v91 = vld [vmem:[%s1 + $0x40] sm:$0xff]
    %v92 = vld [vmem:[%s1 + $0x48] sm:$0xff]
    %v93 = vld [vmem:[%s1 + $0x50] sm:$0xff]
    %v94 = vld [vmem:[%s1 + $0x58] sm:$0xff]
    %v95 = vld [vmem:[%s1 + $0x60] sm:$0xff]
    %v96 = vld [vmem:[%s1 + $0x68] sm:$0xff]
    %v97 = vld [vmem:[%s1 + $0x70] sm:$0xff]
    %v98 = vld [vmem:[%s1 + $0x78] sm:$0xff]
    %v99 = vld [vmem:[#allocation2] sm:$0xff]
    %v100 = vld [vmem:[#allocation2 + $0x8] sm:$0xff]
    %v101 = vld [vmem:[#allocation2 + $0x10] sm:$0xff]
    %v102 = vld [vmem:[#allocation2 + $0x18] sm:$0xff]
    %v103 = vld [vmem:[#allocation2 + $0x20] sm:$0xff]
    %v104 = vld [vmem:[#allocation2 + $0x28] sm:$0xff]
    %v105 = vld [vmem:[#allocation2 + $0x30] sm:$0xff]
    %v106 = vld [vmem:[#allocation2 + $0x38] sm:$0xff]
    %v107 = vld [vmem:[#allocation2 + $0x40] sm:$0xff]
    %v108 = vld [vmem:[#allocation2 + $0x48] sm:$0xff]
    %v109 = vld [vmem:[#allocation2 + $0x50] sm:$0xff]
    %v110 = vld [vmem:[#allocation2 + $0x58] sm:$0xff]
    %v111 = vld [vmem:[#allocation2 + $0x60] sm:$0xff]
    %v112 = vld [vmem:[#allocation2 + $0x68] sm:$0xff]
    %v113 = vld [vmem:[#allocation2 + $0x70] sm:$0xff]
    %v114 = vld [vmem:[#allocation2 + $0x78] sm:$0xff]
    %v115 = vld [vmem:[#allocation2 + $0x80] sm:$0xff]
    %v116 = vld [vmem:[#allocation2 + $0x88] sm:$0xff]
    %v117 = vld [vmem:[#allocation2 + $0x90] sm:$0xff]
    %v118 = vld [vmem:[#allocation2 + $0x98] sm:$0xff]
    %v119 = vld [vmem:[#allocation2 + $0xa0] sm:$0xff]
    %v120 = vld [vmem:[#allocation2 + $0xa8] sm:$0xff]
    %v121 = vld [vmem:[#allocation2 + $0xb0] sm:$0xff]
    %v122 = vld [vmem:[#allocation2 + $0xb8] sm:$0xff]
    %v123 = vld [vmem:[#allocation2 + $0xc0] sm:$0xff]
    %v124 = vld [vmem:[#allocation2 + $0xc8] sm:$0xff]
    %v125 = vld [vmem:[#allocation2 + $0xd0] sm:$0xff]
    %v126 = vld [vmem:[#allocation2 + $0xd8] sm:$0xff]
    %v127 = vld [vmem:[#allocation2 + $0xe0] sm:$0xff]
    %v128 = vld [vmem:[#allocation2 + $0xe8] sm:$0xff]
    %v129 = vld [vmem:[#allocation2 + $0xf0] sm:$0xff]
    %v130 = vld [vmem:[#allocation2 + $0xf8] sm:$0xff]
    %131 = vmatpush.msra.mxu0 %v98
    %132 = vmatpush.msra.mxu0 %v97
    %133 = vmatpush.msra.mxu0 %v96
    %134 = vmatpush.msra.mxu0 %v95
    %135 = vmatpush.msra.mxu0 %v94
    %136 = vmatpush.msra.mxu0 %v93
    %137 = vmatpush.msra.mxu0 %v92
    %138 = vmatpush.msra.mxu0 %v91
    %139 = vmatpush.msra.mxu0 %v90
    %140 = vmatpush.msra.mxu0 %v89
    %141 = vmatpush.msra.mxu0 %v88
    %142 = vmatpush.msra.mxu0 %v87
    %143 = vmatpush.msra.mxu0 %v86
    %144 = vmatpush.msra.mxu0 %v85
    %145 = vmatpush.msra.mxu0 %v84
    %146 = vmatpush.msra.mxu0 %v83
    %147 = vmatmul.f32.gmra.mxu0 %v51
    %v148 = vpop.f32.mrf.mxu0
    %v149 = vadd.f32 0.0, %v148
    %150 = vmatmul.f32.gmra.mxu0 %v52
    %v151 = vpop.f32.mrf.mxu0
    %v152 = vadd.f32 0.0, %v151
    %153 = vmatmul.f32.gmra.mxu0 %v53
    %v154 = vpop.f32.mrf.mxu0
    %v155 = vadd.f32 0.0, %v154
    %156 = vmatmul.f32.gmra.mxu0 %v54
    %v157 = vpop.f32.mrf.mxu0
    %v158 = vadd.f32 0.0, %v157
    %159 = vmatmul.f32.gmra.mxu0 %v55
    %v160 = vpop.f32.mrf.mxu0
    %v161 = vadd.f32 0.0, %v160
    %162 = vmatmul.f32.gmra.mxu0 %v56
    %v163 = vpop.f32.mrf.mxu0
    %v164 = vadd.f32 0.0, %v163
    %165 = vmatmul.f32.gmra.mxu0 %v57
    %v166 = vpop.f32.mrf.mxu0
    %v167 = vadd.f32 0.0, %v166
    %168 = vmatmul.f32.gmra.mxu0 %v58
    %v169 = vpop.f32.mrf.mxu0
    %v170 = vadd.f32 0.0, %v169
    %171 = vmatmul.f32.gmra.mxu0 %v59
    %v172 = vpop.f32.mrf.mxu0
    %v173 = vadd.f32 0.0, %v172
    %174 = vmatmul.f32.gmra.mxu0 %v60
    %v175 = vpop.f32.mrf.mxu0
    %v176 = vadd.f32 0.0, %v175
    %177 = vmatmul.f32.gmra.mxu0 %v61
    %v178 = vpop.f32.mrf.mxu0
    %v179 = vadd.f32 0.0, %v178
    %180 = vmatmul.f32.gmra.mxu0 %v62
    %v181 = vpop.f32.mrf.mxu0
    %v182 = vadd.f32 0.0, %v181
    %183 = vmatmul.f32.gmra.mxu0 %v63
    %v184 = vpop.f32.mrf.mxu0
    %v185 = vadd.f32 0.0, %v184
    %186 = vmatmul.f32.gmra.mxu0 %v64
    %v187 = vpop.f32.mrf.mxu0
    %v188 = vadd.f32 0.0, %v187
    %189 = vmatmul.f32.gmra.mxu0 %v65
    %v190 = vpop.f32.mrf.mxu0
    %v191 = vadd.f32 0.0, %v190
    %192 = vmatmul.f32.gmra.mxu0 %v66
    %v193 = vpop.f32.mrf.mxu0
    %v194 = vadd.f32 0.0, %v193
    %195 = vmatmul.f32.gmra.mxu0 %v67
    %v196 = vpop.f32.mrf.mxu0
    %v197 = vadd.f32 0.0, %v196
    %198 = vmatmul.f32.gmra.mxu0 %v68
    %v199 = vpop.f32.mrf.mxu0
    %v200 = vadd.f32 0.0, %v199
    %201 = vmatmul.f32.gmra.mxu0 %v69
    %v202 = vpop.f32.mrf.mxu0
    %v203 = vadd.f32 0.0, %v202
    %204 = vmatmul.f32.gmra.mxu0 %v70
    %v205 = vpop.f32.mrf.mxu0
    %v206 = vadd.f32 0.0, %v205
    %207 = vmatmul.f32.gmra.mxu0 %v71
    %v208 = vpop.f32.mrf.mxu0
    %v209 = vadd.f32 0.0, %v208
    %210 = vmatmul.f32.gmra.mxu0 %v72
    %v211 = vpop.f32.mrf.mxu0
    %v212 = vadd.f32 0.0, %v211
    %213 = vmatmul.f32.gmra.mxu0 %v73
    %v214 = vpop.f32.mrf.mxu0
    %v215 = vadd.f32 0.0, %v214
    %216 = vmatmul.f32.gmra.mxu0 %v74
    %v217 = vpop.f32.mrf.mxu0
    %v218 = vadd.f32 0.0, %v217
    %219 = vmatmul.f32.gmra.mxu0 %v75
    %v220 = vpop.f32.mrf.mxu0
    %v221 = vadd.f32 0.0, %v220
    %222 = vmatmul.f32.gmra.mxu0 %v76
    %v223 = vpop.f32.mrf.mxu0
    %v224 = vadd.f32 0.0, %v223
    %225 = vmatmul.f32.gmra.mxu0 %v77
    %v226 = vpop.f32.mrf.mxu0
    %v227 = vadd.f32 0.0, %v226
    %228 = vmatmul.f32.gmra.mxu0 %v78
    %v229 = vpop.f32.mrf.mxu0
    %v230 = vadd.f32 0.0, %v229
    %231 = vmatmul.f32.gmra.mxu0 %v79
    %v232 = vpop.f32.mrf.mxu0
    %v233 = vadd.f32 0.0, %v232
    %234 = vmatmul.f32.gmra.mxu0 %v80
    %v235 = vpop.f32.mrf.mxu0
    %v236 = vadd.f32 0.0, %v235
    %237 = vmatmul.f32.gmra.mxu0 %v81
    %v238 = vpop.f32.mrf.mxu0
    %v239 = vadd.f32 0.0, %v238
    %240 = vmatmul.f32.gmra.mxu0 %v82
    %v241 = vpop.f32.mrf.mxu0
    %v242 = vadd.f32 0.0, %v241
    %243 = vdwg.mxu0
    %v244 = vadd.f32 %v99, %v149
    %v245 = vadd.f32 %v100, %v152
    %v246 = vadd.f32 %v101, %v155
    %v247 = vadd.f32 %v102, %v158
    %v248 = vadd.f32 %v103, %v161
    %v249 = vadd.f32 %v104, %v164
    %v250 = vadd.f32 %v105, %v167
    %v251 = vadd.f32 %v106, %v170
    %v252 = vadd.f32 %v107, %v173
    %v253 = vadd.f32 %v108, %v176
    %v254 = vadd.f32 %v109, %v179
    %v255 = vadd.f32 %v110, %v182
    %v256 = vadd.f32 %v111, %v185
    %v257 = vadd.f32 %v112, %v188
    %v258 = vadd.f32 %v113, %v191
    %v259 = vadd.f32 %v114, %v194
    %v260 = vadd.f32 %v115, %v197
    %v261 = vadd.f32 %v116, %v200
    %v262 = vadd.f32 %v117, %v203
    %v263 = vadd.f32 %v118, %v206
    %v264 = vadd.f32 %v119, %v209
    %v265 = vadd.f32 %v120, %v212
    %v266 = vadd.f32 %v121, %v215
    %v267 = vadd.f32 %v122, %v218
    %v268 = vadd.f32 %v123, %v221
    %v269 = vadd.f32 %v124, %v224
    %v270 = vadd.f32 %v125, %v227
    %v271 = vadd.f32 %v126, %v230
    %v272 = vadd.f32 %v127, %v233
    %v273 = vadd.f32 %v128, %v236
    %v274 = vadd.f32 %v129, %v239
    %v275 = vadd.f32 %v130, %v242
    %276 = vst [vmem:[#allocation2] sm:$0xff] %v244
    %277 = vst [vmem:[#allocation2 + $0x8] sm:$0xff] %v245
    %278 = vst [vmem:[#allocation2 + $0x10] sm:$0xff] %v246
    %279 = vst [vmem:[#allocation2 + $0x18] sm:$0xff] %v247
    %280 = vst [vmem:[#allocation2 + $0x20] sm:$0xff] %v248
    %281 = vst [vmem:[#allocation2 + $0x28] sm:$0xff] %v249
    %282 = vst [vmem:[#allocation2 + $0x30] sm:$0xff] %v250
    %283 = vst [vmem:[#allocation2 + $0x38] sm:$0xff] %v251
    %284 = vst [vmem:[#allocation2 + $0x40] sm:$0xff] %v252
    %285 = vst [vmem:[#allocation2 + $0x48] sm:$0xff] %v253
    %286 = vst [vmem:[#allocation2 + $0x50] sm:$0xff] %v254
    %287 = vst [vmem:[#allocation2 + $0x58] sm:$0xff] %v255
    %288 = vst [vmem:[#allocation2 + $0x60] sm:$0xff] %v256
    %289 = vst [vmem:[#allocation2 + $0x68] sm:$0xff] %v257
    %290 = vst [vmem:[#allocation2 + $0x70] sm:$0xff] %v258
    %291 = vst [vmem:[#allocation2 + $0x78] sm:$0xff] %v259
    %292 = vst [vmem:[#allocation2 + $0x80] sm:$0xff] %v260
    %293 = vst [vmem:[#allocation2 + $0x88] sm:$0xff] %v261
    %294 = vst [vmem:[#allocation2 + $0x90] sm:$0xff] %v262
    %295 = vst [vmem:[#allocation2 + $0x98] sm:$0xff] %v263
    %296 = vst [vmem:[#allocation2 + $0xa0] sm:$0xff] %v264
    %297 = vst [vmem:[#allocation2 + $0xa8] sm:$0xff] %v265
    %298 = vst [vmem:[#allocation2 + $0xb0] sm:$0xff] %v266
    %299 = vst [vmem:[#allocation2 + $0xb8] sm:$0xff] %v267
    %300 = vst [vmem:[#allocation2 + $0xc0] sm:$0xff] %v268
    %301 = vst [vmem:[#allocation2 + $0xc8] sm:$0xff] %v269
    %302 = vst [vmem:[#allocation2 + $0xd0] sm:$0xff] %v270
    %303 = vst [vmem:[#allocation2 + $0xd8] sm:$0xff] %v271
    %304 = vst [vmem:[#allocation2 + $0xe0] sm:$0xff] %v272
    %305 = vst [vmem:[#allocation2 + $0xe8] sm:$0xff] %v273
    %306 = vst [vmem:[#allocation2 + $0xf0] sm:$0xff] %v274
    %307 = vst [vmem:[#allocation2 + $0xf8] sm:$0xff] %v275
    // Predicated region
    $region18: #{sgconv_jj_forward.7} parent=1 // pred_check
      %p308 = pneg %p15
    $region19: #{sgconv_jj_forward.7} parent=1 // pred_check_branch
      %310 = sbr.rel (%p308) target = $region21
    $region20: #{sgconv_jj_forward.7} parent=1 // pred_region
      %v311 = vld [vmem:[#allocation2] sm:$0xff]
      %v312 = vld [vmem:[#allocation2 + $0x8] sm:$0xff]
      %v313 = vld [vmem:[#allocation2 + $0x10] sm:$0xff]
      %v314 = vld [vmem:[#allocation2 + $0x18] sm:$0xff]
      %v315 = vld [vmem:[#allocation2 + $0x20] sm:$0xff]
      %v316 = vld [vmem:[#allocation2 + $0x28] sm:$0xff]
      %v317 = vld [vmem:[#allocation2 + $0x30] sm:$0xff]
      %v318 = vld [vmem:[#allocation2 + $0x38] sm:$0xff]
      %v319 = vld [vmem:[#allocation2 + $0x40] sm:$0xff]
      %v320 = vld [vmem:[#allocation2 + $0x48] sm:$0xff]
      %v321 = vld [vmem:[#allocation2 + $0x50] sm:$0xff]
      %v322 = vld [vmem:[#allocation2 + $0x58] sm:$0xff]
      %v323 = vld [vmem:[#allocation2 + $0x60] sm:$0xff]
      %v324 = vld [vmem:[#allocation2 + $0x68] sm:$0xff]
      %v325 = vld [vmem:[#allocation2 + $0x70] sm:$0xff]
      %v326 = vld [vmem:[#allocation2 + $0x78] sm:$0xff]
      %v327 = vld [vmem:[#allocation2 + $0x80] sm:$0xff]
      %v328 = vld [vmem:[#allocation2 + $0x88] sm:$0xff]
      %v329 = vld [vmem:[#allocation2 + $0x90] sm:$0xff]
      %v330 = vld [vmem:[#allocation2 + $0x98] sm:$0xff]
      %v331 = vld [vmem:[#allocation2 + $0xa0] sm:$0xff]
      %v332 = vld [vmem:[#allocation2 + $0xa8] sm:$0xff]
      %v333 = vld [vmem:[#allocation2 + $0xb0] sm:$0xff]
      %v334 = vld [vmem:[#allocation2 + $0xb8] sm:$0xff]
      %v335 = vld [vmem:[#allocation2 + $0xc0] sm:$0xff]
      %v336 = vld [vmem:[#allocation2 + $0xc8] sm:$0xff]
      %v337 = vld [vmem:[#allocation2 + $0xd0] sm:$0xff]
      %v338 = vld [vmem:[#allocation2 + $0xd8] sm:$0xff]
      %v339 = vld [vmem:[#allocation2 + $0xe0] sm:$0xff]
      %v340 = vld [vmem:[#allocation2 + $0xe8] sm:$0xff]
      %v341 = vld [vmem:[#allocation2 + $0xf0] sm:$0xff]
      %v342 = vld [vmem:[#allocation2 + $0xf8] sm:$0xff]
      %v343 = vld [vmem:[%s2] sm:$0x1]
      %v345 = vperm.slane %v343, 0
      %v347 = vadd.f32 %v311, %v345
      %v348 = vadd.f32 %v312, %v345
      %v349 = vadd.f32 %v313, %v345
      %v350 = vadd.f32 %v314, %v345
      %v351 = vadd.f32 %v315, %v345
      %v352 = vadd.f32 %v316, %v345
      %v353 = vadd.f32 %v317, %v345
      %v354 = vadd.f32 %v318, %v345
      %v355 = vadd.f32 %v319, %v345
      %v356 = vadd.f32 %v320, %v345
      %v357 = vadd.f32 %v321, %v345
      %v358 = vadd.f32 %v322, %v345
      %v359 = vadd.f32 %v323, %v345
      %v360 = vadd.f32 %v324, %v345
      %v361 = vadd.f32 %v325, %v345
      %v362 = vadd.f32 %v326, %v345
      %v363 = vadd.f32 %v327, %v345
      %v364 = vadd.f32 %v328, %v345
      %v365 = vadd.f32 %v329, %v345
      %v366 = vadd.f32 %v330, %v345
      %v367 = vadd.f32 %v331, %v345
      %v368 = vadd.f32 %v332, %v345
      %v369 = vadd.f32 %v333, %v345
      %v370 = vadd.f32 %v334, %v345
      %v371 = vadd.f32 %v335, %v345
      %v372 = vadd.f32 %v336, %v345
      %v373 = vadd.f32 %v337, %v345
      %v374 = vadd.f32 %v338, %v345
      %v375 = vadd.f32 %v339, %v345
      %v376 = vadd.f32 %v340, %v345
      %v377 = vadd.f32 %v341, %v345
      %v378 = vadd.f32 %v342, %v345
      %379 = vst [vmem:[#allocation2] sm:$0xff] %v347
      %380 = vst [vmem:[#allocation2 + $0x8] sm:$0xff] %v348
      %381 = vst [vmem:[#allocation2 + $0x10] sm:$0xff] %v349
      %382 = vst [vmem:[#allocation2 + $0x18] sm:$0xff] %v350
      %383 = vst [vmem:[#allocation2 + $0x20] sm:$0xff] %v351
      %384 = vst [vmem:[#allocation2 + $0x28] sm:$0xff] %v352
      %385 = vst [vmem:[#allocation2 + $0x30] sm:$0xff] %v353
      %386 = vst [vmem:[#allocation2 + $0x38] sm:$0xff] %v354
      %387 = vst [vmem:[#allocation2 + $0x40] sm:$0xff] %v355
      %388 = vst [vmem:[#allocation2 + $0x48] sm:$0xff] %v356
      %389 = vst [vmem:[#allocation2 + $0x50] sm:$0xff] %v357
      %390 = vst [vmem:[#allocation2 + $0x58] sm:$0xff] %v358
      %391 = vst [vmem:[#allocation2 + $0x60] sm:$0xff] %v359
      %392 = vst [vmem:[#allocation2 + $0x68] sm:$0xff] %v360
      %393 = vst [vmem:[#allocation2 + $0x70] sm:$0xff] %v361
      %394 = vst [vmem:[#allocation2 + $0x78] sm:$0xff] %v362
      %395 = vst [vmem:[#allocation2 + $0x80] sm:$0xff] %v363
      %396 = vst [vmem:[#allocation2 + $0x88] sm:$0xff] %v364
      %397 = vst [vmem:[#allocation2 + $0x90] sm:$0xff] %v365
      %398 = vst [vmem:[#allocation2 + $0x98] sm:$0xff] %v366
      %399 = vst [vmem:[#allocation2 + $0xa0] sm:$0xff] %v367
      %400 = vst [vmem:[#allocation2 + $0xa8] sm:$0xff] %v368
      %401 = vst [vmem:[#allocation2 + $0xb0] sm:$0xff] %v369
      %402 = vst [vmem:[#allocation2 + $0xb8] sm:$0xff] %v370
      %403 = vst [vmem:[#allocation2 + $0xc0] sm:$0xff] %v371
      %404 = vst [vmem:[#allocation2 + $0xc8] sm:$0xff] %v372
      %405 = vst [vmem:[#allocation2 + $0xd0] sm:$0xff] %v373
      %406 = vst [vmem:[#allocation2 + $0xd8] sm:$0xff] %v374
      %407 = vst [vmem:[#allocation2 + $0xe0] sm:$0xff] %v375
      %408 = vst [vmem:[#allocation2 + $0xe8] sm:$0xff] %v376
      %409 = vst [vmem:[#allocation2 + $0xf0] sm:$0xff] %v377
      %410 = vst [vmem:[#allocation2 + $0xf8] sm:$0xff] %v378
    $region21: #{sgconv_jj_forward.7} parent=1 // pred_fallthru
      _
    // Predicated region
    $region22: #{sgconv_jj_forward.7} parent=1 // pred_check
      _
    $region23: #{sgconv_jj_forward.7} parent=1 // pred_check_branch
      %412 = sbr.rel (0) target = $region25
    $region24: #{sgconv_jj_forward.7} parent=1 // pred_region
      %414 = vsyncadd [#allocation3], 0
      %s415 = sshll.u32 [#allocation2], 4
      %s416 = int_to_ptr.vmem [resolvable:$true] %s415
      %s417 = sshll.u32 %s3, 4
      %s418 = int_to_ptr.hbm [resolvable:$true] %s417
      %423 = dma.vmem_to_hbm [thread:$0]  %s416, 4096, %s418, [#allocation3], 128, 128, 8
    $region25: #{sgconv_jj_forward.7} parent=1 // pred_fallthru
      _
    // Predicated region
    $region26: #{sgconv_jj_forward.7} parent=1 // pred_check
      _
    $region27: #{sgconv_jj_forward.7} parent=1 // pred_check_branch
      %425 = sbr.rel (0) target = $region29
    $region28: #{sgconv_jj_forward.7} parent=1 // pred_region
      %427 = dma.done [#allocation3], 4096
    $region29: #{sgconv_jj_forward.7} parent=1 // pred_fallthru
      _
    %428 = vsyncpa [#allocation3], 1

</llo_original>
